<compile_context>
chip_gen: v7x
topology: tpu7x:2x2x1
jax: 0.10.0
libtpu: 0.0.40
codegen_flags: <defaults>
</compile_context>

<pallas_src>
import jax
import jax.numpy as jnp
from jax.experimental import pallas as pl
from jax.experimental.pallas import tpu as pltpu

OUT_PAD = 128  # lane-dense padded width of the final dense output


# ----------------------------------------------------------------------------
# Fused Pallas kernel (one grid step == one batch element)
# ----------------------------------------------------------------------------

def _aen_kernel(*refs):
    (ctx_ref, tgt_ref, il_ref,
     ak_wk, ak_bk, ak_wqb, ak_bqb, ak_wksb, ak_wp, ak_bp,
     aq_wk, aq_bk, aq_wqb, aq_bqb, aq_wksb, aq_wp, aq_bp,
     as_wk, as_bk, as_wqb, as_bqb, as_wksb, as_wp, as_bp,
     sel_ref, eq_ref, sumb_ref, rep_ref, bdm_ref,
     fc_w1, fc_b1, fc_w2, fc_b2,
     ft_w1, ft_b1, ft_w2, ft_b2,
     wd1_ref, wd2_ref, wd3_ref, bd_ref,
     o_ref) = refs

    f32 = jnp.float32
    ctx = ctx_ref[0]            # (Lc, E)
    tgt = tgt_ref[0]            # (Lt, E)
    sel = sel_ref[...]          # (Lk, H*Lk)   sel[kj', h*Lk+kj] = (kj'==kj)
    eqm = eq_ref[...]           # (H, H*Lk)    eqm[h', h*Lk+kj]  = (h'==h)
    sumb = sumb_ref[...]        # (H*Lk, H)    = eqm.T
    rep = rep_ref[...]          # (H*Lk, Lk)   rep[h*Lk+kj, kj'] = (kj==kj')
    bdm = bdm_ref[...]          # (H*Lk, HD)   bdm[h*Lk+kj, h'*D+d] = (h==h')

    def attend(k, q, wk, bk, wqb, bqb, wksb, wp, bp):
        """Multi-head attention with 'mlp' score; all heads in lane-dense matmuls."""
        kx = jnp.dot(k, wk, preferred_element_type=f32) + bk                 # (Lk, HD)
        # ks_row[0, h*Lk+kj] = sum_d kx[kj, h*D+d] * w_mlp[d]
        ks_row = jnp.sum(jnp.dot(kx, wksb, preferred_element_type=f32) * sel,
                         axis=0, keepdims=True)                              # (1, H*Lk)
        # qs_big[qi, h*Lk+kj] = sum_d qx[qi, h*D+d] * w_mlp[D+d]  (w_q folded into wqb)
        qs_big = jnp.dot(q, wqb, preferred_element_type=f32) + bqb           # (Lq, H*Lk)
        # tanh-bounded scores -> per-head softmax over kj; no max-subtraction needed.
        e = jnp.exp(jnp.tanh(qs_big + ks_row))                               # (Lq, H*Lk)
        denom = jnp.dot(e, sumb, preferred_element_type=f32)                 # (Lq, H)
        attn = e * jnp.dot(1.0 / denom, eqm, preferred_element_type=f32)     # (Lq, H*Lk)
        # Block-diagonal value matrix: one matmul replaces the per-head unroll+concat.
        kx_bd = jnp.dot(rep, kx, preferred_element_type=f32) * bdm           # (H*Lk, HD)
        out_h = jnp.dot(attn, kx_bd, preferred_element_type=f32)             # (Lq, HD)
        return jnp.dot(out_h, wp, preferred_element_type=f32) + bp           # (Lq, O)

    def ffn(x, w1, b1, w2, b2):
        h1 = jnp.maximum(jnp.dot(x, w1, preferred_element_type=f32) + b1, 0.0)
        return jnp.dot(h1, w2, preferred_element_type=f32) + b2

    hc = attend(ctx, ctx, ak_wk[...], ak_bk[...], ak_wqb[...], ak_bqb[...],
                ak_wksb[...], ak_wp[...], ak_bp[...])                        # (Lc, HD)
    hc = ffn(hc, fc_w1[...], fc_b1[...], fc_w2[...], fc_b2[...])
    ht = attend(ctx, tgt, aq_wk[...], aq_bk[...], aq_wqb[...], aq_bqb[...],
                aq_wksb[...], aq_wp[...], aq_bp[...])                        # (Lt, HD)
    ht = ffn(ht, ft_w1[...], ft_b1[...], ft_w2[...], ft_b2[...])
    s1 = attend(hc, ht, as_wk[...], as_bk[...], as_wqb[...], as_bqb[...],
                as_wksb[...], as_wp[...], as_bp[...])                        # (Lt, HD)

    il = il_ref[0]                              # (1, 2) = [1/context_len, 1/target_len]
    inv_cl = il[:, 0:1]
    inv_tl = il[:, 1:2]
    hc_mean = jnp.sum(hc, axis=0, keepdims=True) * inv_cl                    # (1, HD)
    ht_mean = jnp.sum(ht, axis=0, keepdims=True) * inv_tl
    # NOTE: original code divides the s1 sum by *context* length (reproduced).
    s1_mean = jnp.sum(s1, axis=0, keepdims=True) * inv_cl

    logits = (jnp.dot(hc_mean, wd1_ref[...], preferred_element_type=f32)
              + jnp.dot(s1_mean, wd2_ref[...], preferred_element_type=f32)
              + jnp.dot(ht_mean, wd3_ref[...], preferred_element_type=f32)
              + bd_ref[...])                                                 # (1, OUT_PAD)
    o_ref[0] = logits


# ----------------------------------------------------------------------------
# One-time parameter preparation (hoisted out of the forward pass)
# ----------------------------------------------------------------------------

def prepare_aen_glove(params, n_head, k_len):
    """Fold / precompute everything that is input-independent."""
    H = n_head
    Lk = k_len
    HD = params["attn_k"]["wk"].shape[1]
    D = HD // H
    assert params["attn_s1"]["wk"].shape[1] == HD, "shared constants assume equal HD"

    eye_h = jnp.eye(H, dtype=jnp.float32)
    eqm = jnp.kron(eye_h, jnp.ones((1, Lk), jnp.float32))        # (H, H*Lk)
    sel = jnp.tile(jnp.eye(Lk, dtype=jnp.float32), (1, H))        # (Lk, H*Lk)
    rep = sel.T                                                   # (H*Lk, Lk)
    sumb = eqm.T                                                  # (H*Lk, H)
    bdm = jnp.kron(eye_h, jnp.ones((Lk, D), jnp.float32))         # (H*Lk, HD)

    def prep_attn(p):
        hd = p["wk"].shape[1]
        d = hd // H
        wks = jnp.kron(eye_h, p["wmlp"][:d].reshape(d, 1))        # (hd, H)
        wqs = jnp.kron(eye_h, p["wmlp"][d:].reshape(d, 1))        # (hd, H)
        return dict(
            wk=p["wk"],
            bk=p["bk"].reshape(1, -1),
            wqb=p["wq"] @ wqs @ eqm,                              # (E_in, H*Lk)
            bqb=p["bq"].reshape(1, -1) @ wqs @ eqm,               # (1, H*Lk)
            wksb=wks @ eqm,                                       # (hd, H*Lk)
            wp=p["wp"],
            bp=p["bp"].reshape(1, -1),
        )

    P = params["dense"]["w"].shape[1]
    wd = params["dense"]["w"]
    pad = lambda x: jnp.pad(x, ((0, 0), (0, OUT_PAD - P)))
    reshape_ffn = lambda d: {k: (v.reshape(1, -1) if v.ndim == 1 else v)
                             for k, v in d.items()}

    return dict(
        embedding=params["embedding"],
        attn_k=prep_attn(params["attn_k"]),
        attn_q=prep_attn(params["attn_q"]),
        attn_s1=prep_attn(params["attn_s1"]),
        const=dict(sel=sel, eq=eqm, sumb=sumb, rep=rep, bdm=bdm),
        ffn_c=reshape_ffn(params["ffn_c"]),
        ffn_t=reshape_ffn(params["ffn_t"]),
        dense=dict(wd1=pad(wd[:HD]), wd2=pad(wd[HD:2 * HD]), wd3=pad(wd[2 * HD:]),
                   bd=pad(params["dense"]["b"].reshape(1, -1))),
    )


# ----------------------------------------------------------------------------
# Forward pass (single fused pallas_call)
# ----------------------------------------------------------------------------

def aen_glove_forward(prepared, text_raw_indices, target_indices, polarities_dim):
    emb = prepared["embedding"]
    context_len = jnp.sum(text_raw_indices != 0, axis=-1).astype(jnp.float32)
    target_len = jnp.sum(target_indices != 0, axis=-1).astype(jnp.float32)
    context = jnp.take(emb, text_raw_indices, axis=0)    # (B, Lc, E)
    target = jnp.take(emb, target_indices, axis=0)       # (B, Lt, E)
    # SqueezeEmbedding truncates to the max actual length; identity here by construction.
    # TODO(synk): dynamic-length truncation (SqueezeEmbedding) needs dynamic shapes.
    inv_len = jnp.stack([1.0 / context_len, 1.0 / target_len], axis=-1)
    inv_len = inv_len.reshape(-1, 1, 2)                   # (B, 1, 2)

    B, Lc, E = context.shape
    _, Lt, _ = target.shape
    ak, aq, as1 = prepared["attn_k"], prepared["attn_q"], prepared["attn_s1"]
    c = prepared["const"]
    fc, ft = prepared["ffn_c"], prepared["ffn_t"]
    dn = prepared["dense"]

    weights = [
        ak["wk"], ak["bk"], ak["wqb"], ak["bqb"], ak["wksb"], ak["wp"], ak["bp"],
        aq["wk"], aq["bk"], aq["wqb"], aq["bqb"], aq["wksb"], aq["wp"], aq["bp"],
        as1["wk"], as1["bk"], as1["wqb"], as1["bqb"], as1["wksb"], as1["wp"], as1["bp"],
        c["sel"], c["eq"], c["sumb"], c["rep"], c["bdm"],
        fc["w1"], fc["b1"], fc["w2"], fc["b2"],
        ft["w1"], ft["b1"], ft["w2"], ft["b2"],
        dn["wd1"], dn["wd2"], dn["wd3"], dn["bd"],
    ]

    def _wspec(a):
        return pl.BlockSpec(a.shape, lambda b, _n=a.ndim: (0,) * _n)

    in_specs = [
        pl.BlockSpec((1, Lc, E), lambda b: (b, 0, 0)),
        pl.BlockSpec((1, Lt, E), lambda b: (b, 0, 0)),
        pl.BlockSpec((1, 1, 2), lambda b: (b, 0, 0)),
    ] + [_wspec(w) for w in weights]

    out_pad = pl.pallas_call(
        _aen_kernel,
        out_shape=jax.ShapeDtypeStruct((B, 1, OUT_PAD), jnp.float32),
        grid=(B,),
        in_specs=in_specs,
        out_specs=pl.BlockSpec((1, 1, OUT_PAD), lambda b: (b, 0, 0)),
        compiler_params=pltpu.CompilerParams(dimension_semantics=("parallel",)),
    )(context, target, inv_len, *weights)

    return out_pad[:, 0, :polarities_dim]


# ----------------------------------------------------------------------------
# Deterministic parameter construction (same layout/seeds as the reference run)
# ----------------------------------------------------------------------------

def attn_params(key, embed_dim, n_head, out_dim, scale=0.1):
    d = embed_dim // n_head
    hd = n_head * d
    ks = jax.random.split(key, 7)
    return dict(
        wk=jax.random.normal(ks[0], (embed_dim, hd), jnp.float32) * scale,
        bk=jax.random.normal(ks[1], (hd,), jnp.float32) * scale,
        wq=jax.random.normal(ks[2], (embed_dim, hd), jnp.float32) * scale,
        bq=jax.random.normal(ks[3], (hd,), jnp.float32) * scale,
        wmlp=jax.random.normal(ks[4], (2 * d,), jnp.float32) * scale,
        wp=jax.random.normal(ks[5], (hd, out_dim), jnp.float32) * scale,
        bp=jax.random.normal(ks[6], (out_dim,), jnp.float32) * scale,
    )


def ffn_params(key, d, scale=0.1):
    ks = jax.random.split(key, 4)
    return dict(
        w1=jax.random.normal(ks[0], (d, d), jnp.float32) * scale,
        b1=jax.random.normal(ks[1], (d,), jnp.float32) * scale,
        w2=jax.random.normal(ks[2], (d, d), jnp.float32) * scale,
        b2=jax.random.normal(ks[3], (d,), jnp.float32) * scale,
    )


if __name__ == "__main__":
    VOCAB, E, HDIM, H, P = 50, 32, 32, 8, 3
    B, Lc, Lt = 2, 8, 4

    key = jax.random.PRNGKey(0)
    keys = jax.random.split(key, 8)
    emb = jax.random.normal(keys[0], (VOCAB, E), jnp.float32) * 0.1
    emb = emb.at[0].set(0.0)  # padding row of the GloVe matrix

    params = {
        "embedding": emb,
        "attn_k": attn_params(keys[1], E, H, HDIM),
        "attn_q": attn_params(keys[2], E, H, HDIM),
        "attn_s1": attn_params(keys[3], HDIM, H, HDIM),
        "ffn_c": ffn_params(keys[4], HDIM),
        "ffn_t": ffn_params(keys[5], HDIM),
        "dense": {
            "w": jax.random.normal(keys[6], (3 * HDIM, P), jnp.float32) * 0.1,
            "b": jax.random.normal(keys[7], (P,), jnp.float32) * 0.1,
        },
    }

    # Padded index inputs; at least one full-length row per tensor so that the
    # SqueezeEmbedding truncation is an identity.
    text_raw_indices = jnp.array([[3, 7, 12, 5, 9, 21, 34, 2],
                                  [4, 8, 15, 16, 23, 42, 0, 0]], dtype=jnp.int32)
    target_indices = jnp.array([[5, 11, 19, 7],
                                [6, 13, 27, 0]], dtype=jnp.int32)

    prepared = prepare_aen_glove(params, n_head=H, k_len=Lc)
    forward = jax.jit(aen_glove_forward, static_argnames=("polarities_dim",))
    out = forward(prepared, text_raw_indices, target_indices, polarities_dim=P)
    out = jax.block_until_ready(out)
    assert out.shape == (B, P)
    assert bool(jnp.all(jnp.isfinite(out)))
    print("KERNEL_OK")
</pallas_src>

<mosaic_0001>
module attributes {stable_mosaic.version = 11 : i64} {
  func.func @_aen_kernel(%arg0: i32, %arg1: memref<1x8x32xf32, #tpu.memory_space<vmem>>, %arg2: memref<1x4x32xf32, #tpu.memory_space<vmem>>, %arg3: memref<1x1x2xf32, #tpu.memory_space<vmem>>, %arg4: memref<32x32xf32, #tpu.memory_space<vmem>>, %arg5: memref<1x32xf32, #tpu.memory_space<vmem>>, %arg6: memref<32x64xf32, #tpu.memory_space<vmem>>, %arg7: memref<1x64xf32, #tpu.memory_space<vmem>>, %arg8: memref<32x64xf32, #tpu.memory_space<vmem>>, %arg9: memref<32x32xf32, #tpu.memory_space<vmem>>, %arg10: memref<1x32xf32, #tpu.memory_space<vmem>>, %arg11: memref<32x32xf32, #tpu.memory_space<vmem>>, %arg12: memref<1x32xf32, #tpu.memory_space<vmem>>, %arg13: memref<32x64xf32, #tpu.memory_space<vmem>>, %arg14: memref<1x64xf32, #tpu.memory_space<vmem>>, %arg15: memref<32x64xf32, #tpu.memory_space<vmem>>, %arg16: memref<32x32xf32, #tpu.memory_space<vmem>>, %arg17: memref<1x32xf32, #tpu.memory_space<vmem>>, %arg18: memref<32x32xf32, #tpu.memory_space<vmem>>, %arg19: memref<1x32xf32, #tpu.memory_space<vmem>>, %arg20: memref<32x64xf32, #tpu.memory_space<vmem>>, %arg21: memref<1x64xf32, #tpu.memory_space<vmem>>, %arg22: memref<32x64xf32, #tpu.memory_space<vmem>>, %arg23: memref<32x32xf32, #tpu.memory_space<vmem>>, %arg24: memref<1x32xf32, #tpu.memory_space<vmem>>, %arg25: memref<8x64xf32, #tpu.memory_space<vmem>>, %arg26: memref<8x64xf32, #tpu.memory_space<vmem>>, %arg27: memref<64x8xf32, #tpu.memory_space<vmem>>, %arg28: memref<64x8xf32, #tpu.memory_space<vmem>>, %arg29: memref<64x32xf32, #tpu.memory_space<vmem>>, %arg30: memref<32x32xf32, #tpu.memory_space<vmem>>, %arg31: memref<1x32xf32, #tpu.memory_space<vmem>>, %arg32: memref<32x32xf32, #tpu.memory_space<vmem>>, %arg33: memref<1x32xf32, #tpu.memory_space<vmem>>, %arg34: memref<32x32xf32, #tpu.memory_space<vmem>>, %arg35: memref<1x32xf32, #tpu.memory_space<vmem>>, %arg36: memref<32x32xf32, #tpu.memory_space<vmem>>, %arg37: memref<1x32xf32, #tpu.memory_space<vmem>>, %arg38: memref<32x128xf32, #tpu.memory_space<vmem>>, %arg39: memref<32x128xf32, #tpu.memory_space<vmem>>, %arg40: memref<32x128xf32, #tpu.memory_space<vmem>>, %arg41: memref<1x128xf32, #tpu.memory_space<vmem>>, %arg42: memref<1x1x128xf32, #tpu.memory_space<vmem>>) attributes {dimension_semantics = [#tpu.dimension_semantics<parallel>], iteration_bounds = array<i64: 2>, scalar_prefetch = 0 : i64, scratch_operands = 0 : i64, tpu.core_type = #tpu.core_type<tc>, window_params = [{transform_indices = @transform_0, window_bounds = array<i64: 1, 8, 32>}, {transform_indices = @transform_1, window_bounds = array<i64: 1, 4, 32>}, {transform_indices = @transform_2, window_bounds = array<i64: 1, 1, 2>}, {pipeline_mode = #tpu.pipeline_mode<synchronous>, transform_indices = @transform_3, window_bounds = array<i64: 32, 32>}, {pipeline_mode = #tpu.pipeline_mode<synchronous>, transform_indices = @transform_4, window_bounds = array<i64: 1, 32>}, {pipeline_mode = #tpu.pipeline_mode<synchronous>, transform_indices = @transform_5, window_bounds = array<i64: 32, 64>}, {pipeline_mode = #tpu.pipeline_mode<synchronous>, transform_indices = @transform_6, window_bounds = array<i64: 1, 64>}, {pipeline_mode = #tpu.pipeline_mode<synchronous>, transform_indices = @transform_7, window_bounds = array<i64: 32, 64>}, {pipeline_mode = #tpu.pipeline_mode<synchronous>, transform_indices = @transform_8, window_bounds = array<i64: 32, 32>}, {pipeline_mode = #tpu.pipeline_mode<synchronous>, transform_indices = @transform_9, window_bounds = array<i64: 1, 32>}, {pipeline_mode = #tpu.pipeline_mode<synchronous>, transform_indices = @transform_10, window_bounds = array<i64: 32, 32>}, {pipeline_mode = #tpu.pipeline_mode<synchronous>, transform_indices = @transform_11, window_bounds = array<i64: 1, 32>}, {pipeline_mode = #tpu.pipeline_mode<synchronous>, transform_indices = @transform_12, window_bounds = array<i64: 32, 64>}, {pipeline_mode = #tpu.pipeline_mode<synchronous>, transform_indices = @transform_13, window_bounds = array<i64: 1, 64>}, {pipeline_mode = #tpu.pipeline_mode<synchronous>, transform_indices = @transform_14, window_bounds = array<i64: 32, 64>}, {pipeline_mode = #tpu.pipeline_mode<synchronous>, transform_indices = @transform_15, window_bounds = array<i64: 32, 32>}, {pipeline_mode = #tpu.pipeline_mode<synchronous>, transform_indices = @transform_16, window_bounds = array<i64: 1, 32>}, {pipeline_mode = #tpu.pipeline_mode<synchronous>, transform_indices = @transform_17, window_bounds = array<i64: 32, 32>}, {pipeline_mode = #tpu.pipeline_mode<synchronous>, transform_indices = @transform_18, window_bounds = array<i64: 1, 32>}, {pipeline_mode = #tpu.pipeline_mode<synchronous>, transform_indices = @transform_19, window_bounds = array<i64: 32, 64>}, {pipeline_mode = #tpu.pipeline_mode<synchronous>, transform_indices = @transform_20, window_bounds = array<i64: 1, 64>}, {pipeline_mode = #tpu.pipeline_mode<synchronous>, transform_indices = @transform_21, window_bounds = array<i64: 32, 64>}, {pipeline_mode = #tpu.pipeline_mode<synchronous>, transform_indices = @transform_22, window_bounds = array<i64: 32, 32>}, {pipeline_mode = #tpu.pipeline_mode<synchronous>, transform_indices = @transform_23, window_bounds = array<i64: 1, 32>}, {pipeline_mode = #tpu.pipeline_mode<synchronous>, transform_indices = @transform_24, window_bounds = array<i64: 8, 64>}, {pipeline_mode = #tpu.pipeline_mode<synchronous>, transform_indices = @transform_25, window_bounds = array<i64: 8, 64>}, {pipeline_mode = #tpu.pipeline_mode<synchronous>, transform_indices = @transform_26, window_bounds = array<i64: 64, 8>}, {pipeline_mode = #tpu.pipeline_mode<synchronous>, transform_indices = @transform_27, window_bounds = array<i64: 64, 8>}, {pipeline_mode = #tpu.pipeline_mode<synchronous>, transform_indices = @transform_28, window_bounds = array<i64: 64, 32>}, {pipeline_mode = #tpu.pipeline_mode<synchronous>, transform_indices = @transform_29, window_bounds = array<i64: 32, 32>}, {pipeline_mode = #tpu.pipeline_mode<synchronous>, transform_indices = @transform_30, window_bounds = array<i64: 1, 32>}, {pipeline_mode = #tpu.pipeline_mode<synchronous>, transform_indices = @transform_31, window_bounds = array<i64: 32, 32>}, {pipeline_mode = #tpu.pipeline_mode<synchronous>, transform_indices = @transform_32, window_bounds = array<i64: 1, 32>}, {pipeline_mode = #tpu.pipeline_mode<synchronous>, transform_indices = @transform_33, window_bounds = array<i64: 32, 32>}, {pipeline_mode = #tpu.pipeline_mode<synchronous>, transform_indices = @transform_34, window_bounds = array<i64: 1, 32>}, {pipeline_mode = #tpu.pipeline_mode<synchronous>, transform_indices = @transform_35, window_bounds = array<i64: 32, 32>}, {pipeline_mode = #tpu.pipeline_mode<synchronous>, transform_indices = @transform_36, window_bounds = array<i64: 1, 32>}, {pipeline_mode = #tpu.pipeline_mode<synchronous>, transform_indices = @transform_37, window_bounds = array<i64: 32, 128>}, {pipeline_mode = #tpu.pipeline_mode<synchronous>, transform_indices = @transform_38, window_bounds = array<i64: 32, 128>}, {pipeline_mode = #tpu.pipeline_mode<synchronous>, transform_indices = @transform_39, window_bounds = array<i64: 32, 128>}, {pipeline_mode = #tpu.pipeline_mode<synchronous>, transform_indices = @transform_40, window_bounds = array<i64: 1, 128>}, {transform_indices = @transform_41, window_bounds = array<i64: 1, 1, 128>}]} {
    %c0 = arith.constant 0 : index
    %c0_0 = arith.constant 0 : index
    %c0_1 = arith.constant 0 : index
    %0 = vector.load %arg1[%c0, %c0_0, %c0_1] : memref<1x8x32xf32, #tpu.memory_space<vmem>>, vector<1x8x32xf32>
    %1 = vector.shape_cast %0 : vector<1x8x32xf32> to vector<8x32xf32>
    %c0_2 = arith.constant 0 : index
    %c0_3 = arith.constant 0 : index
    %c0_4 = arith.constant 0 : index
    %2 = vector.load %arg2[%c0_2, %c0_3, %c0_4] : memref<1x4x32xf32, #tpu.memory_space<vmem>>, vector<1x4x32xf32>
    %3 = vector.shape_cast %2 : vector<1x4x32xf32> to vector<4x32xf32>
    %c0_5 = arith.constant 0 : index
    %c0_6 = arith.constant 0 : index
    %4 = vector.load %arg25[%c0_5, %c0_6] : memref<8x64xf32, #tpu.memory_space<vmem>>, vector<8x64xf32>
    %c0_7 = arith.constant 0 : index
    %c0_8 = arith.constant 0 : index
    %5 = vector.load %arg26[%c0_7, %c0_8] : memref<8x64xf32, #tpu.memory_space<vmem>>, vector<8x64xf32>
    %c0_9 = arith.constant 0 : index
    %c0_10 = arith.constant 0 : index
    %6 = vector.load %arg27[%c0_9, %c0_10] : memref<64x8xf32, #tpu.memory_space<vmem>>, vector<64x8xf32>
    %c0_11 = arith.constant 0 : index
    %c0_12 = arith.constant 0 : index
    %7 = vector.load %arg28[%c0_11, %c0_12] : memref<64x8xf32, #tpu.memory_space<vmem>>, vector<64x8xf32>
    %c0_13 = arith.constant 0 : index
    %c0_14 = arith.constant 0 : index
    %8 = vector.load %arg29[%c0_13, %c0_14] : memref<64x32xf32, #tpu.memory_space<vmem>>, vector<64x32xf32>
    %c0_15 = arith.constant 0 : index
    %c0_16 = arith.constant 0 : index
    %9 = vector.load %arg4[%c0_15, %c0_16] : memref<32x32xf32, #tpu.memory_space<vmem>>, vector<32x32xf32>
    %c0_17 = arith.constant 0 : index
    %c0_18 = arith.constant 0 : index
    %10 = vector.load %arg5[%c0_17, %c0_18] : memref<1x32xf32, #tpu.memory_space<vmem>>, vector<1x32xf32>
    %c0_19 = arith.constant 0 : index
    %c0_20 = arith.constant 0 : index
    %11 = vector.load %arg6[%c0_19, %c0_20] : memref<32x64xf32, #tpu.memory_space<vmem>>, vector<32x64xf32>
    %c0_21 = arith.constant 0 : index
    %c0_22 = arith.constant 0 : index
    %12 = vector.load %arg7[%c0_21, %c0_22] : memref<1x64xf32, #tpu.memory_space<vmem>>, vector<1x64xf32>
    %c0_23 = arith.constant 0 : index
    %c0_24 = arith.constant 0 : index
    %13 = vector.load %arg8[%c0_23, %c0_24] : memref<32x64xf32, #tpu.memory_space<vmem>>, vector<32x64xf32>
    %c0_25 = arith.constant 0 : index
    %c0_26 = arith.constant 0 : index
    %14 = vector.load %arg9[%c0_25, %c0_26] : memref<32x32xf32, #tpu.memory_space<vmem>>, vector<32x32xf32>
    %c0_27 = arith.constant 0 : index
    %c0_28 = arith.constant 0 : index
    %15 = vector.load %arg10[%c0_27, %c0_28] : memref<1x32xf32, #tpu.memory_space<vmem>>, vector<1x32xf32>
    %cst = arith.constant dense<0.000000e+00> : vector<8x32xf32>
    %16 = tpu.matmul %1, %9, %cst {dimension_numbers = #tpu.dot_dimension_numbers<[1], [0], [0], [1], [0, 0, 1, 1], [], []>} : vector<8x32xf32>, vector<32x32xf32>, vector<8x32xf32> -> vector<8x32xf32>
    %17 = vector.broadcast %10 : vector<1x32xf32> to vector<8x32xf32>
    %18 = arith.addf %16, %17 : vector<8x32xf32>
    %cst_29 = arith.constant dense<0.000000e+00> : vector<8x64xf32>
    %19 = tpu.matmul %18, %13, %cst_29 {dimension_numbers = #tpu.dot_dimension_numbers<[1], [0], [0], [1], [0, 0, 1, 1], [], []>} : vector<8x32xf32>, vector<32x64xf32>, vector<8x64xf32> -> vector<8x64xf32>
    %20 = arith.mulf %19, %4 : vector<8x64xf32>
    %cst_30 = arith.constant dense<0.000000e+00> : vector<64xf32>
    %21 = vector.multi_reduction <add>, %20, %cst_30 [0] : vector<8x64xf32> to vector<64xf32>
    %22 = vector.shape_cast %21 : vector<64xf32> to vector<1x64xf32>
    %cst_31 = arith.constant dense<0.000000e+00> : vector<8x64xf32>
    %23 = tpu.matmul %1, %11, %cst_31 {dimension_numbers = #tpu.dot_dimension_numbers<[1], [0], [0], [1], [0, 0, 1, 1], [], []>} : vector<8x32xf32>, vector<32x64xf32>, vector<8x64xf32> -> vector<8x64xf32>
    %24 = vector.broadcast %12 : vector<1x64xf32> to vector<8x64xf32>
    %25 = arith.addf %23, %24 : vector<8x64xf32>
    %26 = vector.broadcast %22 : vector<1x64xf32> to vector<8x64xf32>
    %27 = arith.addf %25, %26 : vector<8x64xf32>
    %28 = math.tanh %27 : vector<8x64xf32>
    %29 = math.exp %28 : vector<8x64xf32>
    %cst_32 = arith.constant dense<0.000000e+00> : vector<8x8xf32>
    %30 = tpu.matmul %29, %6, %cst_32 {dimension_numbers = #tpu.dot_dimension_numbers<[1], [0], [0], [1], [0, 0, 1, 1], [], []>} : vector<8x64xf32>, vector<64x8xf32>, vector<8x8xf32> -> vector<8x8xf32>
    %cst_33 = arith.constant 1.000000e+00 : f32
    %31 = vector.broadcast %cst_33 : f32 to vector<8x8xf32>
    %32 = arith.divf %31, %30 : vector<8x8xf32>
    %cst_34 = arith.constant dense<0.000000e+00> : vector<8x64xf32>
    %33 = tpu.matmul %32, %5, %cst_34 {dimension_numbers = #tpu.dot_dimension_numbers<[1], [0], [0], [1], [0, 0, 1, 1], [], []>} : vector<8x8xf32>, vector<8x64xf32>, vector<8x64xf32> -> vector<8x64xf32>
    %34 = arith.mulf %29, %33 : vector<8x64xf32>
    %cst_35 = arith.constant dense<0.000000e+00> : vector<64x32xf32>
    %35 = tpu.matmul %7, %18, %cst_35 {dimension_numbers = #tpu.dot_dimension_numbers<[1], [0], [0], [1], [0, 0, 1, 1], [], []>} : vector<64x8xf32>, vector<8x32xf32>, vector<64x32xf32> -> vector<64x32xf32>
    %36 = arith.mulf %35, %8 : vector<64x32xf32>
    %cst_36 = arith.constant dense<0.000000e+00> : vector<8x32xf32>
    %37 = tpu.matmul %34, %36, %cst_36 {dimension_numbers = #tpu.dot_dimension_numbers<[1], [0], [0], [1], [0, 0, 1, 1], [], []>} : vector<8x64xf32>, vector<64x32xf32>, vector<8x32xf32> -> vector<8x32xf32>
    %cst_37 = arith.constant dense<0.000000e+00> : vector<8x32xf32>
    %38 = tpu.matmul %37, %14, %cst_37 {dimension_numbers = #tpu.dot_dimension_numbers<[1], [0], [0], [1], [0, 0, 1, 1], [], []>} : vector<8x32xf32>, vector<32x32xf32>, vector<8x32xf32> -> vector<8x32xf32>
    %39 = vector.broadcast %15 : vector<1x32xf32> to vector<8x32xf32>
    %40 = arith.addf %38, %39 : vector<8x32xf32>
    %c0_38 = arith.constant 0 : index
    %c0_39 = arith.constant 0 : index
    %41 = vector.load %arg30[%c0_38, %c0_39] : memref<32x32xf32, #tpu.memory_space<vmem>>, vector<32x32xf32>
    %c0_40 = arith.constant 0 : index
    %c0_41 = arith.constant 0 : index
    %42 = vector.load %arg31[%c0_40, %c0_41] : memref<1x32xf32, #tpu.memory_space<vmem>>, vector<1x32xf32>
    %c0_42 = arith.constant 0 : index
    %c0_43 = arith.constant 0 : index
    %43 = vector.load %arg32[%c0_42, %c0_43] : memref<32x32xf32, #tpu.memory_space<vmem>>, vector<32x32xf32>
    %c0_44 = arith.constant 0 : index
    %c0_45 = arith.constant 0 : index
    %44 = vector.load %arg33[%c0_44, %c0_45] : memref<1x32xf32, #tpu.memory_space<vmem>>, vector<1x32xf32>
    %cst_46 = arith.constant dense<0.000000e+00> : vector<8x32xf32>
    %45 = tpu.matmul %40, %41, %cst_46 {dimension_numbers = #tpu.dot_dimension_numbers<[1], [0], [0], [1], [0, 0, 1, 1], [], []>} : vector<8x32xf32>, vector<32x32xf32>, vector<8x32xf32> -> vector<8x32xf32>
    %46 = vector.broadcast %42 : vector<1x32xf32> to vector<8x32xf32>
    %47 = arith.addf %45, %46 : vector<8x32xf32>
    %cst_47 = arith.constant 0.000000e+00 : f32
    %48 = vector.broadcast %cst_47 : f32 to vector<8x32xf32>
    %49 = arith.maximumf %47, %48 : vector<8x32xf32>
    %cst_48 = arith.constant dense<0.000000e+00> : vector<8x32xf32>
    %50 = tpu.matmul %49, %43, %cst_48 {dimension_numbers = #tpu.dot_dimension_numbers<[1], [0], [0], [1], [0, 0, 1, 1], [], []>} : vector<8x32xf32>, vector<32x32xf32>, vector<8x32xf32> -> vector<8x32xf32>
    %51 = vector.broadcast %44 : vector<1x32xf32> to vector<8x32xf32>
    %52 = arith.addf %50, %51 : vector<8x32xf32>
    %c0_49 = arith.constant 0 : index
    %c0_50 = arith.constant 0 : index
    %53 = vector.load %arg11[%c0_49, %c0_50] : memref<32x32xf32, #tpu.memory_space<vmem>>, vector<32x32xf32>
    %c0_51 = arith.constant 0 : index
    %c0_52 = arith.constant 0 : index
    %54 = vector.load %arg12[%c0_51, %c0_52] : memref<1x32xf32, #tpu.memory_space<vmem>>, vector<1x32xf32>
    %c0_53 = arith.constant 0 : index
    %c0_54 = arith.constant 0 : index
    %55 = vector.load %arg13[%c0_53, %c0_54] : memref<32x64xf32, #tpu.memory_space<vmem>>, vector<32x64xf32>
    %c0_55 = arith.constant 0 : index
    %c0_56 = arith.constant 0 : index
    %56 = vector.load %arg14[%c0_55, %c0_56] : memref<1x64xf32, #tpu.memory_space<vmem>>, vector<1x64xf32>
    %c0_57 = arith.constant 0 : index
    %c0_58 = arith.constant 0 : index
    %57 = vector.load %arg15[%c0_57, %c0_58] : memref<32x64xf32, #tpu.memory_space<vmem>>, vector<32x64xf32>
    %c0_59 = arith.constant 0 : index
    %c0_60 = arith.constant 0 : index
    %58 = vector.load %arg16[%c0_59, %c0_60] : memref<32x32xf32, #tpu.memory_space<vmem>>, vector<32x32xf32>
    %c0_61 = arith.constant 0 : index
    %c0_62 = arith.constant 0 : index
    %59 = vector.load %arg17[%c0_61, %c0_62] : memref<1x32xf32, #tpu.memory_space<vmem>>, vector<1x32xf32>
    %cst_63 = arith.constant dense<0.000000e+00> : vector<8x32xf32>
    %60 = tpu.matmul %1, %53, %cst_63 {dimension_numbers = #tpu.dot_dimension_numbers<[1], [0], [0], [1], [0, 0, 1, 1], [], []>} : vector<8x32xf32>, vector<32x32xf32>, vector<8x32xf32> -> vector<8x32xf32>
    %61 = vector.broadcast %54 : vector<1x32xf32> to vector<8x32xf32>
    %62 = arith.addf %60, %61 : vector<8x32xf32>
    %cst_64 = arith.constant dense<0.000000e+00> : vector<8x64xf32>
    %63 = tpu.matmul %62, %57, %cst_64 {dimension_numbers = #tpu.dot_dimension_numbers<[1], [0], [0], [1], [0, 0, 1, 1], [], []>} : vector<8x32xf32>, vector<32x64xf32>, vector<8x64xf32> -> vector<8x64xf32>
    %64 = arith.mulf %63, %4 : vector<8x64xf32>
    %cst_65 = arith.constant dense<0.000000e+00> : vector<64xf32>
    %65 = vector.multi_reduction <add>, %64, %cst_65 [0] : vector<8x64xf32> to vector<64xf32>
    %66 = vector.shape_cast %65 : vector<64xf32> to vector<1x64xf32>
    %cst_66 = arith.constant dense<0.000000e+00> : vector<4x64xf32>
    %67 = tpu.matmul %3, %55, %cst_66 {dimension_numbers = #tpu.dot_dimension_numbers<[1], [0], [0], [1], [0, 0, 1, 1], [], []>} : vector<4x32xf32>, vector<32x64xf32>, vector<4x64xf32> -> vector<4x64xf32>
    %68 = vector.broadcast %56 : vector<1x64xf32> to vector<4x64xf32>
    %69 = arith.addf %67, %68 : vector<4x64xf32>
    %70 = vector.broadcast %66 : vector<1x64xf32> to vector<4x64xf32>
    %71 = arith.addf %69, %70 : vector<4x64xf32>
    %72 = math.tanh %71 : vector<4x64xf32>
    %73 = math.exp %72 : vector<4x64xf32>
    %cst_67 = arith.constant dense<0.000000e+00> : vector<4x8xf32>
    %74 = tpu.matmul %73, %6, %cst_67 {dimension_numbers = #tpu.dot_dimension_numbers<[1], [0], [0], [1], [0, 0, 1, 1], [], []>} : vector<4x64xf32>, vector<64x8xf32>, vector<4x8xf32> -> vector<4x8xf32>
    %cst_68 = arith.constant 1.000000e+00 : f32
    %75 = vector.broadcast %cst_68 : f32 to vector<4x8xf32>
    %76 = arith.divf %75, %74 : vector<4x8xf32>
    %cst_69 = arith.constant dense<0.000000e+00> : vector<4x64xf32>
    %77 = tpu.matmul %76, %5, %cst_69 {dimension_numbers = #tpu.dot_dimension_numbers<[1], [0], [0], [1], [0, 0, 1, 1], [], []>} : vector<4x8xf32>, vector<8x64xf32>, vector<4x64xf32> -> vector<4x64xf32>
    %78 = arith.mulf %73, %77 : vector<4x64xf32>
    %cst_70 = arith.constant dense<0.000000e+00> : vector<64x32xf32>
    %79 = tpu.matmul %7, %62, %cst_70 {dimension_numbers = #tpu.dot_dimension_numbers<[1], [0], [0], [1], [0, 0, 1, 1], [], []>} : vector<64x8xf32>, vector<8x32xf32>, vector<64x32xf32> -> vector<64x32xf32>
    %80 = arith.mulf %79, %8 : vector<64x32xf32>
    %cst_71 = arith.constant dense<0.000000e+00> : vector<4x32xf32>
    %81 = tpu.matmul %78, %80, %cst_71 {dimension_numbers = #tpu.dot_dimension_numbers<[1], [0], [0], [1], [0, 0, 1, 1], [], []>} : vector<4x64xf32>, vector<64x32xf32>, vector<4x32xf32> -> vector<4x32xf32>
    %cst_72 = arith.constant dense<0.000000e+00> : vector<4x32xf32>
    %82 = tpu.matmul %81, %58, %cst_72 {dimension_numbers = #tpu.dot_dimension_numbers<[1], [0], [0], [1], [0, 0, 1, 1], [], []>} : vector<4x32xf32>, vector<32x32xf32>, vector<4x32xf32> -> vector<4x32xf32>
    %83 = vector.broadcast %59 : vector<1x32xf32> to vector<4x32xf32>
    %84 = arith.addf %82, %83 : vector<4x32xf32>
    %c0_73 = arith.constant 0 : index
    %c0_74 = arith.constant 0 : index
    %85 = vector.load %arg34[%c0_73, %c0_74] : memref<32x32xf32, #tpu.memory_space<vmem>>, vector<32x32xf32>
    %c0_75 = arith.constant 0 : index
    %c0_76 = arith.constant 0 : index
    %86 = vector.load %arg35[%c0_75, %c0_76] : memref<1x32xf32, #tpu.memory_space<vmem>>, vector<1x32xf32>
    %c0_77 = arith.constant 0 : index
    %c0_78 = arith.constant 0 : index
    %87 = vector.load %arg36[%c0_77, %c0_78] : memref<32x32xf32, #tpu.memory_space<vmem>>, vector<32x32xf32>
    %c0_79 = arith.constant 0 : index
    %c0_80 = arith.constant 0 : index
    %88 = vector.load %arg37[%c0_79, %c0_80] : memref<1x32xf32, #tpu.memory_space<vmem>>, vector<1x32xf32>
    %cst_81 = arith.constant dense<0.000000e+00> : vector<4x32xf32>
    %89 = tpu.matmul %84, %85, %cst_81 {dimension_numbers = #tpu.dot_dimension_numbers<[1], [0], [0], [1], [0, 0, 1, 1], [], []>} : vector<4x32xf32>, vector<32x32xf32>, vector<4x32xf32> -> vector<4x32xf32>
    %90 = vector.broadcast %86 : vector<1x32xf32> to vector<4x32xf32>
    %91 = arith.addf %89, %90 : vector<4x32xf32>
    %cst_82 = arith.constant 0.000000e+00 : f32
    %92 = vector.broadcast %cst_82 : f32 to vector<4x32xf32>
    %93 = arith.maximumf %91, %92 : vector<4x32xf32>
    %cst_83 = arith.constant dense<0.000000e+00> : vector<4x32xf32>
    %94 = tpu.matmul %93, %87, %cst_83 {dimension_numbers = #tpu.dot_dimension_numbers<[1], [0], [0], [1], [0, 0, 1, 1], [], []>} : vector<4x32xf32>, vector<32x32xf32>, vector<4x32xf32> -> vector<4x32xf32>
    %95 = vector.broadcast %88 : vector<1x32xf32> to vector<4x32xf32>
    %96 = arith.addf %94, %95 : vector<4x32xf32>
    %c0_84 = arith.constant 0 : index
    %c0_85 = arith.constant 0 : index
    %97 = vector.load %arg18[%c0_84, %c0_85] : memref<32x32xf32, #tpu.memory_space<vmem>>, vector<32x32xf32>
    %c0_86 = arith.constant 0 : index
    %c0_87 = arith.constant 0 : index
    %98 = vector.load %arg19[%c0_86, %c0_87] : memref<1x32xf32, #tpu.memory_space<vmem>>, vector<1x32xf32>
    %c0_88 = arith.constant 0 : index
    %c0_89 = arith.constant 0 : index
    %99 = vector.load %arg20[%c0_88, %c0_89] : memref<32x64xf32, #tpu.memory_space<vmem>>, vector<32x64xf32>
    %c0_90 = arith.constant 0 : index
    %c0_91 = arith.constant 0 : index
    %100 = vector.load %arg21[%c0_90, %c0_91] : memref<1x64xf32, #tpu.memory_space<vmem>>, vector<1x64xf32>
    %c0_92 = arith.constant 0 : index
    %c0_93 = arith.constant 0 : index
    %101 = vector.load %arg22[%c0_92, %c0_93] : memref<32x64xf32, #tpu.memory_space<vmem>>, vector<32x64xf32>
    %c0_94 = arith.constant 0 : index
    %c0_95 = arith.constant 0 : index
    %102 = vector.load %arg23[%c0_94, %c0_95] : memref<32x32xf32, #tpu.memory_space<vmem>>, vector<32x32xf32>
    %c0_96 = arith.constant 0 : index
    %c0_97 = arith.constant 0 : index
    %103 = vector.load %arg24[%c0_96, %c0_97] : memref<1x32xf32, #tpu.memory_space<vmem>>, vector<1x32xf32>
    %cst_98 = arith.constant dense<0.000000e+00> : vector<8x32xf32>
    %104 = tpu.matmul %52, %97, %cst_98 {dimension_numbers = #tpu.dot_dimension_numbers<[1], [0], [0], [1], [0, 0, 1, 1], [], []>} : vector<8x32xf32>, vector<32x32xf32>, vector<8x32xf32> -> vector<8x32xf32>
    %105 = vector.broadcast %98 : vector<1x32xf32> to vector<8x32xf32>
    %106 = arith.addf %104, %105 : vector<8x32xf32>
    %cst_99 = arith.constant dense<0.000000e+00> : vector<8x64xf32>
    %107 = tpu.matmul %106, %101, %cst_99 {dimension_numbers = #tpu.dot_dimension_numbers<[1], [0], [0], [1], [0, 0, 1, 1], [], []>} : vector<8x32xf32>, vector<32x64xf32>, vector<8x64xf32> -> vector<8x64xf32>
    %108 = arith.mulf %107, %4 : vector<8x64xf32>
    %cst_100 = arith.constant dense<0.000000e+00> : vector<64xf32>
    %109 = vector.multi_reduction <add>, %108, %cst_100 [0] : vector<8x64xf32> to vector<64xf32>
    %110 = vector.shape_cast %109 : vector<64xf32> to vector<1x64xf32>
    %cst_101 = arith.constant dense<0.000000e+00> : vector<4x64xf32>
    %111 = tpu.matmul %96, %99, %cst_101 {dimension_numbers = #tpu.dot_dimension_numbers<[1], [0], [0], [1], [0, 0, 1, 1], [], []>} : vector<4x32xf32>, vector<32x64xf32>, vector<4x64xf32> -> vector<4x64xf32>
    %112 = vector.broadcast %100 : vector<1x64xf32> to vector<4x64xf32>
    %113 = arith.addf %111, %112 : vector<4x64xf32>
    %114 = vector.broadcast %110 : vector<1x64xf32> to vector<4x64xf32>
    %115 = arith.addf %113, %114 : vector<4x64xf32>
    %116 = math.tanh %115 : vector<4x64xf32>
    %117 = math.exp %116 : vector<4x64xf32>
    %cst_102 = arith.constant dense<0.000000e+00> : vector<4x8xf32>
    %118 = tpu.matmul %117, %6, %cst_102 {dimension_numbers = #tpu.dot_dimension_numbers<[1], [0], [0], [1], [0, 0, 1, 1], [], []>} : vector<4x64xf32>, vector<64x8xf32>, vector<4x8xf32> -> vector<4x8xf32>
    %cst_103 = arith.constant 1.000000e+00 : f32
    %119 = vector.broadcast %cst_103 : f32 to vector<4x8xf32>
    %120 = arith.divf %119, %118 : vector<4x8xf32>
    %cst_104 = arith.constant dense<0.000000e+00> : vector<4x64xf32>
    %121 = tpu.matmul %120, %5, %cst_104 {dimension_numbers = #tpu.dot_dimension_numbers<[1], [0], [0], [1], [0, 0, 1, 1], [], []>} : vector<4x8xf32>, vector<8x64xf32>, vector<4x64xf32> -> vector<4x64xf32>
    %122 = arith.mulf %117, %121 : vector<4x64xf32>
    %cst_105 = arith.constant dense<0.000000e+00> : vector<64x32xf32>
    %123 = tpu.matmul %7, %106, %cst_105 {dimension_numbers = #tpu.dot_dimension_numbers<[1], [0], [0], [1], [0, 0, 1, 1], [], []>} : vector<64x8xf32>, vector<8x32xf32>, vector<64x32xf32> -> vector<64x32xf32>
    %124 = arith.mulf %123, %8 : vector<64x32xf32>
    %cst_106 = arith.constant dense<0.000000e+00> : vector<4x32xf32>
    %125 = tpu.matmul %122, %124, %cst_106 {dimension_numbers = #tpu.dot_dimension_numbers<[1], [0], [0], [1], [0, 0, 1, 1], [], []>} : vector<4x64xf32>, vector<64x32xf32>, vector<4x32xf32> -> vector<4x32xf32>
    %cst_107 = arith.constant dense<0.000000e+00> : vector<4x32xf32>
    %126 = tpu.matmul %125, %102, %cst_107 {dimension_numbers = #tpu.dot_dimension_numbers<[1], [0], [0], [1], [0, 0, 1, 1], [], []>} : vector<4x32xf32>, vector<32x32xf32>, vector<4x32xf32> -> vector<4x32xf32>
    %127 = vector.broadcast %103 : vector<1x32xf32> to vector<4x32xf32>
    %128 = arith.addf %126, %127 : vector<4x32xf32>
    %c0_108 = arith.constant 0 : index
    %c0_109 = arith.constant 0 : index
    %c0_110 = arith.constant 0 : index
    %129 = vector.load %arg3[%c0_108, %c0_109, %c0_110] : memref<1x1x2xf32, #tpu.memory_space<vmem>>, vector<1x1x2xf32>
    %130 = vector.shape_cast %129 : vector<1x1x2xf32> to vector<1x2xf32>
    %131 = vector.extract_strided_slice %130 {offsets = [0, 0], sizes = [1, 1], strides = [1, 1]} : vector<1x2xf32> to vector<1x1xf32>
    %132 = vector.extract_strided_slice %130 {offsets = [0, 1], sizes = [1, 1], strides = [1, 1]} : vector<1x2xf32> to vector<1x1xf32>
    %cst_111 = arith.constant dense<0.000000e+00> : vector<32xf32>
    %133 = vector.multi_reduction <add>, %52, %cst_111 [0] : vector<8x32xf32> to vector<32xf32>
    %134 = vector.shape_cast %133 : vector<32xf32> to vector<1x32xf32>
    %135 = vector.broadcast %131 : vector<1x1xf32> to vector<1x32xf32>
    %136 = arith.mulf %134, %135 : vector<1x32xf32>
    %cst_112 = arith.constant dense<0.000000e+00> : vector<32xf32>
    %137 = vector.multi_reduction <add>, %96, %cst_112 [0] : vector<4x32xf32> to vector<32xf32>
    %138 = vector.shape_cast %137 : vector<32xf32> to vector<1x32xf32>
    %139 = vector.broadcast %132 : vector<1x1xf32> to vector<1x32xf32>
    %140 = arith.mulf %138, %139 : vector<1x32xf32>
    %cst_113 = arith.constant dense<0.000000e+00> : vector<32xf32>
    %141 = vector.multi_reduction <add>, %128, %cst_113 [0] : vector<4x32xf32> to vector<32xf32>
    %142 = vector.shape_cast %141 : vector<32xf32> to vector<1x32xf32>
    %143 = vector.broadcast %131 : vector<1x1xf32> to vector<1x32xf32>
    %144 = arith.mulf %142, %143 : vector<1x32xf32>
    %c0_114 = arith.constant 0 : index
    %c0_115 = arith.constant 0 : index
    %145 = vector.load %arg38[%c0_114, %c0_115] : memref<32x128xf32, #tpu.memory_space<vmem>>, vector<32x128xf32>
    %cst_116 = arith.constant dense<0.000000e+00> : vector<1x128xf32>
    %146 = tpu.matmul %136, %145, %cst_116 {dimension_numbers = #tpu.dot_dimension_numbers<[1], [0], [0], [1], [0, 0, 1, 1], [], []>} : vector<1x32xf32>, vector<32x128xf32>, vector<1x128xf32> -> vector<1x128xf32>
    %c0_117 = arith.constant 0 : index
    %c0_118 = arith.constant 0 : index
    %147 = vector.load %arg39[%c0_117, %c0_118] : memref<32x128xf32, #tpu.memory_space<vmem>>, vector<32x128xf32>
    %cst_119 = arith.constant dense<0.000000e+00> : vector<1x128xf32>
    %148 = tpu.matmul %144, %147, %cst_119 {dimension_numbers = #tpu.dot_dimension_numbers<[1], [0], [0], [1], [0, 0, 1, 1], [], []>} : vector<1x32xf32>, vector<32x128xf32>, vector<1x128xf32> -> vector<1x128xf32>
    %149 = arith.addf %146, %148 : vector<1x128xf32>
    %c0_120 = arith.constant 0 : index
    %c0_121 = arith.constant 0 : index
    %150 = vector.load %arg40[%c0_120, %c0_121] : memref<32x128xf32, #tpu.memory_space<vmem>>, vector<32x128xf32>
    %cst_122 = arith.constant dense<0.000000e+00> : vector<1x128xf32>
    %151 = tpu.matmul %140, %150, %cst_122 {dimension_numbers = #tpu.dot_dimension_numbers<[1], [0], [0], [1], [0, 0, 1, 1], [], []>} : vector<1x32xf32>, vector<32x128xf32>, vector<1x128xf32> -> vector<1x128xf32>
    %152 = arith.addf %149, %151 : vector<1x128xf32>
    %c0_123 = arith.constant 0 : index
    %c0_124 = arith.constant 0 : index
    %153 = vector.load %arg41[%c0_123, %c0_124] : memref<1x128xf32, #tpu.memory_space<vmem>>, vector<1x128xf32>
    %154 = arith.addf %152, %153 : vector<1x128xf32>
    %c0_125 = arith.constant 0 : index
    %c0_126 = arith.constant 0 : index
    %c0_127 = arith.constant 0 : index
    %155 = vector.load %arg42[%c0_125, %c0_126, %c0_127] : memref<1x1x128xf32, #tpu.memory_space<vmem>>, vector<1x1x128xf32>
    %156 = vector.shape_cast %155 : vector<1x1x128xf32> to vector<1x128xf32>
    %157 = vector.shape_cast %154 : vector<1x128xf32> to vector<1x1x128xf32>
    tpu.vector_store %arg42[%c0_125, %c0_126, %c0_127], %157 {strides = array<i32>} : memref<1x1x128xf32, #tpu.memory_space<vmem>>, vector<1x1x128xf32>,
    return
  }
  func.func @transform_0(%arg0: i32) -> (i32, i32, i32) {
    %c0_i32 = arith.constant 0 : i32
    %c0_i32_0 = arith.constant 0 : i32
    %c0_i32_1 = arith.constant 0 : i32
    return %arg0, %c0_i32, %c0_i32_0 : i32, i32, i32
  }
  func.func @transform_1(%arg0: i32) -> (i32, i32, i32) {
    %c0_i32 = arith.constant 0 : i32
    %c0_i32_0 = arith.constant 0 : i32
    %c0_i32_1 = arith.constant 0 : i32
    return %arg0, %c0_i32, %c0_i32_0 : i32, i32, i32
  }
  func.func @transform_2(%arg0: i32) -> (i32, i32, i32) {
    %c0_i32 = arith.constant 0 : i32
    %c0_i32_0 = arith.constant 0 : i32
    %c0_i32_1 = arith.constant 0 : i32
    return %arg0, %c0_i32, %c0_i32_0 : i32, i32, i32
  }
  func.func @transform_3(%arg0: i32) -> (i32, i32) {
    %c0_i32 = arith.constant 0 : i32
    %c0_i32_0 = arith.constant 0 : i32
    %c0_i32_1 = arith.constant 0 : i32
    return %c0_i32, %c0_i32_0 : i32, i32
  }
  func.func @transform_4(%arg0: i32) -> (i32, i32) {
    %c0_i32 = arith.constant 0 : i32
    %c0_i32_0 = arith.constant 0 : i32
    %c0_i32_1 = arith.constant 0 : i32
    return %c0_i32, %c0_i32_0 : i32, i32
  }
  func.func @transform_5(%arg0: i32) -> (i32, i32) {
    %c0_i32 = arith.constant 0 : i32
    %c0_i32_0 = arith.constant 0 : i32
    %c0_i32_1 = arith.constant 0 : i32
    return %c0_i32, %c0_i32_0 : i32, i32
  }
  func.func @transform_6(%arg0: i32) -> (i32, i32) {
    %c0_i32 = arith.constant 0 : i32
    %c0_i32_0 = arith.constant 0 : i32
    %c0_i32_1 = arith.constant 0 : i32
    return %c0_i32, %c0_i32_0 : i32, i32
  }
  func.func @transform_7(%arg0: i32) -> (i32, i32) {
    %c0_i32 = arith.constant 0 : i32
    %c0_i32_0 = arith.constant 0 : i32
    %c0_i32_1 = arith.constant 0 : i32
    return %c0_i32, %c0_i32_0 : i32, i32
  }
  func.func @transform_8(%arg0: i32) -> (i32, i32) {
    %c0_i32 = arith.constant 0 : i32
    %c0_i32_0 = arith.constant 0 : i32
    %c0_i32_1 = arith.constant 0 : i32
    return %c0_i32, %c0_i32_0 : i32, i32
  }
  func.func @transform_9(%arg0: i32) -> (i32, i32) {
    %c0_i32 = arith.constant 0 : i32
    %c0_i32_0 = arith.constant 0 : i32
    %c0_i32_1 = arith.constant 0 : i32
    return %c0_i32, %c0_i32_0 : i32, i32
  }
  func.func @transform_10(%arg0: i32) -> (i32, i32) {
    %c0_i32 = arith.constant 0 : i32
    %c0_i32_0 = arith.constant 0 : i32
    %c0_i32_1 = arith.constant 0 : i32
    return %c0_i32, %c0_i32_0 : i32, i32
  }
  func.func @transform_11(%arg0: i32) -> (i32, i32) {
    %c0_i32 = arith.constant 0 : i32
    %c0_i32_0 = arith.constant 0 : i32
    %c0_i32_1 = arith.constant 0 : i32
    return %c0_i32, %c0_i32_0 : i32, i32
  }
  func.func @transform_12(%arg0: i32) -> (i32, i32) {
    %c0_i32 = arith.constant 0 : i32
    %c0_i32_0 = arith.constant 0 : i32
    %c0_i32_1 = arith.constant 0 : i32
    return %c0_i32, %c0_i32_0 : i32, i32
  }
  func.func @transform_13(%arg0: i32) -> (i32, i32) {
    %c0_i32 = arith.constant 0 : i32
    %c0_i32_0 = arith.constant 0 : i32
    %c0_i32_1 = arith.constant 0 : i32
    return %c0_i32, %c0_i32_0 : i32, i32
  }
  func.func @transform_14(%arg0: i32) -> (i32, i32) {
    %c0_i32 = arith.constant 0 : i32
    %c0_i32_0 = arith.constant 0 : i32
    %c0_i32_1 = arith.constant 0 : i32
    return %c0_i32, %c0_i32_0 : i32, i32
  }
  func.func @transform_15(%arg0: i32) -> (i32, i32) {
    %c0_i32 = arith.constant 0 : i32
    %c0_i32_0 = arith.constant 0 : i32
    %c0_i32_1 = arith.constant 0 : i32
    return %c0_i32, %c0_i32_0 : i32, i32
  }
  func.func @transform_16(%arg0: i32) -> (i32, i32) {
    %c0_i32 = arith.constant 0 : i32
    %c0_i32_0 = arith.constant 0 : i32
    %c0_i32_1 = arith.constant 0 : i32
    return %c0_i32, %c0_i32_0 : i32, i32
  }
  func.func @transform_17(%arg0: i32) -> (i32, i32) {
    %c0_i32 = arith.constant 0 : i32
    %c0_i32_0 = arith.constant 0 : i32
    %c0_i32_1 = arith.constant 0 : i32
    return %c0_i32, %c0_i32_0 : i32, i32
  }
  func.func @transform_18(%arg0: i32) -> (i32, i32) {
    %c0_i32 = arith.constant 0 : i32
    %c0_i32_0 = arith.constant 0 : i32
    %c0_i32_1 = arith.constant 0 : i32
    return %c0_i32, %c0_i32_0 : i32, i32
  }
  func.func @transform_19(%arg0: i32) -> (i32, i32) {
    %c0_i32 = arith.constant 0 : i32
    %c0_i32_0 = arith.constant 0 : i32
    %c0_i32_1 = arith.constant 0 : i32
    return %c0_i32, %c0_i32_0 : i32, i32
  }
  func.func @transform_20(%arg0: i32) -> (i32, i32) {
    %c0_i32 = arith.constant 0 : i32
    %c0_i32_0 = arith.constant 0 : i32
    %c0_i32_1 = arith.constant 0 : i32
    return %c0_i32, %c0_i32_0 : i32, i32
  }
  func.func @transform_21(%arg0: i32) -> (i32, i32) {
    %c0_i32 = arith.constant 0 : i32
    %c0_i32_0 = arith.constant 0 : i32
    %c0_i32_1 = arith.constant 0 : i32
    return %c0_i32, %c0_i32_0 : i32, i32
  }
  func.func @transform_22(%arg0: i32) -> (i32, i32) {
    %c0_i32 = arith.constant 0 : i32
    %c0_i32_0 = arith.constant 0 : i32
    %c0_i32_1 = arith.constant 0 : i32
    return %c0_i32, %c0_i32_0 : i32, i32
  }
  func.func @transform_23(%arg0: i32) -> (i32, i32) {
    %c0_i32 = arith.constant 0 : i32
    %c0_i32_0 = arith.constant 0 : i32
    %c0_i32_1 = arith.constant 0 : i32
    return %c0_i32, %c0_i32_0 : i32, i32
  }
  func.func @transform_24(%arg0: i32) -> (i32, i32) {
    %c0_i32 = arith.constant 0 : i32
    %c0_i32_0 = arith.constant 0 : i32
    %c0_i32_1 = arith.constant 0 : i32
    return %c0_i32, %c0_i32_0 : i32, i32
  }
  func.func @transform_25(%arg0: i32) -> (i32, i32) {
    %c0_i32 = arith.constant 0 : i32
    %c0_i32_0 = arith.constant 0 : i32
    %c0_i32_1 = arith.constant 0 : i32
    return %c0_i32, %c0_i32_0 : i32, i32
  }
  func.func @transform_26(%arg0: i32) -> (i32, i32) {
    %c0_i32 = arith.constant 0 : i32
    %c0_i32_0 = arith.constant 0 : i32
    %c0_i32_1 = arith.constant 0 : i32
    return %c0_i32, %c0_i32_0 : i32, i32
  }
  func.func @transform_27(%arg0: i32) -> (i32, i32) {
    %c0_i32 = arith.constant 0 : i32
    %c0_i32_0 = arith.constant 0 : i32
    %c0_i32_1 = arith.constant 0 : i32
    return %c0_i32, %c0_i32_0 : i32, i32
  }
  func.func @transform_28(%arg0: i32) -> (i32, i32) {
    %c0_i32 = arith.constant 0 : i32
    %c0_i32_0 = arith.constant 0 : i32
    %c0_i32_1 = arith.constant 0 : i32
    return %c0_i32, %c0_i32_0 : i32, i32
  }
  func.func @transform_29(%arg0: i32) -> (i32, i32) {
    %c0_i32 = arith.constant 0 : i32
    %c0_i32_0 = arith.constant 0 : i32
    %c0_i32_1 = arith.constant 0 : i32
    return %c0_i32, %c0_i32_0 : i32, i32
  }
  func.func @transform_30(%arg0: i32) -> (i32, i32) {
    %c0_i32 = arith.constant 0 : i32
    %c0_i32_0 = arith.constant 0 : i32
    %c0_i32_1 = arith.constant 0 : i32
    return %c0_i32, %c0_i32_0 : i32, i32
  }
  func.func @transform_31(%arg0: i32) -> (i32, i32) {
    %c0_i32 = arith.constant 0 : i32
    %c0_i32_0 = arith.constant 0 : i32
    %c0_i32_1 = arith.constant 0 : i32
    return %c0_i32, %c0_i32_0 : i32, i32
  }
  func.func @transform_32(%arg0: i32) -> (i32, i32) {
    %c0_i32 = arith.constant 0 : i32
    %c0_i32_0 = arith.constant 0 : i32
    %c0_i32_1 = arith.constant 0 : i32
    return %c0_i32, %c0_i32_0 : i32, i32
  }
  func.func @transform_33(%arg0: i32) -> (i32, i32) {
    %c0_i32 = arith.constant 0 : i32
    %c0_i32_0 = arith.constant 0 : i32
    %c0_i32_1 = arith.constant 0 : i32
    return %c0_i32, %c0_i32_0 : i32, i32
  }
  func.func @transform_34(%arg0: i32) -> (i32, i32) {
    %c0_i32 = arith.constant 0 : i32
    %c0_i32_0 = arith.constant 0 : i32
    %c0_i32_1 = arith.constant 0 : i32
    return %c0_i32, %c0_i32_0 : i32, i32
  }
  func.func @transform_35(%arg0: i32) -> (i32, i32) {
    %c0_i32 = arith.constant 0 : i32
    %c0_i32_0 = arith.constant 0 : i32
    %c0_i32_1 = arith.constant 0 : i32
    return %c0_i32, %c0_i32_0 : i32, i32
  }
  func.func @transform_36(%arg0: i32) -> (i32, i32) {
    %c0_i32 = arith.constant 0 : i32
    %c0_i32_0 = arith.constant 0 : i32
    %c0_i32_1 = arith.constant 0 : i32
    return %c0_i32, %c0_i32_0 : i32, i32
  }
  func.func @transform_37(%arg0: i32) -> (i32, i32) {
    %c0_i32 = arith.constant 0 : i32
    %c0_i32_0 = arith.constant 0 : i32
    %c0_i32_1 = arith.constant 0 : i32
    return %c0_i32, %c0_i32_0 : i32, i32
  }
  func.func @transform_38(%arg0: i32) -> (i32, i32) {
    %c0_i32 = arith.constant 0 : i32
    %c0_i32_0 = arith.constant 0 : i32
    %c0_i32_1 = arith.constant 0 : i32
    return %c0_i32, %c0_i32_0 : i32, i32
  }
  func.func @transform_39(%arg0: i32) -> (i32, i32) {
    %c0_i32 = arith.constant 0 : i32
    %c0_i32_0 = arith.constant 0 : i32
    %c0_i32_1 = arith.constant 0 : i32
    return %c0_i32, %c0_i32_0 : i32, i32
  }
  func.func @transform_40(%arg0: i32) -> (i32, i32) {
    %c0_i32 = arith.constant 0 : i32
    %c0_i32_0 = arith.constant 0 : i32
    %c0_i32_1 = arith.constant 0 : i32
    return %c0_i32, %c0_i32_0 : i32, i32
  }
  func.func @transform_41(%arg0: i32) -> (i32, i32, i32) {
    %c0_i32 = arith.constant 0 : i32
    %c0_i32_0 = arith.constant 0 : i32
    %c0_i32_1 = arith.constant 0 : i32
    return %arg0, %c0_i32, %c0_i32_0 : i32, i32, i32
  }
}

</mosaic_0001>

<llo_original>
// kernel: aen_glove_forward.1
$region0: #{aen_glove_forward.1}
  #allocation0 [shape = 'u32[]', space=smem, size = 0x4, offset = 0x4, fixed_abs, tag = 'smem constant byte address 0x4 - core index']
  #allocation1 [shape = 'u32[144,128]{1,0:T(1,128)}', space=vmem, size = 0x12000, scoped, tag = 'internal scratch']
  %s0 = inlined_call_operand.smem [shape: u32[42], index: -1, kind: input, shape index: {}]
  %s1 = sld [smem:[%s0]]
  %s2 = scalar_lea.smem %s0, 1
  %s3 = sld [smem:[%s2]]
  %s4 = scalar_lea.smem %s0, 2
  %s5 = sld [smem:[%s4]]
  %s6 = scalar_lea.smem %s0, 3
  %s7 = sld [smem:[%s6]]
  %s8 = scalar_lea.smem %s0, 4
  %s9 = sld [smem:[%s8]]
  %s10 = scalar_lea.smem %s0, 5
  %s11 = sld [smem:[%s10]]
  %s12 = scalar_lea.smem %s0, 6
  %s13 = sld [smem:[%s12]]
  %s14 = scalar_lea.smem %s0, 7
  %s15 = sld [smem:[%s14]]
  %s16 = scalar_lea.smem %s0, 8
  %s17 = sld [smem:[%s16]]
  %s18 = scalar_lea.smem %s0, 9
  %s19 = sld [smem:[%s18]]
  %s20 = scalar_lea.smem %s0, 10
  %s21 = sld [smem:[%s20]]
  %s22 = scalar_lea.smem %s0, 11
  %s23 = sld [smem:[%s22]]
  %s24 = scalar_lea.smem %s0, 12
  %s25 = sld [smem:[%s24]]
  %s26 = scalar_lea.smem %s0, 13
  %s27 = sld [smem:[%s26]]
  %s28 = scalar_lea.smem %s0, 14
  %s29 = sld [smem:[%s28]]
  %s30 = scalar_lea.smem %s0, 15
  %s31 = sld [smem:[%s30]]
  %s32 = scalar_lea.smem %s0, 16
  %s33 = sld [smem:[%s32]]
  %s34 = scalar_lea.smem %s0, 17
  %s35 = sld [smem:[%s34]]
  %s36 = scalar_lea.smem %s0, 18
  %s37 = sld [smem:[%s36]]
  %s38 = scalar_lea.smem %s0, 19
  %s39 = sld [smem:[%s38]]
  %s40 = scalar_lea.smem %s0, 20
  %s41 = sld [smem:[%s40]]
  %s42 = scalar_lea.smem %s0, 21
  %s43 = sld [smem:[%s42]]
  %s44 = scalar_lea.smem %s0, 22
  %s45 = sld [smem:[%s44]]
  %s46 = scalar_lea.smem %s0, 23
  %s47 = sld [smem:[%s46]]
  %s48 = scalar_lea.smem %s0, 24
  %s49 = sld [smem:[%s48]]
  %s50 = scalar_lea.smem %s0, 25
  %s51 = sld [smem:[%s50]]
  %s52 = scalar_lea.smem %s0, 26
  %s53 = sld [smem:[%s52]]
  %s54 = scalar_lea.smem %s0, 27
  %s55 = sld [smem:[%s54]]
  %s56 = scalar_lea.smem %s0, 28
  %s57 = sld [smem:[%s56]]
  %s58 = scalar_lea.smem %s0, 29
  %s59 = sld [smem:[%s58]]
  %s60 = scalar_lea.smem %s0, 30
  %s61 = sld [smem:[%s60]]
  %s62 = scalar_lea.smem %s0, 31
  %s63 = sld [smem:[%s62]]
  %s64 = scalar_lea.smem %s0, 32
  %s65 = sld [smem:[%s64]]
  %s66 = scalar_lea.smem %s0, 33
  %s67 = sld [smem:[%s66]]
  %s68 = scalar_lea.smem %s0, 34
  %s69 = sld [smem:[%s68]]
  %s70 = scalar_lea.smem %s0, 35
  %s71 = sld [smem:[%s70]]
  %s72 = scalar_lea.smem %s0, 36
  %s73 = sld [smem:[%s72]]
  %s74 = scalar_lea.smem %s0, 37
  %s75 = sld [smem:[%s74]]
  %s76 = scalar_lea.smem %s0, 38
  %s77 = sld [smem:[%s76]]
  %s78 = scalar_lea.smem %s0, 39
  %s79 = sld [smem:[%s78]]
  %s80 = scalar_lea.smem %s0, 40
  %s81 = sld [smem:[%s80]]
  %s82 = scalar_lea.smem %s0, 41
  %s83 = sld [smem:[%s82]]
  %s84 = sld [smem:[#allocation0]]
  $region217: #{aen_glove_forward.1} parent=0
    _
  %s86 = ssub.s32 1, %s84
  %s87 = scalar_select 0, %s86, %s84
  $region1: #{aen_glove_forward.1} parent=0
    #allocation2 [shape = 'u8[512]{0}', space=vmem, size = 0x400, scoped, tag = 'input window, operand 4, single buffered']
    #allocation3 [shape = 's32[2]{0}', space=sflag, size = 0x8, scoped, tag = 'scoped memory for aen_glove_forward.1']
    #allocation4 [shape = 's32[2]{0}', space=sflag, size = 0x8, scoped, tag = 'scoped memory for aen_glove_forward.1']
    #allocation5 [shape = 'u8[512]{0}', space=vmem, size = 0x400, scoped, tag = 'input window, operand 6, single buffered']
    #allocation6 [shape = 's32[1]{0}', space=sflag, size = 0x4, scoped, tag = 'scoped memory for aen_glove_forward.1']
    #allocation7 [shape = 'u8[512]{0}', space=vmem, size = 0x400, scoped, tag = 'input window, operand 9, single buffered']
    #allocation8 [shape = 'u8[512]{0}', space=vmem, size = 0x400, scoped, tag = 'input window, operand 11, single buffered']
    #allocation9 [shape = 's32[1]{0}', space=sflag, size = 0x4, scoped, tag = 'scoped memory for aen_glove_forward.1']
    #allocation10 [shape = 'u8[512]{0}', space=vmem, size = 0x400, scoped, tag = 'input window, operand 16, single buffered']
    #allocation11 [shape = 'u8[1024]{0}', space=vmem, size = 0x400, scoped, tag = 'output window, operand 0']
    %88 = vsyncpa [#allocation3], 0
    %89 = vsyncpa [#allocation6], 0
    %90 = vsyncpa [#allocation9], 0
    %91 = vsyncpa [#allocation4], 0
    %s92 = scalar_lea.sflag [#allocation4], 1
    %93 = vsyncpa %s92, 0
    loop: start=0, step=1, limit=4
    $region2: #{aen_glove_forward.1} parent=1 // loop_pre_header
      _
    $region3: #{aen_glove_forward.1} parent=1 // loop_header
      %s95 = sphi 0, %s99
      %p96 = scmp.ge.s32.totalorder %s95, 4
      %s105 = sphi 0, %s107
      %s108 = sphi 0, %s105
      %s109 = sphi 0, %s108
      %s125 = sphi 0, %s109
      %s131 = sphi 0, %s133
      %s134 = sphi 0, %s131
      %s135 = sphi 0, %s134
      %s151 = sphi 0, %s135
      %s157 = sphi 0, %s159
      %s160 = sphi 0, %s157
      %s161 = sphi 0, %s160
      %s177 = sphi 0, %s161
      %s181 = sphi 0, %s181
      %s183 = sphi 0, %s181
      %s184 = sphi 0, %s183
      %s198 = sphi 0, %s184
      %s202 = sphi 0, %s202
      %s204 = sphi 0, %s202
      %s205 = sphi 0, %s204
      %s219 = sphi 0, %s205
      %s223 = sphi 0, %s223
      %s225 = sphi 0, %s223
      %s226 = sphi 0, %s225
      %s240 = sphi 0, %s226
      %s244 = sphi 0, %s244
      %s246 = sphi 0, %s244
      %s247 = sphi 0, %s246
      %s261 = sphi 0, %s247
      %s265 = sphi 0, %s265
      %s267 = sphi 0, %s265
      %s268 = sphi 0, %s267
      %s282 = sphi 0, %s268
      %s286 = sphi 0, %s286
      %s288 = sphi 0, %s286
      %s289 = sphi 0, %s288
      %s303 = sphi 0, %s289
      %s307 = sphi 0, %s307
      %s309 = sphi 0, %s307
      %s310 = sphi 0, %s309
      %s324 = sphi 0, %s310
      %s328 = sphi 0, %s328
      %s330 = sphi 0, %s328
      %s331 = sphi 0, %s330
      %s345 = sphi 0, %s331
      %s349 = sphi 0, %s349
      %s351 = sphi 0, %s349
      %s352 = sphi 0, %s351
      %s366 = sphi 0, %s352
      %s370 = sphi 0, %s370
      %s372 = sphi 0, %s370
      %s373 = sphi 0, %s372
      %s387 = sphi 0, %s373
      %s391 = sphi 0, %s391
      %s393 = sphi 0, %s391
      %s394 = sphi 0, %s393
      %s408 = sphi 0, %s394
      %s412 = sphi 0, %s412
      %s414 = sphi 0, %s412
      %s415 = sphi 0, %s414
      %s429 = sphi 0, %s415
      %s433 = sphi 0, %s433
      %s435 = sphi 0, %s433
      %s436 = sphi 0, %s435
      %s450 = sphi 0, %s436
      %s454 = sphi 0, %s454
      %s456 = sphi 0, %s454
      %s457 = sphi 0, %s456
      %s471 = sphi 0, %s457
      %s475 = sphi 0, %s475
      %s477 = sphi 0, %s475
      %s478 = sphi 0, %s477
      %s492 = sphi 0, %s478
      %s496 = sphi 0, %s496
      %s498 = sphi 0, %s496
      %s499 = sphi 0, %s498
      %s513 = sphi 0, %s499
      %s517 = sphi 0, %s517
      %s519 = sphi 0, %s517
      %s520 = sphi 0, %s519
      %s534 = sphi 0, %s520
      %s538 = sphi 0, %s538
      %s540 = sphi 0, %s538
      %s541 = sphi 0, %s540
      %s555 = sphi 0, %s541
      %s559 = sphi 0, %s559
      %s561 = sphi 0, %s559
      %s562 = sphi 0, %s561
      %s576 = sphi 0, %s562
      %s580 = sphi 0, %s580
      %s582 = sphi 0, %s580
      %s583 = sphi 0, %s582
      %s597 = sphi 0, %s583
      %s601 = sphi 0, %s601
      %s603 = sphi 0, %s601
      %s604 = sphi 0, %s603
      %s618 = sphi 0, %s604
      %s622 = sphi 0, %s622
      %s624 = sphi 0, %s622
      %s625 = sphi 0, %s624
      %s639 = sphi 0, %s625
      %s643 = sphi 0, %s643
      %s645 = sphi 0, %s643
      %s646 = sphi 0, %s645
      %s660 = sphi 0, %s646
      %s664 = sphi 0, %s664
      %s666 = sphi 0, %s664
      %s667 = sphi 0, %s666
      %s681 = sphi 0, %s667
      %s685 = sphi 0, %s685
      %s687 = sphi 0, %s685
      %s688 = sphi 0, %s687
      %s702 = sphi 0, %s688
      %s706 = sphi 0, %s706
      %s708 = sphi 0, %s706
      %s709 = sphi 0, %s708
      %s723 = sphi 0, %s709
      %s727 = sphi 0, %s727
      %s729 = sphi 0, %s727
      %s730 = sphi 0, %s729
      %s744 = sphi 0, %s730
      %s748 = sphi 0, %s748
      %s750 = sphi 0, %s748
      %s751 = sphi 0, %s750
      %s765 = sphi 0, %s751
      %s769 = sphi 0, %s769
      %s771 = sphi 0, %s769
      %s772 = sphi 0, %s771
      %s786 = sphi 0, %s772
      %s790 = sphi 0, %s790
      %s792 = sphi 0, %s790
      %s793 = sphi 0, %s792
      %s807 = sphi 0, %s793
      %s811 = sphi 0, %s811
      %s813 = sphi 0, %s811
      %s814 = sphi 0, %s813
      %s828 = sphi 0, %s814
      %s832 = sphi 0, %s832
      %s834 = sphi 0, %s832
      %s835 = sphi 0, %s834
      %s849 = sphi 0, %s835
      %s853 = sphi 0, %s853
      %s855 = sphi 0, %s853
      %s856 = sphi 0, %s855
      %s870 = sphi 0, %s856
      %s874 = sphi 0, %s874
      %s876 = sphi 0, %s874
      %s877 = sphi 0, %s876
      %s891 = sphi 0, %s877
      %s895 = sphi 0, %s895
      %s897 = sphi 0, %s895
      %s898 = sphi 0, %s897
      %s912 = sphi 0, %s898
      %s916 = sphi 0, %s916
      %s918 = sphi 0, %s916
      %s919 = sphi 0, %s918
      %s933 = sphi 0, %s919
      %s937 = sphi 0, %s937
      %s939 = sphi 0, %s937
      %s940 = sphi 0, %s939
      %s954 = sphi 0, %s940
      %s958 = sphi 0, %s958
      %s960 = sphi 0, %s958
      %s961 = sphi 0, %s960
      %s975 = sphi 0, %s961
      %s981 = sphi 0, %s983
      %s984 = sphi 0, %s981
      %s985 = sphi 0, %s984
      %s1001 = sphi 0, %s985
    $region4: #{aen_glove_forward.1} parent=1 // loop_header_branch
      %98 = sbr.rel (%p96) target = $region8
    $region5: #{aen_glove_forward.1} parent=1 // loop_body
      %s100 = ssub.s32 %s95, 1
      %s101 = ssub.s32 %s95, 2
      %s102 = sadd.s32 %s95, 1
      %s103 = ssub.s32 %s95, %s102
      %p104 = scmp.eq.s32.totalorder %s103, 0
      %s106 = sadd.s32 %s105, 1
      %s107 = scalar_select %p104, %s105, %s106
      %p110 = pneg %p104
      %p111 = scmp.eq.s32.totalorder %s95, 1
      %p112 = por %p110, %p111
      %p113 = scmp.ne.s32.totalorder %s105, %s108
      %p114 = scmp.eq.s32.totalorder %s95, 0
      %p115 = por %p113, %p114
      %p116 = scmp.ne.s32.totalorder %s105, %s108
      %p117 = scmp.eq.s32.totalorder %s100, 1
      %p118 = por %p116, %p117
      %p119 = scmp.ne.s32.totalorder %s108, %s109
      %p120 = scmp.eq.s32.totalorder %s100, 0
      %p121 = por %p119, %p120
      %p122 = scmp.ne.s32.totalorder %s108, %s109
      %p123 = scmp.eq.s32.totalorder %s101, 1
      %p124 = por %p122, %p123
      %p126 = scmp.ne.s32.totalorder %s109, %s125
      %p127 = scmp.eq.s32.totalorder %s101, 0
      %p128 = por %p126, %p127
      %s129 = ssub.s32 %s95, %s102
      %p130 = scmp.eq.s32.totalorder %s129, 0
      %s132 = sadd.s32 %s131, 1
      %s133 = scalar_select %p130, %s131, %s132
      %p136 = pneg %p130
      %p137 = scmp.eq.s32.totalorder %s95, 1
      %p138 = por %p136, %p137
      %p139 = scmp.ne.s32.totalorder %s131, %s134
      %p140 = scmp.eq.s32.totalorder %s95, 0
      %p141 = por %p139, %p140
      %p142 = scmp.ne.s32.totalorder %s131, %s134
      %p143 = scmp.eq.s32.totalorder %s100, 1
      %p144 = por %p142, %p143
      %p145 = scmp.ne.s32.totalorder %s134, %s135
      %p146 = scmp.eq.s32.totalorder %s100, 0
      %p147 = por %p145, %p146
      %p148 = scmp.ne.s32.totalorder %s134, %s135
      %p149 = scmp.eq.s32.totalorder %s101, 1
      %p150 = por %p148, %p149
      %p152 = scmp.ne.s32.totalorder %s135, %s151
      %p153 = scmp.eq.s32.totalorder %s101, 0
      %p154 = por %p152, %p153
      %s155 = ssub.s32 %s95, %s102
      %p156 = scmp.eq.s32.totalorder %s155, 0
      %s158 = sadd.s32 %s157, 1
      %s159 = scalar_select %p156, %s157, %s158
      %p162 = pneg %p156
      %p163 = scmp.eq.s32.totalorder %s95, 1
      %p164 = por %p162, %p163
      %p165 = scmp.ne.s32.totalorder %s157, %s160
      %p166 = scmp.eq.s32.totalorder %s95, 0
      %p167 = por %p165, %p166
      %p168 = scmp.ne.s32.totalorder %s157, %s160
      %p169 = scmp.eq.s32.totalorder %s100, 1
      %p170 = por %p168, %p169
      %p171 = scmp.ne.s32.totalorder %s160, %s161
      %p172 = scmp.eq.s32.totalorder %s100, 0
      %p173 = por %p171, %p172
      %p174 = scmp.ne.s32.totalorder %s160, %s161
      %p175 = scmp.eq.s32.totalorder %s101, 1
      %p176 = por %p174, %p175
      %p178 = scmp.ne.s32.totalorder %s161, %s177
      %p179 = scmp.eq.s32.totalorder %s101, 0
      %p180 = por %p178, %p179
      %s182 = sadd.s32 %s181, 1
      %p185 = scmp.eq.s32.totalorder %s95, 1
      %p186 = scmp.ne.s32.totalorder %s181, %s183
      %p187 = scmp.eq.s32.totalorder %s95, 0
      %p188 = por %p186, %p187
      %p189 = scmp.ne.s32.totalorder %s181, %s183
      %p190 = scmp.eq.s32.totalorder %s100, 1
      %p191 = por %p189, %p190
      %p192 = scmp.ne.s32.totalorder %s183, %s184
      %p193 = scmp.eq.s32.totalorder %s100, 0
      %p194 = por %p192, %p193
      %p195 = scmp.ne.s32.totalorder %s183, %s184
      %p196 = scmp.eq.s32.totalorder %s101, 1
      %p197 = por %p195, %p196
      %p199 = scmp.ne.s32.totalorder %s184, %s198
      %p200 = scmp.eq.s32.totalorder %s101, 0
      %p201 = por %p199, %p200
      %s203 = sadd.s32 %s202, 1
      %p206 = scmp.eq.s32.totalorder %s95, 1
      %p207 = scmp.ne.s32.totalorder %s202, %s204
      %p208 = scmp.eq.s32.totalorder %s95, 0
      %p209 = por %p207, %p208
      %p210 = scmp.ne.s32.totalorder %s202, %s204
      %p211 = scmp.eq.s32.totalorder %s100, 1
      %p212 = por %p210, %p211
      %p213 = scmp.ne.s32.totalorder %s204, %s205
      %p214 = scmp.eq.s32.totalorder %s100, 0
      %p215 = por %p213, %p214
      %p216 = scmp.ne.s32.totalorder %s204, %s205
      %p217 = scmp.eq.s32.totalorder %s101, 1
      %p218 = por %p216, %p217
      %p220 = scmp.ne.s32.totalorder %s205, %s219
      %p221 = scmp.eq.s32.totalorder %s101, 0
      %p222 = por %p220, %p221
      %s224 = sadd.s32 %s223, 1
      %p227 = scmp.eq.s32.totalorder %s95, 1
      %p228 = scmp.ne.s32.totalorder %s223, %s225
      %p229 = scmp.eq.s32.totalorder %s95, 0
      %p230 = por %p228, %p229
      %p231 = scmp.ne.s32.totalorder %s223, %s225
      %p232 = scmp.eq.s32.totalorder %s100, 1
      %p233 = por %p231, %p232
      %p234 = scmp.ne.s32.totalorder %s225, %s226
      %p235 = scmp.eq.s32.totalorder %s100, 0
      %p236 = por %p234, %p235
      %p237 = scmp.ne.s32.totalorder %s225, %s226
      %p238 = scmp.eq.s32.totalorder %s101, 1
      %p239 = por %p237, %p238
      %p241 = scmp.ne.s32.totalorder %s226, %s240
      %p242 = scmp.eq.s32.totalorder %s101, 0
      %p243 = por %p241, %p242
      %s245 = sadd.s32 %s244, 1
      %p248 = scmp.eq.s32.totalorder %s95, 1
      %p249 = scmp.ne.s32.totalorder %s244, %s246
      %p250 = scmp.eq.s32.totalorder %s95, 0
      %p251 = por %p249, %p250
      %p252 = scmp.ne.s32.totalorder %s244, %s246
      %p253 = scmp.eq.s32.totalorder %s100, 1
      %p254 = por %p252, %p253
      %p255 = scmp.ne.s32.totalorder %s246, %s247
      %p256 = scmp.eq.s32.totalorder %s100, 0
      %p257 = por %p255, %p256
      %p258 = scmp.ne.s32.totalorder %s246, %s247
      %p259 = scmp.eq.s32.totalorder %s101, 1
      %p260 = por %p258, %p259
      %p262 = scmp.ne.s32.totalorder %s247, %s261
      %p263 = scmp.eq.s32.totalorder %s101, 0
      %p264 = por %p262, %p263
      %s266 = sadd.s32 %s265, 1
      %p269 = scmp.eq.s32.totalorder %s95, 1
      %p270 = scmp.ne.s32.totalorder %s265, %s267
      %p271 = scmp.eq.s32.totalorder %s95, 0
      %p272 = por %p270, %p271
      %p273 = scmp.ne.s32.totalorder %s265, %s267
      %p274 = scmp.eq.s32.totalorder %s100, 1
      %p275 = por %p273, %p274
      %p276 = scmp.ne.s32.totalorder %s267, %s268
      %p277 = scmp.eq.s32.totalorder %s100, 0
      %p278 = por %p276, %p277
      %p279 = scmp.ne.s32.totalorder %s267, %s268
      %p280 = scmp.eq.s32.totalorder %s101, 1
      %p281 = por %p279, %p280
      %p283 = scmp.ne.s32.totalorder %s268, %s282
      %p284 = scmp.eq.s32.totalorder %s101, 0
      %p285 = por %p283, %p284
      %s287 = sadd.s32 %s286, 1
      %p290 = scmp.eq.s32.totalorder %s95, 1
      %p291 = scmp.ne.s32.totalorder %s286, %s288
      %p292 = scmp.eq.s32.totalorder %s95, 0
      %p293 = por %p291, %p292
      %p294 = scmp.ne.s32.totalorder %s286, %s288
      %p295 = scmp.eq.s32.totalorder %s100, 1
      %p296 = por %p294, %p295
      %p297 = scmp.ne.s32.totalorder %s288, %s289
      %p298 = scmp.eq.s32.totalorder %s100, 0
      %p299 = por %p297, %p298
      %p300 = scmp.ne.s32.totalorder %s288, %s289
      %p301 = scmp.eq.s32.totalorder %s101, 1
      %p302 = por %p300, %p301
      %p304 = scmp.ne.s32.totalorder %s289, %s303
      %p305 = scmp.eq.s32.totalorder %s101, 0
      %p306 = por %p304, %p305
      %s308 = sadd.s32 %s307, 1
      %p311 = scmp.eq.s32.totalorder %s95, 1
      %p312 = scmp.ne.s32.totalorder %s307, %s309
      %p313 = scmp.eq.s32.totalorder %s95, 0
      %p314 = por %p312, %p313
      %p315 = scmp.ne.s32.totalorder %s307, %s309
      %p316 = scmp.eq.s32.totalorder %s100, 1
      %p317 = por %p315, %p316
      %p318 = scmp.ne.s32.totalorder %s309, %s310
      %p319 = scmp.eq.s32.totalorder %s100, 0
      %p320 = por %p318, %p319
      %p321 = scmp.ne.s32.totalorder %s309, %s310
      %p322 = scmp.eq.s32.totalorder %s101, 1
      %p323 = por %p321, %p322
      %p325 = scmp.ne.s32.totalorder %s310, %s324
      %p326 = scmp.eq.s32.totalorder %s101, 0
      %p327 = por %p325, %p326
      %s329 = sadd.s32 %s328, 1
      %p332 = scmp.eq.s32.totalorder %s95, 1
      %p333 = scmp.ne.s32.totalorder %s328, %s330
      %p334 = scmp.eq.s32.totalorder %s95, 0
      %p335 = por %p333, %p334
      %p336 = scmp.ne.s32.totalorder %s328, %s330
      %p337 = scmp.eq.s32.totalorder %s100, 1
      %p338 = por %p336, %p337
      %p339 = scmp.ne.s32.totalorder %s330, %s331
      %p340 = scmp.eq.s32.totalorder %s100, 0
      %p341 = por %p339, %p340
      %p342 = scmp.ne.s32.totalorder %s330, %s331
      %p343 = scmp.eq.s32.totalorder %s101, 1
      %p344 = por %p342, %p343
      %p346 = scmp.ne.s32.totalorder %s331, %s345
      %p347 = scmp.eq.s32.totalorder %s101, 0
      %p348 = por %p346, %p347
      %s350 = sadd.s32 %s349, 1
      %p353 = scmp.eq.s32.totalorder %s95, 1
      %p354 = scmp.ne.s32.totalorder %s349, %s351
      %p355 = scmp.eq.s32.totalorder %s95, 0
      %p356 = por %p354, %p355
      %p357 = scmp.ne.s32.totalorder %s349, %s351
      %p358 = scmp.eq.s32.totalorder %s100, 1
      %p359 = por %p357, %p358
      %p360 = scmp.ne.s32.totalorder %s351, %s352
      %p361 = scmp.eq.s32.totalorder %s100, 0
      %p362 = por %p360, %p361
      %p363 = scmp.ne.s32.totalorder %s351, %s352
      %p364 = scmp.eq.s32.totalorder %s101, 1
      %p365 = por %p363, %p364
      %p367 = scmp.ne.s32.totalorder %s352, %s366
      %p368 = scmp.eq.s32.totalorder %s101, 0
      %p369 = por %p367, %p368
      %s371 = sadd.s32 %s370, 1
      %p374 = scmp.eq.s32.totalorder %s95, 1
      %p375 = scmp.ne.s32.totalorder %s370, %s372
      %p376 = scmp.eq.s32.totalorder %s95, 0
      %p377 = por %p375, %p376
      %p378 = scmp.ne.s32.totalorder %s370, %s372
      %p379 = scmp.eq.s32.totalorder %s100, 1
      %p380 = por %p378, %p379
      %p381 = scmp.ne.s32.totalorder %s372, %s373
      %p382 = scmp.eq.s32.totalorder %s100, 0
      %p383 = por %p381, %p382
      %p384 = scmp.ne.s32.totalorder %s372, %s373
      %p385 = scmp.eq.s32.totalorder %s101, 1
      %p386 = por %p384, %p385
      %p388 = scmp.ne.s32.totalorder %s373, %s387
      %p389 = scmp.eq.s32.totalorder %s101, 0
      %p390 = por %p388, %p389
      %s392 = sadd.s32 %s391, 1
      %p395 = scmp.eq.s32.totalorder %s95, 1
      %p396 = scmp.ne.s32.totalorder %s391, %s393
      %p397 = scmp.eq.s32.totalorder %s95, 0
      %p398 = por %p396, %p397
      %p399 = scmp.ne.s32.totalorder %s391, %s393
      %p400 = scmp.eq.s32.totalorder %s100, 1
      %p401 = por %p399, %p400
      %p402 = scmp.ne.s32.totalorder %s393, %s394
      %p403 = scmp.eq.s32.totalorder %s100, 0
      %p404 = por %p402, %p403
      %p405 = scmp.ne.s32.totalorder %s393, %s394
      %p406 = scmp.eq.s32.totalorder %s101, 1
      %p407 = por %p405, %p406
      %p409 = scmp.ne.s32.totalorder %s394, %s408
      %p410 = scmp.eq.s32.totalorder %s101, 0
      %p411 = por %p409, %p410
      %s413 = sadd.s32 %s412, 1
      %p416 = scmp.eq.s32.totalorder %s95, 1
      %p417 = scmp.ne.s32.totalorder %s412, %s414
      %p418 = scmp.eq.s32.totalorder %s95, 0
      %p419 = por %p417, %p418
      %p420 = scmp.ne.s32.totalorder %s412, %s414
      %p421 = scmp.eq.s32.totalorder %s100, 1
      %p422 = por %p420, %p421
      %p423 = scmp.ne.s32.totalorder %s414, %s415
      %p424 = scmp.eq.s32.totalorder %s100, 0
      %p425 = por %p423, %p424
      %p426 = scmp.ne.s32.totalorder %s414, %s415
      %p427 = scmp.eq.s32.totalorder %s101, 1
      %p428 = por %p426, %p427
      %p430 = scmp.ne.s32.totalorder %s415, %s429
      %p431 = scmp.eq.s32.totalorder %s101, 0
      %p432 = por %p430, %p431
      %s434 = sadd.s32 %s433, 1
      %p437 = scmp.eq.s32.totalorder %s95, 1
      %p438 = scmp.ne.s32.totalorder %s433, %s435
      %p439 = scmp.eq.s32.totalorder %s95, 0
      %p440 = por %p438, %p439
      %p441 = scmp.ne.s32.totalorder %s433, %s435
      %p442 = scmp.eq.s32.totalorder %s100, 1
      %p443 = por %p441, %p442
      %p444 = scmp.ne.s32.totalorder %s435, %s436
      %p445 = scmp.eq.s32.totalorder %s100, 0
      %p446 = por %p444, %p445
      %p447 = scmp.ne.s32.totalorder %s435, %s436
      %p448 = scmp.eq.s32.totalorder %s101, 1
      %p449 = por %p447, %p448
      %p451 = scmp.ne.s32.totalorder %s436, %s450
      %p452 = scmp.eq.s32.totalorder %s101, 0
      %p453 = por %p451, %p452
      %s455 = sadd.s32 %s454, 1
      %p458 = scmp.eq.s32.totalorder %s95, 1
      %p459 = scmp.ne.s32.totalorder %s454, %s456
      %p460 = scmp.eq.s32.totalorder %s95, 0
      %p461 = por %p459, %p460
      %p462 = scmp.ne.s32.totalorder %s454, %s456
      %p463 = scmp.eq.s32.totalorder %s100, 1
      %p464 = por %p462, %p463
      %p465 = scmp.ne.s32.totalorder %s456, %s457
      %p466 = scmp.eq.s32.totalorder %s100, 0
      %p467 = por %p465, %p466
      %p468 = scmp.ne.s32.totalorder %s456, %s457
      %p469 = scmp.eq.s32.totalorder %s101, 1
      %p470 = por %p468, %p469
      %p472 = scmp.ne.s32.totalorder %s457, %s471
      %p473 = scmp.eq.s32.totalorder %s101, 0
      %p474 = por %p472, %p473
      %s476 = sadd.s32 %s475, 1
      %p479 = scmp.eq.s32.totalorder %s95, 1
      %p480 = scmp.ne.s32.totalorder %s475, %s477
      %p481 = scmp.eq.s32.totalorder %s95, 0
      %p482 = por %p480, %p481
      %p483 = scmp.ne.s32.totalorder %s475, %s477
      %p484 = scmp.eq.s32.totalorder %s100, 1
      %p485 = por %p483, %p484
      %p486 = scmp.ne.s32.totalorder %s477, %s478
      %p487 = scmp.eq.s32.totalorder %s100, 0
      %p488 = por %p486, %p487
      %p489 = scmp.ne.s32.totalorder %s477, %s478
      %p490 = scmp.eq.s32.totalorder %s101, 1
      %p491 = por %p489, %p490
      %p493 = scmp.ne.s32.totalorder %s478, %s492
      %p494 = scmp.eq.s32.totalorder %s101, 0
      %p495 = por %p493, %p494
      %s497 = sadd.s32 %s496, 1
      %p500 = scmp.eq.s32.totalorder %s95, 1
      %p501 = scmp.ne.s32.totalorder %s496, %s498
      %p502 = scmp.eq.s32.totalorder %s95, 0
      %p503 = por %p501, %p502
      %p504 = scmp.ne.s32.totalorder %s496, %s498
      %p505 = scmp.eq.s32.totalorder %s100, 1
      %p506 = por %p504, %p505
      %p507 = scmp.ne.s32.totalorder %s498, %s499
      %p508 = scmp.eq.s32.totalorder %s100, 0
      %p509 = por %p507, %p508
      %p510 = scmp.ne.s32.totalorder %s498, %s499
      %p511 = scmp.eq.s32.totalorder %s101, 1
      %p512 = por %p510, %p511
      %p514 = scmp.ne.s32.totalorder %s499, %s513
      %p515 = scmp.eq.s32.totalorder %s101, 0
      %p516 = por %p514, %p515
      %s518 = sadd.s32 %s517, 1
      %p521 = scmp.eq.s32.totalorder %s95, 1
      %p522 = scmp.ne.s32.totalorder %s517, %s519
      %p523 = scmp.eq.s32.totalorder %s95, 0
      %p524 = por %p522, %p523
      %p525 = scmp.ne.s32.totalorder %s517, %s519
      %p526 = scmp.eq.s32.totalorder %s100, 1
      %p527 = por %p525, %p526
      %p528 = scmp.ne.s32.totalorder %s519, %s520
      %p529 = scmp.eq.s32.totalorder %s100, 0
      %p530 = por %p528, %p529
      %p531 = scmp.ne.s32.totalorder %s519, %s520
      %p532 = scmp.eq.s32.totalorder %s101, 1
      %p533 = por %p531, %p532
      %p535 = scmp.ne.s32.totalorder %s520, %s534
      %p536 = scmp.eq.s32.totalorder %s101, 0
      %p537 = por %p535, %p536
      %s539 = sadd.s32 %s538, 1
      %p542 = scmp.eq.s32.totalorder %s95, 1
      %p543 = scmp.ne.s32.totalorder %s538, %s540
      %p544 = scmp.eq.s32.totalorder %s95, 0
      %p545 = por %p543, %p544
      %p546 = scmp.ne.s32.totalorder %s538, %s540
      %p547 = scmp.eq.s32.totalorder %s100, 1
      %p548 = por %p546, %p547
      %p549 = scmp.ne.s32.totalorder %s540, %s541
      %p550 = scmp.eq.s32.totalorder %s100, 0
      %p551 = por %p549, %p550
      %p552 = scmp.ne.s32.totalorder %s540, %s541
      %p553 = scmp.eq.s32.totalorder %s101, 1
      %p554 = por %p552, %p553
      %p556 = scmp.ne.s32.totalorder %s541, %s555
      %p557 = scmp.eq.s32.totalorder %s101, 0
      %p558 = por %p556, %p557
      %s560 = sadd.s32 %s559, 1
      %p563 = scmp.eq.s32.totalorder %s95, 1
      %p564 = scmp.ne.s32.totalorder %s559, %s561
      %p565 = scmp.eq.s32.totalorder %s95, 0
      %p566 = por %p564, %p565
      %p567 = scmp.ne.s32.totalorder %s559, %s561
      %p568 = scmp.eq.s32.totalorder %s100, 1
      %p569 = por %p567, %p568
      %p570 = scmp.ne.s32.totalorder %s561, %s562
      %p571 = scmp.eq.s32.totalorder %s100, 0
      %p572 = por %p570, %p571
      %p573 = scmp.ne.s32.totalorder %s561, %s562
      %p574 = scmp.eq.s32.totalorder %s101, 1
      %p575 = por %p573, %p574
      %p577 = scmp.ne.s32.totalorder %s562, %s576
      %p578 = scmp.eq.s32.totalorder %s101, 0
      %p579 = por %p577, %p578
      %s581 = sadd.s32 %s580, 1
      %p584 = scmp.eq.s32.totalorder %s95, 1
      %p585 = scmp.ne.s32.totalorder %s580, %s582
      %p586 = scmp.eq.s32.totalorder %s95, 0
      %p587 = por %p585, %p586
      %p588 = scmp.ne.s32.totalorder %s580, %s582
      %p589 = scmp.eq.s32.totalorder %s100, 1
      %p590 = por %p588, %p589
      %p591 = scmp.ne.s32.totalorder %s582, %s583
      %p592 = scmp.eq.s32.totalorder %s100, 0
      %p593 = por %p591, %p592
      %p594 = scmp.ne.s32.totalorder %s582, %s583
      %p595 = scmp.eq.s32.totalorder %s101, 1
      %p596 = por %p594, %p595
      %p598 = scmp.ne.s32.totalorder %s583, %s597
      %p599 = scmp.eq.s32.totalorder %s101, 0
      %p600 = por %p598, %p599
      %s602 = sadd.s32 %s601, 1
      %p605 = scmp.eq.s32.totalorder %s95, 1
      %p606 = scmp.ne.s32.totalorder %s601, %s603
      %p607 = scmp.eq.s32.totalorder %s95, 0
      %p608 = por %p606, %p607
      %p609 = scmp.ne.s32.totalorder %s601, %s603
      %p610 = scmp.eq.s32.totalorder %s100, 1
      %p611 = por %p609, %p610
      %p612 = scmp.ne.s32.totalorder %s603, %s604
      %p613 = scmp.eq.s32.totalorder %s100, 0
      %p614 = por %p612, %p613
      %p615 = scmp.ne.s32.totalorder %s603, %s604
      %p616 = scmp.eq.s32.totalorder %s101, 1
      %p617 = por %p615, %p616
      %p619 = scmp.ne.s32.totalorder %s604, %s618
      %p620 = scmp.eq.s32.totalorder %s101, 0
      %p621 = por %p619, %p620
      %s623 = sadd.s32 %s622, 1
      %p626 = scmp.eq.s32.totalorder %s95, 1
      %p627 = scmp.ne.s32.totalorder %s622, %s624
      %p628 = scmp.eq.s32.totalorder %s95, 0
      %p629 = por %p627, %p628
      %p630 = scmp.ne.s32.totalorder %s622, %s624
      %p631 = scmp.eq.s32.totalorder %s100, 1
      %p632 = por %p630, %p631
      %p633 = scmp.ne.s32.totalorder %s624, %s625
      %p634 = scmp.eq.s32.totalorder %s100, 0
      %p635 = por %p633, %p634
      %p636 = scmp.ne.s32.totalorder %s624, %s625
      %p637 = scmp.eq.s32.totalorder %s101, 1
      %p638 = por %p636, %p637
      %p640 = scmp.ne.s32.totalorder %s625, %s639
      %p641 = scmp.eq.s32.totalorder %s101, 0
      %p642 = por %p640, %p641
      %s644 = sadd.s32 %s643, 1
      %p647 = scmp.eq.s32.totalorder %s95, 1
      %p648 = scmp.ne.s32.totalorder %s643, %s645
      %p649 = scmp.eq.s32.totalorder %s95, 0
      %p650 = por %p648, %p649
      %p651 = scmp.ne.s32.totalorder %s643, %s645
      %p652 = scmp.eq.s32.totalorder %s100, 1
      %p653 = por %p651, %p652
      %p654 = scmp.ne.s32.totalorder %s645, %s646
      %p655 = scmp.eq.s32.totalorder %s100, 0
      %p656 = por %p654, %p655
      %p657 = scmp.ne.s32.totalorder %s645, %s646
      %p658 = scmp.eq.s32.totalorder %s101, 1
      %p659 = por %p657, %p658
      %p661 = scmp.ne.s32.totalorder %s646, %s660
      %p662 = scmp.eq.s32.totalorder %s101, 0
      %p663 = por %p661, %p662
      %s665 = sadd.s32 %s664, 1
      %p668 = scmp.eq.s32.totalorder %s95, 1
      %p669 = scmp.ne.s32.totalorder %s664, %s666
      %p670 = scmp.eq.s32.totalorder %s95, 0
      %p671 = por %p669, %p670
      %p672 = scmp.ne.s32.totalorder %s664, %s666
      %p673 = scmp.eq.s32.totalorder %s100, 1
      %p674 = por %p672, %p673
      %p675 = scmp.ne.s32.totalorder %s666, %s667
      %p676 = scmp.eq.s32.totalorder %s100, 0
      %p677 = por %p675, %p676
      %p678 = scmp.ne.s32.totalorder %s666, %s667
      %p679 = scmp.eq.s32.totalorder %s101, 1
      %p680 = por %p678, %p679
      %p682 = scmp.ne.s32.totalorder %s667, %s681
      %p683 = scmp.eq.s32.totalorder %s101, 0
      %p684 = por %p682, %p683
      %s686 = sadd.s32 %s685, 1
      %p689 = scmp.eq.s32.totalorder %s95, 1
      %p690 = scmp.ne.s32.totalorder %s685, %s687
      %p691 = scmp.eq.s32.totalorder %s95, 0
      %p692 = por %p690, %p691
      %p693 = scmp.ne.s32.totalorder %s685, %s687
      %p694 = scmp.eq.s32.totalorder %s100, 1
      %p695 = por %p693, %p694
      %p696 = scmp.ne.s32.totalorder %s687, %s688
      %p697 = scmp.eq.s32.totalorder %s100, 0
      %p698 = por %p696, %p697
      %p699 = scmp.ne.s32.totalorder %s687, %s688
      %p700 = scmp.eq.s32.totalorder %s101, 1
      %p701 = por %p699, %p700
      %p703 = scmp.ne.s32.totalorder %s688, %s702
      %p704 = scmp.eq.s32.totalorder %s101, 0
      %p705 = por %p703, %p704
      %s707 = sadd.s32 %s706, 1
      %p710 = scmp.eq.s32.totalorder %s95, 1
      %p711 = scmp.ne.s32.totalorder %s706, %s708
      %p712 = scmp.eq.s32.totalorder %s95, 0
      %p713 = por %p711, %p712
      %p714 = scmp.ne.s32.totalorder %s706, %s708
      %p715 = scmp.eq.s32.totalorder %s100, 1
      %p716 = por %p714, %p715
      %p717 = scmp.ne.s32.totalorder %s708, %s709
      %p718 = scmp.eq.s32.totalorder %s100, 0
      %p719 = por %p717, %p718
      %p720 = scmp.ne.s32.totalorder %s708, %s709
      %p721 = scmp.eq.s32.totalorder %s101, 1
      %p722 = por %p720, %p721
      %p724 = scmp.ne.s32.totalorder %s709, %s723
      %p725 = scmp.eq.s32.totalorder %s101, 0
      %p726 = por %p724, %p725
      %s728 = sadd.s32 %s727, 1
      %p731 = scmp.eq.s32.totalorder %s95, 1
      %p732 = scmp.ne.s32.totalorder %s727, %s729
      %p733 = scmp.eq.s32.totalorder %s95, 0
      %p734 = por %p732, %p733
      %p735 = scmp.ne.s32.totalorder %s727, %s729
      %p736 = scmp.eq.s32.totalorder %s100, 1
      %p737 = por %p735, %p736
      %p738 = scmp.ne.s32.totalorder %s729, %s730
      %p739 = scmp.eq.s32.totalorder %s100, 0
      %p740 = por %p738, %p739
      %p741 = scmp.ne.s32.totalorder %s729, %s730
      %p742 = scmp.eq.s32.totalorder %s101, 1
      %p743 = por %p741, %p742
      %p745 = scmp.ne.s32.totalorder %s730, %s744
      %p746 = scmp.eq.s32.totalorder %s101, 0
      %p747 = por %p745, %p746
      %s749 = sadd.s32 %s748, 1
      %p752 = scmp.eq.s32.totalorder %s95, 1
      %p753 = scmp.ne.s32.totalorder %s748, %s750
      %p754 = scmp.eq.s32.totalorder %s95, 0
      %p755 = por %p753, %p754
      %p756 = scmp.ne.s32.totalorder %s748, %s750
      %p757 = scmp.eq.s32.totalorder %s100, 1
      %p758 = por %p756, %p757
      %p759 = scmp.ne.s32.totalorder %s750, %s751
      %p760 = scmp.eq.s32.totalorder %s100, 0
      %p761 = por %p759, %p760
      %p762 = scmp.ne.s32.totalorder %s750, %s751
      %p763 = scmp.eq.s32.totalorder %s101, 1
      %p764 = por %p762, %p763
      %p766 = scmp.ne.s32.totalorder %s751, %s765
      %p767 = scmp.eq.s32.totalorder %s101, 0
      %p768 = por %p766, %p767
      %s770 = sadd.s32 %s769, 1
      %p773 = scmp.eq.s32.totalorder %s95, 1
      %p774 = scmp.ne.s32.totalorder %s769, %s771
      %p775 = scmp.eq.s32.totalorder %s95, 0
      %p776 = por %p774, %p775
      %p777 = scmp.ne.s32.totalorder %s769, %s771
      %p778 = scmp.eq.s32.totalorder %s100, 1
      %p779 = por %p777, %p778
      %p780 = scmp.ne.s32.totalorder %s771, %s772
      %p781 = scmp.eq.s32.totalorder %s100, 0
      %p782 = por %p780, %p781
      %p783 = scmp.ne.s32.totalorder %s771, %s772
      %p784 = scmp.eq.s32.totalorder %s101, 1
      %p785 = por %p783, %p784
      %p787 = scmp.ne.s32.totalorder %s772, %s786
      %p788 = scmp.eq.s32.totalorder %s101, 0
      %p789 = por %p787, %p788
      %s791 = sadd.s32 %s790, 1
      %p794 = scmp.eq.s32.totalorder %s95, 1
      %p795 = scmp.ne.s32.totalorder %s790, %s792
      %p796 = scmp.eq.s32.totalorder %s95, 0
      %p797 = por %p795, %p796
      %p798 = scmp.ne.s32.totalorder %s790, %s792
      %p799 = scmp.eq.s32.totalorder %s100, 1
      %p800 = por %p798, %p799
      %p801 = scmp.ne.s32.totalorder %s792, %s793
      %p802 = scmp.eq.s32.totalorder %s100, 0
      %p803 = por %p801, %p802
      %p804 = scmp.ne.s32.totalorder %s792, %s793
      %p805 = scmp.eq.s32.totalorder %s101, 1
      %p806 = por %p804, %p805
      %p808 = scmp.ne.s32.totalorder %s793, %s807
      %p809 = scmp.eq.s32.totalorder %s101, 0
      %p810 = por %p808, %p809
      %s812 = sadd.s32 %s811, 1
      %p815 = scmp.eq.s32.totalorder %s95, 1
      %p816 = scmp.ne.s32.totalorder %s811, %s813
      %p817 = scmp.eq.s32.totalorder %s95, 0
      %p818 = por %p816, %p817
      %p819 = scmp.ne.s32.totalorder %s811, %s813
      %p820 = scmp.eq.s32.totalorder %s100, 1
      %p821 = por %p819, %p820
      %p822 = scmp.ne.s32.totalorder %s813, %s814
      %p823 = scmp.eq.s32.totalorder %s100, 0
      %p824 = por %p822, %p823
      %p825 = scmp.ne.s32.totalorder %s813, %s814
      %p826 = scmp.eq.s32.totalorder %s101, 1
      %p827 = por %p825, %p826
      %p829 = scmp.ne.s32.totalorder %s814, %s828
      %p830 = scmp.eq.s32.totalorder %s101, 0
      %p831 = por %p829, %p830
      %s833 = sadd.s32 %s832, 1
      %p836 = scmp.eq.s32.totalorder %s95, 1
      %p837 = scmp.ne.s32.totalorder %s832, %s834
      %p838 = scmp.eq.s32.totalorder %s95, 0
      %p839 = por %p837, %p838
      %p840 = scmp.ne.s32.totalorder %s832, %s834
      %p841 = scmp.eq.s32.totalorder %s100, 1
      %p842 = por %p840, %p841
      %p843 = scmp.ne.s32.totalorder %s834, %s835
      %p844 = scmp.eq.s32.totalorder %s100, 0
      %p845 = por %p843, %p844
      %p846 = scmp.ne.s32.totalorder %s834, %s835
      %p847 = scmp.eq.s32.totalorder %s101, 1
      %p848 = por %p846, %p847
      %p850 = scmp.ne.s32.totalorder %s835, %s849
      %p851 = scmp.eq.s32.totalorder %s101, 0
      %p852 = por %p850, %p851
      %s854 = sadd.s32 %s853, 1
      %p857 = scmp.eq.s32.totalorder %s95, 1
      %p858 = scmp.ne.s32.totalorder %s853, %s855
      %p859 = scmp.eq.s32.totalorder %s95, 0
      %p860 = por %p858, %p859
      %p861 = scmp.ne.s32.totalorder %s853, %s855
      %p862 = scmp.eq.s32.totalorder %s100, 1
      %p863 = por %p861, %p862
      %p864 = scmp.ne.s32.totalorder %s855, %s856
      %p865 = scmp.eq.s32.totalorder %s100, 0
      %p866 = por %p864, %p865
      %p867 = scmp.ne.s32.totalorder %s855, %s856
      %p868 = scmp.eq.s32.totalorder %s101, 1
      %p869 = por %p867, %p868
      %p871 = scmp.ne.s32.totalorder %s856, %s870
      %p872 = scmp.eq.s32.totalorder %s101, 0
      %p873 = por %p871, %p872
      %s875 = sadd.s32 %s874, 1
      %p878 = scmp.eq.s32.totalorder %s95, 1
      %p879 = scmp.ne.s32.totalorder %s874, %s876
      %p880 = scmp.eq.s32.totalorder %s95, 0
      %p881 = por %p879, %p880
      %p882 = scmp.ne.s32.totalorder %s874, %s876
      %p883 = scmp.eq.s32.totalorder %s100, 1
      %p884 = por %p882, %p883
      %p885 = scmp.ne.s32.totalorder %s876, %s877
      %p886 = scmp.eq.s32.totalorder %s100, 0
      %p887 = por %p885, %p886
      %p888 = scmp.ne.s32.totalorder %s876, %s877
      %p889 = scmp.eq.s32.totalorder %s101, 1
      %p890 = por %p888, %p889
      %p892 = scmp.ne.s32.totalorder %s877, %s891
      %p893 = scmp.eq.s32.totalorder %s101, 0
      %p894 = por %p892, %p893
      %s896 = sadd.s32 %s895, 1
      %p899 = scmp.eq.s32.totalorder %s95, 1
      %p900 = scmp.ne.s32.totalorder %s895, %s897
      %p901 = scmp.eq.s32.totalorder %s95, 0
      %p902 = por %p900, %p901
      %p903 = scmp.ne.s32.totalorder %s895, %s897
      %p904 = scmp.eq.s32.totalorder %s100, 1
      %p905 = por %p903, %p904
      %p906 = scmp.ne.s32.totalorder %s897, %s898
      %p907 = scmp.eq.s32.totalorder %s100, 0
      %p908 = por %p906, %p907
      %p909 = scmp.ne.s32.totalorder %s897, %s898
      %p910 = scmp.eq.s32.totalorder %s101, 1
      %p911 = por %p909, %p910
      %p913 = scmp.ne.s32.totalorder %s898, %s912
      %p914 = scmp.eq.s32.totalorder %s101, 0
      %p915 = por %p913, %p914
      %s917 = sadd.s32 %s916, 1
      %p920 = scmp.eq.s32.totalorder %s95, 1
      %p921 = scmp.ne.s32.totalorder %s916, %s918
      %p922 = scmp.eq.s32.totalorder %s95, 0
      %p923 = por %p921, %p922
      %p924 = scmp.ne.s32.totalorder %s916, %s918
      %p925 = scmp.eq.s32.totalorder %s100, 1
      %p926 = por %p924, %p925
      %p927 = scmp.ne.s32.totalorder %s918, %s919
      %p928 = scmp.eq.s32.totalorder %s100, 0
      %p929 = por %p927, %p928
      %p930 = scmp.ne.s32.totalorder %s918, %s919
      %p931 = scmp.eq.s32.totalorder %s101, 1
      %p932 = por %p930, %p931
      %p934 = scmp.ne.s32.totalorder %s919, %s933
      %p935 = scmp.eq.s32.totalorder %s101, 0
      %p936 = por %p934, %p935
      %s938 = sadd.s32 %s937, 1
      %p941 = scmp.eq.s32.totalorder %s95, 1
      %p942 = scmp.ne.s32.totalorder %s937, %s939
      %p943 = scmp.eq.s32.totalorder %s95, 0
      %p944 = por %p942, %p943
      %p945 = scmp.ne.s32.totalorder %s937, %s939
      %p946 = scmp.eq.s32.totalorder %s100, 1
      %p947 = por %p945, %p946
      %p948 = scmp.ne.s32.totalorder %s939, %s940
      %p949 = scmp.eq.s32.totalorder %s100, 0
      %p950 = por %p948, %p949
      %p951 = scmp.ne.s32.totalorder %s939, %s940
      %p952 = scmp.eq.s32.totalorder %s101, 1
      %p953 = por %p951, %p952
      %p955 = scmp.ne.s32.totalorder %s940, %s954
      %p956 = scmp.eq.s32.totalorder %s101, 0
      %p957 = por %p955, %p956
      %s959 = sadd.s32 %s958, 1
      %p962 = scmp.eq.s32.totalorder %s95, 1
      %p963 = scmp.ne.s32.totalorder %s958, %s960
      %p964 = scmp.eq.s32.totalorder %s95, 0
      %p965 = por %p963, %p964
      %p966 = scmp.ne.s32.totalorder %s958, %s960
      %p967 = scmp.eq.s32.totalorder %s100, 1
      %p968 = por %p966, %p967
      %p969 = scmp.ne.s32.totalorder %s960, %s961
      %p970 = scmp.eq.s32.totalorder %s100, 0
      %p971 = por %p969, %p970
      %p972 = scmp.ne.s32.totalorder %s960, %s961
      %p973 = scmp.eq.s32.totalorder %s101, 1
      %p974 = por %p972, %p973
      %p976 = scmp.ne.s32.totalorder %s961, %s975
      %p977 = scmp.eq.s32.totalorder %s101, 0
      %p978 = por %p976, %p977
      %s979 = ssub.s32 %s95, %s102
      %p980 = scmp.eq.s32.totalorder %s979, 0
      %s982 = sadd.s32 %s981, 1
      %s983 = scalar_select %p980, %s981, %s982
      %p986 = pneg %p980
      %p987 = scmp.eq.s32.totalorder %s95, 1
      %p988 = por %p986, %p987
      %p989 = scmp.ne.s32.totalorder %s981, %s984
      %p990 = scmp.eq.s32.totalorder %s95, 0
      %p991 = por %p989, %p990
      %p992 = scmp.ne.s32.totalorder %s981, %s984
      %p993 = scmp.eq.s32.totalorder %s100, 1
      %p994 = por %p992, %p993
      %p995 = scmp.ne.s32.totalorder %s984, %s985
      %p996 = scmp.eq.s32.totalorder %s100, 0
      %p997 = por %p995, %p996
      %p998 = scmp.ne.s32.totalorder %s984, %s985
      %p999 = scmp.eq.s32.totalorder %s101, 1
      %p1000 = por %p998, %p999
      %p1002 = scmp.ne.s32.totalorder %s985, %s1001
      %p1003 = scmp.eq.s32.totalorder %s101, 0
      %p1004 = por %p1002, %p1003
      %p1005 = scmp.le.s32.totalorder 1, %s95
      %p1006 = scmp.lt.s32.totalorder %s95, 3
      %p1007 = pnand %p1005, %p1006
      %p1008 = pneg %p1007
      // Predicated region
      $region9: #{aen_glove_forward.1} parent=5 // pred_check
        _
      $region10: #{aen_glove_forward.1} parent=5 // pred_check_branch
        %1010 = sbr.rel (%p1007) target = $region12
      $region11: #{aen_glove_forward.1} parent=5 // pred_region
        %s1011 = ssub.s32 %s95, 1
        // Predicated region
        $region13: #{aen_glove_forward.1} parent=11 // pred_check
          %p1012 = pneg %p194
        $region14: #{aen_glove_forward.1} parent=11 // pred_check_branch
          %1014 = sbr.rel (%p1012) target = $region16
        $region15: #{aen_glove_forward.1} parent=11 // pred_region
          _
        $region16: #{aen_glove_forward.1} parent=11 // pred_fallthru
          _
        // Predicated region
        $region17: #{aen_glove_forward.1} parent=11 // pred_check
          %p1015 = pneg %p215
        $region18: #{aen_glove_forward.1} parent=11 // pred_check_branch
          %1017 = sbr.rel (%p1015) target = $region20
        $region19: #{aen_glove_forward.1} parent=11 // pred_region
          %s1019 = ssub.s32 16, 16
          %1020 = vsyncadd [#allocation3], %s1019
          %s1022 = sshll.u32 [#allocation2], 4
          %s1023 = int_to_ptr.vmem [resolvable:$true] %s1022
          %1025 = dma.hbm_to_vmem [thread:$0]  %s9, 16, %s1023, [#allocation3]
        $region20: #{aen_glove_forward.1} parent=11 // pred_fallthru
          _
        // Predicated region
        $region21: #{aen_glove_forward.1} parent=11 // pred_check
          %p1026 = pneg %p236
        $region22: #{aen_glove_forward.1} parent=11 // pred_check_branch
          %1028 = sbr.rel (%p1026) target = $region24
        $region23: #{aen_glove_forward.1} parent=11 // pred_region
          _
        $region24: #{aen_glove_forward.1} parent=11 // pred_fallthru
          _
        // Predicated region
        $region25: #{aen_glove_forward.1} parent=11 // pred_check
          %p1029 = pneg %p257
        $region26: #{aen_glove_forward.1} parent=11 // pred_check_branch
          %1031 = sbr.rel (%p1029) target = $region28
        $region27: #{aen_glove_forward.1} parent=11 // pred_region
          %s1033 = ssub.s32 16, 16
          %1034 = vsyncadd [#allocation6], %s1033
          %s1036 = sshll.u32 [#allocation5], 4
          %s1037 = int_to_ptr.vmem [resolvable:$true] %s1036
          %1039 = dma.hbm_to_vmem [thread:$0]  %s13, 16, %s1037, [#allocation6]
        $region28: #{aen_glove_forward.1} parent=11 // pred_fallthru
          _
        // Predicated region
        $region29: #{aen_glove_forward.1} parent=11 // pred_check
          %p1040 = pneg %p278
        $region30: #{aen_glove_forward.1} parent=11 // pred_check_branch
          %1042 = sbr.rel (%p1040) target = $region32
        $region31: #{aen_glove_forward.1} parent=11 // pred_region
          _
        $region32: #{aen_glove_forward.1} parent=11 // pred_fallthru
          _
        // Predicated region
        $region33: #{aen_glove_forward.1} parent=11 // pred_check
          %p1043 = pneg %p299
        $region34: #{aen_glove_forward.1} parent=11 // pred_check_branch
          %1045 = sbr.rel (%p1043) target = $region36
        $region35: #{aen_glove_forward.1} parent=11 // pred_region
          _
        $region36: #{aen_glove_forward.1} parent=11 // pred_fallthru
          _
        // Predicated region
        $region37: #{aen_glove_forward.1} parent=11 // pred_check
          %p1046 = pneg %p320
        $region38: #{aen_glove_forward.1} parent=11 // pred_check_branch
          %1048 = sbr.rel (%p1046) target = $region40
        $region39: #{aen_glove_forward.1} parent=11 // pred_region
          %s1050 = ssub.s32 16, 16
          %1051 = vsyncadd [#allocation6], %s1050
          %s1053 = sshll.u32 [#allocation7], 4
          %s1054 = int_to_ptr.vmem [resolvable:$true] %s1053
          %1056 = dma.hbm_to_vmem [thread:$0]  %s19, 16, %s1054, [#allocation6]
        $region40: #{aen_glove_forward.1} parent=11 // pred_fallthru
          _
        // Predicated region
        $region41: #{aen_glove_forward.1} parent=11 // pred_check
          %p1057 = pneg %p341
        $region42: #{aen_glove_forward.1} parent=11 // pred_check_branch
          %1059 = sbr.rel (%p1057) target = $region44
        $region43: #{aen_glove_forward.1} parent=11 // pred_region
          _
        $region44: #{aen_glove_forward.1} parent=11 // pred_fallthru
          _
        // Predicated region
        $region45: #{aen_glove_forward.1} parent=11 // pred_check
          %p1060 = pneg %p362
        $region46: #{aen_glove_forward.1} parent=11 // pred_check_branch
          %1062 = sbr.rel (%p1060) target = $region48
        $region47: #{aen_glove_forward.1} parent=11 // pred_region
          %s1064 = ssub.s32 16, 16
          %1065 = vsyncadd [#allocation9], %s1064
          %s1067 = sshll.u32 [#allocation8], 4
          %s1068 = int_to_ptr.vmem [resolvable:$true] %s1067
          %1070 = dma.hbm_to_vmem [thread:$0]  %s23, 16, %s1068, [#allocation9]
        $region48: #{aen_glove_forward.1} parent=11 // pred_fallthru
          _
        // Predicated region
        $region49: #{aen_glove_forward.1} parent=11 // pred_check
          %p1071 = pneg %p383
        $region50: #{aen_glove_forward.1} parent=11 // pred_check_branch
          %1073 = sbr.rel (%p1071) target = $region52
        $region51: #{aen_glove_forward.1} parent=11 // pred_region
          _
        $region52: #{aen_glove_forward.1} parent=11 // pred_fallthru
          _
        // Predicated region
        $region53: #{aen_glove_forward.1} parent=11 // pred_check
          %p1074 = pneg %p404
        $region54: #{aen_glove_forward.1} parent=11 // pred_check_branch
          %1076 = sbr.rel (%p1074) target = $region56
        $region55: #{aen_glove_forward.1} parent=11 // pred_region
          _
        $region56: #{aen_glove_forward.1} parent=11 // pred_fallthru
          _
        // Predicated region
        $region57: #{aen_glove_forward.1} parent=11 // pred_check
          %p1077 = pneg %p425
        $region58: #{aen_glove_forward.1} parent=11 // pred_check_branch
          %1079 = sbr.rel (%p1077) target = $region60
        $region59: #{aen_glove_forward.1} parent=11 // pred_region
          _
        $region60: #{aen_glove_forward.1} parent=11 // pred_fallthru
          _
        // Predicated region
        $region61: #{aen_glove_forward.1} parent=11 // pred_check
          %p1080 = pneg %p446
        $region62: #{aen_glove_forward.1} parent=11 // pred_check_branch
          %1082 = sbr.rel (%p1080) target = $region64
        $region63: #{aen_glove_forward.1} parent=11 // pred_region
          _
        $region64: #{aen_glove_forward.1} parent=11 // pred_fallthru
          _
        // Predicated region
        $region65: #{aen_glove_forward.1} parent=11 // pred_check
          %p1083 = pneg %p467
        $region66: #{aen_glove_forward.1} parent=11 // pred_check_branch
          %1085 = sbr.rel (%p1083) target = $region68
        $region67: #{aen_glove_forward.1} parent=11 // pred_region
          %s1087 = ssub.s32 16, 16
          %1088 = vsyncadd [#allocation9], %s1087
          %s1090 = sshll.u32 [#allocation10], 4
          %s1091 = int_to_ptr.vmem [resolvable:$true] %s1090
          %1093 = dma.hbm_to_vmem [thread:$0]  %s33, 16, %s1091, [#allocation9]
        $region68: #{aen_glove_forward.1} parent=11 // pred_fallthru
          _
        // Predicated region
        $region69: #{aen_glove_forward.1} parent=11 // pred_check
          %p1094 = pneg %p488
        $region70: #{aen_glove_forward.1} parent=11 // pred_check_branch
          %1096 = sbr.rel (%p1094) target = $region72
        $region71: #{aen_glove_forward.1} parent=11 // pred_region
          _
        $region72: #{aen_glove_forward.1} parent=11 // pred_fallthru
          _
        // Predicated region
        $region73: #{aen_glove_forward.1} parent=11 // pred_check
          %p1097 = pneg %p509
        $region74: #{aen_glove_forward.1} parent=11 // pred_check_branch
          %1099 = sbr.rel (%p1097) target = $region76
        $region75: #{aen_glove_forward.1} parent=11 // pred_region
          _
        $region76: #{aen_glove_forward.1} parent=11 // pred_fallthru
          _
        // Predicated region
        $region77: #{aen_glove_forward.1} parent=11 // pred_check
          %p1100 = pneg %p530
        $region78: #{aen_glove_forward.1} parent=11 // pred_check_branch
          %1102 = sbr.rel (%p1100) target = $region80
        $region79: #{aen_glove_forward.1} parent=11 // pred_region
          _
        $region80: #{aen_glove_forward.1} parent=11 // pred_fallthru
          _
        // Predicated region
        $region81: #{aen_glove_forward.1} parent=11 // pred_check
          %p1103 = pneg %p551
        $region82: #{aen_glove_forward.1} parent=11 // pred_check_branch
          %1105 = sbr.rel (%p1103) target = $region84
        $region83: #{aen_glove_forward.1} parent=11 // pred_region
          _
        $region84: #{aen_glove_forward.1} parent=11 // pred_fallthru
          _
        // Predicated region
        $region85: #{aen_glove_forward.1} parent=11 // pred_check
          %p1106 = pneg %p572
        $region86: #{aen_glove_forward.1} parent=11 // pred_check_branch
          %1108 = sbr.rel (%p1106) target = $region88
        $region87: #{aen_glove_forward.1} parent=11 // pred_region
          _
        $region88: #{aen_glove_forward.1} parent=11 // pred_fallthru
          _
        // Predicated region
        $region89: #{aen_glove_forward.1} parent=11 // pred_check
          %p1109 = pneg %p593
        $region90: #{aen_glove_forward.1} parent=11 // pred_check_branch
          %1111 = sbr.rel (%p1109) target = $region92
        $region91: #{aen_glove_forward.1} parent=11 // pred_region
          _
        $region92: #{aen_glove_forward.1} parent=11 // pred_fallthru
          _
        // Predicated region
        $region93: #{aen_glove_forward.1} parent=11 // pred_check
          %p1112 = pneg %p614
        $region94: #{aen_glove_forward.1} parent=11 // pred_check_branch
          %1114 = sbr.rel (%p1112) target = $region96
        $region95: #{aen_glove_forward.1} parent=11 // pred_region
          _
        $region96: #{aen_glove_forward.1} parent=11 // pred_fallthru
          _
        // Predicated region
        $region97: #{aen_glove_forward.1} parent=11 // pred_check
          %p1115 = pneg %p635
        $region98: #{aen_glove_forward.1} parent=11 // pred_check_branch
          %1117 = sbr.rel (%p1115) target = $region100
        $region99: #{aen_glove_forward.1} parent=11 // pred_region
          _
        $region100: #{aen_glove_forward.1} parent=11 // pred_fallthru
          _
        // Predicated region
        $region101: #{aen_glove_forward.1} parent=11 // pred_check
          %p1118 = pneg %p656
        $region102: #{aen_glove_forward.1} parent=11 // pred_check_branch
          %1120 = sbr.rel (%p1118) target = $region104
        $region103: #{aen_glove_forward.1} parent=11 // pred_region
          _
        $region104: #{aen_glove_forward.1} parent=11 // pred_fallthru
          _
        // Predicated region
        $region105: #{aen_glove_forward.1} parent=11 // pred_check
          %p1121 = pneg %p677
        $region106: #{aen_glove_forward.1} parent=11 // pred_check_branch
          %1123 = sbr.rel (%p1121) target = $region108
        $region107: #{aen_glove_forward.1} parent=11 // pred_region
          _
        $region108: #{aen_glove_forward.1} parent=11 // pred_fallthru
          _
        // Predicated region
        $region109: #{aen_glove_forward.1} parent=11 // pred_check
          %p1124 = pneg %p698
        $region110: #{aen_glove_forward.1} parent=11 // pred_check_branch
          %1126 = sbr.rel (%p1124) target = $region112
        $region111: #{aen_glove_forward.1} parent=11 // pred_region
          _
        $region112: #{aen_glove_forward.1} parent=11 // pred_fallthru
          _
        // Predicated region
        $region113: #{aen_glove_forward.1} parent=11 // pred_check
          %p1127 = pneg %p719
        $region114: #{aen_glove_forward.1} parent=11 // pred_check_branch
          %1129 = sbr.rel (%p1127) target = $region116
        $region115: #{aen_glove_forward.1} parent=11 // pred_region
          _
        $region116: #{aen_glove_forward.1} parent=11 // pred_fallthru
          _
        // Predicated region
        $region117: #{aen_glove_forward.1} parent=11 // pred_check
          %p1130 = pneg %p740
        $region118: #{aen_glove_forward.1} parent=11 // pred_check_branch
          %1132 = sbr.rel (%p1130) target = $region120
        $region119: #{aen_glove_forward.1} parent=11 // pred_region
          _
        $region120: #{aen_glove_forward.1} parent=11 // pred_fallthru
          _
        // Predicated region
        $region121: #{aen_glove_forward.1} parent=11 // pred_check
          %p1133 = pneg %p761
        $region122: #{aen_glove_forward.1} parent=11 // pred_check_branch
          %1135 = sbr.rel (%p1133) target = $region124
        $region123: #{aen_glove_forward.1} parent=11 // pred_region
          _
        $region124: #{aen_glove_forward.1} parent=11 // pred_fallthru
          _
        // Predicated region
        $region125: #{aen_glove_forward.1} parent=11 // pred_check
          %p1136 = pneg %p782
        $region126: #{aen_glove_forward.1} parent=11 // pred_check_branch
          %1138 = sbr.rel (%p1136) target = $region128
        $region127: #{aen_glove_forward.1} parent=11 // pred_region
          _
        $region128: #{aen_glove_forward.1} parent=11 // pred_fallthru
          _
        // Predicated region
        $region129: #{aen_glove_forward.1} parent=11 // pred_check
          %p1139 = pneg %p803
        $region130: #{aen_glove_forward.1} parent=11 // pred_check_branch
          %1141 = sbr.rel (%p1139) target = $region132
        $region131: #{aen_glove_forward.1} parent=11 // pred_region
          _
        $region132: #{aen_glove_forward.1} parent=11 // pred_fallthru
          _
        // Predicated region
        $region133: #{aen_glove_forward.1} parent=11 // pred_check
          %p1142 = pneg %p824
        $region134: #{aen_glove_forward.1} parent=11 // pred_check_branch
          %1144 = sbr.rel (%p1142) target = $region136
        $region135: #{aen_glove_forward.1} parent=11 // pred_region
          _
        $region136: #{aen_glove_forward.1} parent=11 // pred_fallthru
          _
        // Predicated region
        $region137: #{aen_glove_forward.1} parent=11 // pred_check
          %p1145 = pneg %p845
        $region138: #{aen_glove_forward.1} parent=11 // pred_check_branch
          %1147 = sbr.rel (%p1145) target = $region140
        $region139: #{aen_glove_forward.1} parent=11 // pred_region
          _
        $region140: #{aen_glove_forward.1} parent=11 // pred_fallthru
          _
        // Predicated region
        $region141: #{aen_glove_forward.1} parent=11 // pred_check
          %p1148 = pneg %p866
        $region142: #{aen_glove_forward.1} parent=11 // pred_check_branch
          %1150 = sbr.rel (%p1148) target = $region144
        $region143: #{aen_glove_forward.1} parent=11 // pred_region
          _
        $region144: #{aen_glove_forward.1} parent=11 // pred_fallthru
          _
        // Predicated region
        $region145: #{aen_glove_forward.1} parent=11 // pred_check
          %p1151 = pneg %p887
        $region146: #{aen_glove_forward.1} parent=11 // pred_check_branch
          %1153 = sbr.rel (%p1151) target = $region148
        $region147: #{aen_glove_forward.1} parent=11 // pred_region
          _
        $region148: #{aen_glove_forward.1} parent=11 // pred_fallthru
          _
        // Predicated region
        $region149: #{aen_glove_forward.1} parent=11 // pred_check
          %p1154 = pneg %p908
        $region150: #{aen_glove_forward.1} parent=11 // pred_check_branch
          %1156 = sbr.rel (%p1154) target = $region152
        $region151: #{aen_glove_forward.1} parent=11 // pred_region
          _
        $region152: #{aen_glove_forward.1} parent=11 // pred_fallthru
          _
        // Predicated region
        $region153: #{aen_glove_forward.1} parent=11 // pred_check
          %p1157 = pneg %p929
        $region154: #{aen_glove_forward.1} parent=11 // pred_check_branch
          %1159 = sbr.rel (%p1157) target = $region156
        $region155: #{aen_glove_forward.1} parent=11 // pred_region
          _
        $region156: #{aen_glove_forward.1} parent=11 // pred_fallthru
          _
        // Predicated region
        $region157: #{aen_glove_forward.1} parent=11 // pred_check
          %p1160 = pneg %p950
        $region158: #{aen_glove_forward.1} parent=11 // pred_check_branch
          %1162 = sbr.rel (%p1160) target = $region160
        $region159: #{aen_glove_forward.1} parent=11 // pred_region
          _
        $region160: #{aen_glove_forward.1} parent=11 // pred_fallthru
          _
        // Predicated region
        $region161: #{aen_glove_forward.1} parent=11 // pred_check
          %p1163 = pneg %p971
        $region162: #{aen_glove_forward.1} parent=11 // pred_check_branch
          %1165 = sbr.rel (%p1163) target = $region164
        $region163: #{aen_glove_forward.1} parent=11 // pred_region
          _
        $region164: #{aen_glove_forward.1} parent=11 // pred_fallthru
          _
      $region12: #{aen_glove_forward.1} parent=5 // pred_fallthru
        _
      %p1166 = scmp.lt.s32.totalorder %s95, 2
      // Predicated region
      $region165: #{aen_glove_forward.1} parent=5 // pred_check
        %p1167 = pneg %p1166
      $region166: #{aen_glove_forward.1} parent=5 // pred_check_branch
        %1169 = sbr.rel (%p1167) target = $region168
      $region167: #{aen_glove_forward.1} parent=5 // pred_region
        // Predicated region
        $region169: #{aen_glove_forward.1} parent=167 // pred_check
          %p1170 = pneg %p115
        $region170: #{aen_glove_forward.1} parent=167 // pred_check_branch
          %1172 = sbr.rel (%p1170) target = $region172
        $region171: #{aen_glove_forward.1} parent=167 // pred_region
          %p1173 = scmp.lt.s32.totalorder %s95, 1
          %s1174 = scalar_select %p1173, %s95, 1
          %s1175 = smul.addr %s1174, 8
          %s1176 = scalar_lea.vmem %s1, %s1175
        $region172: #{aen_glove_forward.1} parent=167 // pred_fallthru
          _
        // Predicated region
        $region173: #{aen_glove_forward.1} parent=167 // pred_check
          %p1177 = pneg %p141
        $region174: #{aen_glove_forward.1} parent=167 // pred_check_branch
          %1179 = sbr.rel (%p1177) target = $region176
        $region175: #{aen_glove_forward.1} parent=167 // pred_region
          %p1180 = scmp.lt.s32.totalorder %s95, 1
          %s1181 = scalar_select %p1180, %s95, 1
          %s1182 = smul.addr %s1181, 4
          %s1183 = scalar_lea.vmem %s3, %s1182
        $region176: #{aen_glove_forward.1} parent=167 // pred_fallthru
          _
        // Predicated region
        $region177: #{aen_glove_forward.1} parent=167 // pred_check
          %p1184 = pneg %p167
        $region178: #{aen_glove_forward.1} parent=167 // pred_check_branch
          %1186 = sbr.rel (%p1184) target = $region180
        $region179: #{aen_glove_forward.1} parent=167 // pred_region
          %p1187 = scmp.lt.s32.totalorder %s95, 1
          %s1188 = scalar_select %p1187, %s95, 1
          %s1189 = scalar_lea.vmem %s5, %s1188
        $region180: #{aen_glove_forward.1} parent=167 // pred_fallthru
          _
      $region168: #{aen_glove_forward.1} parent=5 // pred_fallthru
        _
      %p1190 = scmp.le.s32.totalorder 1, %s95
      %p1191 = scmp.lt.s32.totalorder %s95, 3
      %p1192 = pnand %p1190, %p1191
      %p1193 = pneg %p1192
      // Predicated region
      $region181: #{aen_glove_forward.1} parent=5 // pred_check
        _
      $region182: #{aen_glove_forward.1} parent=5 // pred_check_branch
        %1195 = sbr.rel (%p1192) target = $region184
      $region183: #{aen_glove_forward.1} parent=5 // pred_region
        %s1196 = ssub.s32 %s95, 1
        // Predicated region
        $region185: #{aen_glove_forward.1} parent=183 // pred_check
          %p1197 = pneg %p215
        $region186: #{aen_glove_forward.1} parent=183 // pred_check_branch
          %1199 = sbr.rel (%p1197) target = $region188
        $region187: #{aen_glove_forward.1} parent=183 // pred_region
          %1200 = dma.done [#allocation3], 16
        $region188: #{aen_glove_forward.1} parent=183 // pred_fallthru
          _
        // Predicated region
        $region189: #{aen_glove_forward.1} parent=183 // pred_check
          %p1201 = pneg %p257
        $region190: #{aen_glove_forward.1} parent=183 // pred_check_branch
          %1203 = sbr.rel (%p1201) target = $region192
        $region191: #{aen_glove_forward.1} parent=183 // pred_region
          %1204 = dma.done [#allocation6], 16
        $region192: #{aen_glove_forward.1} parent=183 // pred_fallthru
          _
        // Predicated region
        $region193: #{aen_glove_forward.1} parent=183 // pred_check
          %p1205 = pneg %p320
        $region194: #{aen_glove_forward.1} parent=183 // pred_check_branch
          %1207 = sbr.rel (%p1205) target = $region196
        $region195: #{aen_glove_forward.1} parent=183 // pred_region
          %1208 = dma.done [#allocation6], 16
        $region196: #{aen_glove_forward.1} parent=183 // pred_fallthru
          _
        // Predicated region
        $region197: #{aen_glove_forward.1} parent=183 // pred_check
          %p1209 = pneg %p362
        $region198: #{aen_glove_forward.1} parent=183 // pred_check_branch
          %1211 = sbr.rel (%p1209) target = $region200
        $region199: #{aen_glove_forward.1} parent=183 // pred_region
          %1212 = dma.done [#allocation9], 16
        $region200: #{aen_glove_forward.1} parent=183 // pred_fallthru
          _
        // Predicated region
        $region201: #{aen_glove_forward.1} parent=183 // pred_check
          %p1213 = pneg %p467
        $region202: #{aen_glove_forward.1} parent=183 // pred_check_branch
          %1215 = sbr.rel (%p1213) target = $region204
        $region203: #{aen_glove_forward.1} parent=183 // pred_region
          %1216 = dma.done [#allocation9], 16
        $region204: #{aen_glove_forward.1} parent=183 // pred_fallthru
          _
        %p1217 = scmp.lt.s32.totalorder %s100, 1
        %s1218 = scalar_select %p1217, %s100, 1
        %s1219 = smul.addr %s1218, 8
        %s1220 = scalar_lea.vmem %s1, %s1219
        %p1221 = pneg %p121
        %p1222 = pneg %p118
        %p1223 = scmp.lt.s32.totalorder %s100, 1
        %s1224 = scalar_select %p1223, %s100, 1
        %s1225 = smul.addr %s1224, 4
        %s1226 = scalar_lea.vmem %s3, %s1225
        %p1227 = pneg %p147
        %p1228 = pneg %p144
        %p1229 = scmp.lt.s32.totalorder %s100, 1
        %s1230 = scalar_select %p1229, %s100, 1
        %s1231 = scalar_lea.vmem %s5, %s1230
        %p1232 = pneg %p173
        %p1233 = pneg %p170
        %p1234 = pneg %p194
        %p1235 = pneg %p191
        %p1236 = pneg %p215
        %p1237 = pneg %p212
        %p1238 = pneg %p236
        %p1239 = pneg %p233
        %p1240 = pneg %p257
        %p1241 = pneg %p254
        %p1242 = pneg %p278
        %p1243 = pneg %p275
        %p1244 = pneg %p299
        %p1245 = pneg %p296
        %p1246 = pneg %p320
        %p1247 = pneg %p317
        %p1248 = pneg %p341
        %p1249 = pneg %p338
        %p1250 = pneg %p362
        %p1251 = pneg %p359
        %p1252 = pneg %p383
        %p1253 = pneg %p380
        %p1254 = pneg %p404
        %p1255 = pneg %p401
        %p1256 = pneg %p425
        %p1257 = pneg %p422
        %p1258 = pneg %p446
        %p1259 = pneg %p443
        %p1260 = pneg %p467
        %p1261 = pneg %p464
        %p1262 = pneg %p488
        %p1263 = pneg %p485
        %p1264 = pneg %p509
        %p1265 = pneg %p506
        %p1266 = pneg %p530
        %p1267 = pneg %p527
        %p1268 = pneg %p551
        %p1269 = pneg %p548
        %p1270 = pneg %p572
        %p1271 = pneg %p569
        %p1272 = pneg %p593
        %p1273 = pneg %p590
        %p1274 = pneg %p614
        %p1275 = pneg %p611
        %p1276 = pneg %p635
        %p1277 = pneg %p632
        %p1278 = pneg %p656
        %p1279 = pneg %p653
        %p1280 = pneg %p677
        %p1281 = pneg %p674
        %p1282 = pneg %p698
        %p1283 = pneg %p695
        %p1284 = pneg %p719
        %p1285 = pneg %p716
        %p1286 = pneg %p740
        %p1287 = pneg %p737
        %p1288 = pneg %p761
        %p1289 = pneg %p758
        %p1290 = pneg %p782
        %p1291 = pneg %p779
        %p1292 = pneg %p803
        %p1293 = pneg %p800
        %p1294 = pneg %p824
        %p1295 = pneg %p821
        %p1296 = pneg %p845
        %p1297 = pneg %p842
        %p1298 = pneg %p866
        %p1299 = pneg %p863
        %p1300 = pneg %p887
        %p1301 = pneg %p884
        %p1302 = pneg %p908
        %p1303 = pneg %p905
        %p1304 = pneg %p929
        %p1305 = pneg %p926
        %p1306 = pneg %p950
        %p1307 = pneg %p947
        %p1308 = pneg %p971
        %p1309 = pneg %p968
        %p1310 = pneg %p997
        %p1311 = pneg %p994
        %s1312 = sand.u32 %s984, 1
        %s1313 = scalar_lea.sflag [#allocation4], %s1312
        %s1314 = sand.u32 %s984, 1
        %s1315 = scalar_lea.vmem [#allocation11], %s1314
        %p1316 = scmp.lt.s32.totalorder %s100, 1
        %s1317 = scalar_select %p1316, %s100, 1
        %s1318 = smul.addr %s1317, 8
        %s1319 = scalar_lea.vmem %s1, %s1318
        %p1320 = scmp.lt.s32.totalorder %s100, 1
        %s1321 = scalar_select %p1320, %s100, 1
        %s1322 = smul.addr %s1321, 4
        %s1323 = scalar_lea.vmem %s3, %s1322
        %p1324 = scmp.lt.s32.totalorder %s100, 1
        %s1325 = scalar_select %p1324, %s100, 1
        %s1326 = scalar_lea.vmem %s5, %s1325
        %v1327 = vld [vmem:[%s1319] sm:$0xff]
        %v1328 = vld [vmem:[%s1323] sm:$0xf]
        %v1329 = vld [vmem:[%s49] sm:$0xff]
        %v1330 = vld [vmem:[%s51] sm:$0xff]
        %v1331 = vld [vmem:[%s53] sm:$0xff]
        %v1332 = vld [vmem:[%s53 + $0x8] sm:$0xff]
        %v1333 = vld [vmem:[%s53 + $0x10] sm:$0xff]
        %v1334 = vld [vmem:[%s53 + $0x18] sm:$0xff]
        %v1335 = vld [vmem:[%s53 + $0x20] sm:$0xff]
        %v1336 = vld [vmem:[%s53 + $0x28] sm:$0xff]
        %v1337 = vld [vmem:[%s53 + $0x30] sm:$0xff]
        %v1338 = vld [vmem:[%s53 + $0x38] sm:$0xff]
        %v1339 = vld [vmem:[%s55] sm:$0xff]
        %v1340 = vld [vmem:[%s55 + $0x8] sm:$0xff]
        %v1341 = vld [vmem:[%s55 + $0x10] sm:$0xff]
        %v1342 = vld [vmem:[%s55 + $0x18] sm:$0xff]
        %v1343 = vld [vmem:[%s55 + $0x20] sm:$0xff]
        %v1344 = vld [vmem:[%s55 + $0x28] sm:$0xff]
        %v1345 = vld [vmem:[%s55 + $0x30] sm:$0xff]
        %v1346 = vld [vmem:[%s55 + $0x38] sm:$0xff]
        %v1347 = vld [vmem:[%s57] sm:$0xff]
        %v1348 = vld [vmem:[%s57 + $0x8] sm:$0xff]
        %v1349 = vld [vmem:[%s57 + $0x10] sm:$0xff]
        %v1350 = vld [vmem:[%s57 + $0x18] sm:$0xff]
        %v1351 = vld [vmem:[%s57 + $0x20] sm:$0xff]
        %v1352 = vld [vmem:[%s57 + $0x28] sm:$0xff]
        %v1353 = vld [vmem:[%s57 + $0x30] sm:$0xff]
        %v1354 = vld [vmem:[%s57 + $0x38] sm:$0xff]
        %v1355 = vld [vmem:[%s7] sm:$0xff]
        %v1356 = vld [vmem:[%s7 + $0x8] sm:$0xff]
        %v1357 = vld [vmem:[%s7 + $0x10] sm:$0xff]
        %v1358 = vld [vmem:[%s7 + $0x18] sm:$0xff]
        %v1359 = vld [vmem:[#allocation2] sm:$0x1]
        %v1360 = vld [vmem:[%s11] sm:$0xff]
        %v1361 = vld [vmem:[%s11 + $0x8] sm:$0xff]
        %v1362 = vld [vmem:[%s11 + $0x10] sm:$0xff]
        %v1363 = vld [vmem:[%s11 + $0x18] sm:$0xff]
        %v1364 = vld [vmem:[#allocation5] sm:$0x1]
        %v1365 = vld [vmem:[%s15] sm:$0xff]
        %v1366 = vld [vmem:[%s15 + $0x8] sm:$0xff]
        %v1367 = vld [vmem:[%s15 + $0x10] sm:$0xff]
        %v1368 = vld [vmem:[%s15 + $0x18] sm:$0xff]
        %v1369 = vld [vmem:[%s17] sm:$0xff]
        %v1370 = vld [vmem:[%s17 + $0x8] sm:$0xff]
        %v1371 = vld [vmem:[%s17 + $0x10] sm:$0xff]
        %v1372 = vld [vmem:[%s17 + $0x18] sm:$0xff]
        %v1373 = vld [vmem:[#allocation7] sm:$0x1]
        %v1375 = vlaneseq
        %v1376 = vshrl.u32 %v1375, 7
        %v1377 = vsub.s32 0, %v1376
        %v1378 = vrot.slane %v1359, %v1377
        %vm1380 = vcmask 261120
        %v1382 = vsel %vm1380, %v1327, 0
        %1384 = vmatprep.subr.mxu0 0.0
        %1385 = vmatpush1.msra.mxu0 %v1355
        %1386 = vmatprep.subr.mxu0 0.0
        %1387 = vmatpush1.msra.mxu0 %v1356
        %1388 = vmatprep.subr.mxu0 0.0
        %1389 = vmatpush1.msra.mxu0 %v1357
        %1390 = vmatprep.subr.mxu0 0.0
        %1391 = vmatpush1.msra.mxu0 %v1358
        %1392 = vmatprep.subr.mxu0 0.0
        %1393 = vmatpush1.msra.mxu0 0.0
        %1394 = vmatprep.subr.mxu0 0.0
        %1395 = vmatpush1.msra.mxu0 0.0
        %1396 = vmatprep.subr.mxu0 0.0
        %1397 = vmatpush1.msra.mxu0 0.0
        %1398 = vmatprep.subr.mxu0 0.0
        %1399 = vmatpush1.msra.mxu0 0.0
        %1400 = vmatprep.subr.mxu0 0.0
        %1401 = vmatpush1.msra.mxu0 0.0
        %1402 = vmatprep.subr.mxu0 0.0
        %1403 = vmatpush1.msra.mxu0 0.0
        %1404 = vmatprep.subr.mxu0 0.0
        %1405 = vmatpush1.msra.mxu0 0.0
        %1406 = vmatprep.subr.mxu0 0.0
        %1407 = vmatpush1.msra.mxu0 0.0
        %1408 = vmatprep.subr.mxu0 0.0
        %1409 = vmatpush1.msra.mxu0 0.0
        %1410 = vmatprep.subr.mxu0 0.0
        %1411 = vmatpush1.msra.mxu0 0.0
        %1412 = vmatprep.subr.mxu0 0.0
        %1413 = vmatpush1.msra.mxu0 0.0
        %1414 = vmatprep.subr.mxu0 0.0
        %1415 = vmatpush1.msra.mxu0 0.0
        %1416 = vmatprep.subr.mxu0 0.0
        %1417 = vmatpush1.msra.mxu0 0.0
        %1418 = vmatprep.subr.mxu0 0.0
        %1419 = vmatpush1.msra.mxu0 0.0
        %1420 = vmatprep.subr.mxu0 0.0
        %1421 = vmatpush1.msra.mxu0 0.0
        %1422 = vmatprep.subr.mxu0 0.0
        %1423 = vmatpush1.msra.mxu0 0.0
        %1424 = vmatprep.subr.mxu0 0.0
        %1425 = vmatpush1.msra.mxu0 0.0
        %1426 = vmatprep.subr.mxu0 0.0
        %1427 = vmatpush1.msra.mxu0 0.0
        %1428 = vmatprep.subr.mxu0 0.0
        %1429 = vmatpush1.msra.mxu0 0.0
        %1430 = vmatprep.subr.mxu0 0.0
        %1431 = vmatpush1.msra.mxu0 0.0
        %1432 = vmatprep.subr.mxu0 0.0
        %1433 = vmatpush1.msra.mxu0 0.0
        %1434 = vmatprep.subr.mxu0 0.0
        %1435 = vmatpush1.msra.mxu0 0.0
        %1436 = vmatprep.subr.mxu0 0.0
        %1437 = vmatpush1.msra.mxu0 0.0
        %1438 = vmatprep.subr.mxu0 0.0
        %1439 = vmatpush1.msra.mxu0 0.0
        %1440 = vmatprep.subr.mxu0 0.0
        %1441 = vmatpush1.msra.mxu0 0.0
        %1442 = vmatprep.subr.mxu0 0.0
        %1443 = vmatpush1.msra.mxu0 0.0
        %1444 = vmatprep.subr.mxu0 0.0
        %1445 = vmatpush1.msra.mxu0 0.0
        %1446 = vmatprep.subr.mxu0 0.0
        %1447 = vmatpush1.msra.mxu0 0.0
        %1448 = vmatprep.mubr.f32.mxu0 0.0
        %1449 = vmatmul.mubr.f32.gmra.mrb[0].mxu0 %v1382
        %v1450 = vpop.f32.mrb[0].mxu0
        %v1451 = vadd.f32 %v1378, %v1450
        %v1452 = vpop.f32.mrb[0].mxu0
        %1453 = vdwg.mxu0
        %v1455 = vsel %vm1380, %v1451, 0
        %1457 = vmatprep.subr.mxu0 0.0
        %1458 = vmatpush1.msra.mxu0 %v1365
        %1459 = vmatprep.subr.mxu0 0.0
        %1460 = vmatpush1.msra.mxu0 %v1366
        %1461 = vmatprep.subr.mxu0 0.0
        %1462 = vmatpush1.msra.mxu0 %v1367
        %1463 = vmatprep.subr.mxu0 0.0
        %1464 = vmatpush1.msra.mxu0 %v1368
        %1465 = vmatprep.subr.mxu0 0.0
        %1466 = vmatpush1.msra.mxu0 0.0
        %1467 = vmatprep.subr.mxu0 0.0
        %1468 = vmatpush1.msra.mxu0 0.0
        %1469 = vmatprep.subr.mxu0 0.0
        %1470 = vmatpush1.msra.mxu0 0.0
        %1471 = vmatprep.subr.mxu0 0.0
        %1472 = vmatpush1.msra.mxu0 0.0
        %1473 = vmatprep.subr.mxu0 0.0
        %1474 = vmatpush1.msra.mxu0 0.0
        %1475 = vmatprep.subr.mxu0 0.0
        %1476 = vmatpush1.msra.mxu0 0.0
        %1477 = vmatprep.subr.mxu0 0.0
        %1478 = vmatpush1.msra.mxu0 0.0
        %1479 = vmatprep.subr.mxu0 0.0
        %1480 = vmatpush1.msra.mxu0 0.0
        %1481 = vmatprep.subr.mxu0 0.0
        %1482 = vmatpush1.msra.mxu0 0.0
        %1483 = vmatprep.subr.mxu0 0.0
        %1484 = vmatpush1.msra.mxu0 0.0
        %1485 = vmatprep.subr.mxu0 0.0
        %1486 = vmatpush1.msra.mxu0 0.0
        %1487 = vmatprep.subr.mxu0 0.0
        %1488 = vmatpush1.msra.mxu0 0.0
        %1489 = vmatprep.subr.mxu0 0.0
        %1490 = vmatpush1.msra.mxu0 0.0
        %1491 = vmatprep.subr.mxu0 0.0
        %1492 = vmatpush1.msra.mxu0 0.0
        %1493 = vmatprep.subr.mxu0 0.0
        %1494 = vmatpush1.msra.mxu0 0.0
        %1495 = vmatprep.subr.mxu0 0.0
        %1496 = vmatpush1.msra.mxu0 0.0
        %1497 = vmatprep.subr.mxu0 0.0
        %1498 = vmatpush1.msra.mxu0 0.0
        %1499 = vmatprep.subr.mxu0 0.0
        %1500 = vmatpush1.msra.mxu0 0.0
        %1501 = vmatprep.subr.mxu0 0.0
        %1502 = vmatpush1.msra.mxu0 0.0
        %1503 = vmatprep.subr.mxu0 0.0
        %1504 = vmatpush1.msra.mxu0 0.0
        %1505 = vmatprep.subr.mxu0 0.0
        %1506 = vmatpush1.msra.mxu0 0.0
        %1507 = vmatprep.subr.mxu0 0.0
        %1508 = vmatpush1.msra.mxu0 0.0
        %1509 = vmatprep.subr.mxu0 0.0
        %1510 = vmatpush1.msra.mxu0 0.0
        %1511 = vmatprep.subr.mxu0 0.0
        %1512 = vmatpush1.msra.mxu0 0.0
        %1513 = vmatprep.subr.mxu0 0.0
        %1514 = vmatpush1.msra.mxu0 0.0
        %1515 = vmatprep.subr.mxu0 0.0
        %1516 = vmatpush1.msra.mxu0 0.0
        %1517 = vmatprep.subr.mxu0 0.0
        %1518 = vmatpush1.msra.mxu0 0.0
        %1519 = vmatprep.subr.mxu0 0.0
        %1520 = vmatpush1.msra.mxu0 0.0
        %1521 = vmatprep.mubr.f32.mxu0 0.0
        %1522 = vmatmul.mubr.f32.gmra.mrb[0].mxu0 %v1455
        %v1523 = vpop.f32.mrb[0].mxu0
        %v1524 = vadd.f32 0.0, %v1523
        %v1525 = vpop.f32.mrb[0].mxu0
        %1526 = vdwg.mxu0
        %v1527 = vmul.f32 %v1524, %v1329
        %vm1528 = vcmask 523264
        %v1529 = vsel %vm1528, %v1527, 0.0
        %v1530 = vrot.slane %v1529, 4
        %v1531 = vadd.f32 %v1529, %v1530
        %v1532 = vrot.slane %v1531, 2
        %v1533 = vadd.f32 %v1531, %v1532
        %v1534 = vrot.slane %v1533, 1
        %v1535 = vadd.f32 %v1533, %v1534
        %v1537 = vlaneseq
        %v1538 = vshrl.u32 %v1537, 7
        %v1539 = vsub.s32 0, %v1538
        %v1540 = vrot.slane %v1364, %v1539
        %1542 = vmatprep.subr.mxu0 0.0
        %1543 = vmatpush1.msra.mxu0 %v1360
        %1544 = vmatprep.subr.mxu0 0.0
        %1545 = vmatpush1.msra.mxu0 %v1361
        %1546 = vmatprep.subr.mxu0 0.0
        %1547 = vmatpush1.msra.mxu0 %v1362
        %1548 = vmatprep.subr.mxu0 0.0
        %1549 = vmatpush1.msra.mxu0 %v1363
        %1550 = vmatprep.subr.mxu0 0.0
        %1551 = vmatpush1.msra.mxu0 0.0
        %1552 = vmatprep.subr.mxu0 0.0
        %1553 = vmatpush1.msra.mxu0 0.0
        %1554 = vmatprep.subr.mxu0 0.0
        %1555 = vmatpush1.msra.mxu0 0.0
        %1556 = vmatprep.subr.mxu0 0.0
        %1557 = vmatpush1.msra.mxu0 0.0
        %1558 = vmatprep.subr.mxu0 0.0
        %1559 = vmatpush1.msra.mxu0 0.0
        %1560 = vmatprep.subr.mxu0 0.0
        %1561 = vmatpush1.msra.mxu0 0.0
        %1562 = vmatprep.subr.mxu0 0.0
        %1563 = vmatpush1.msra.mxu0 0.0
        %1564 = vmatprep.subr.mxu0 0.0
        %1565 = vmatpush1.msra.mxu0 0.0
        %1566 = vmatprep.subr.mxu0 0.0
        %1567 = vmatpush1.msra.mxu0 0.0
        %1568 = vmatprep.subr.mxu0 0.0
        %1569 = vmatpush1.msra.mxu0 0.0
        %1570 = vmatprep.subr.mxu0 0.0
        %1571 = vmatpush1.msra.mxu0 0.0
        %1572 = vmatprep.subr.mxu0 0.0
        %1573 = vmatpush1.msra.mxu0 0.0
        %1574 = vmatprep.subr.mxu0 0.0
        %1575 = vmatpush1.msra.mxu0 0.0
        %1576 = vmatprep.subr.mxu0 0.0
        %1577 = vmatpush1.msra.mxu0 0.0
        %1578 = vmatprep.subr.mxu0 0.0
        %1579 = vmatpush1.msra.mxu0 0.0
        %1580 = vmatprep.subr.mxu0 0.0
        %1581 = vmatpush1.msra.mxu0 0.0
        %1582 = vmatprep.subr.mxu0 0.0
        %1583 = vmatpush1.msra.mxu0 0.0
        %1584 = vmatprep.subr.mxu0 0.0
        %1585 = vmatpush1.msra.mxu0 0.0
        %1586 = vmatprep.subr.mxu0 0.0
        %1587 = vmatpush1.msra.mxu0 0.0
        %1588 = vmatprep.subr.mxu0 0.0
        %1589 = vmatpush1.msra.mxu0 0.0
        %1590 = vmatprep.subr.mxu0 0.0
        %1591 = vmatpush1.msra.mxu0 0.0
        %1592 = vmatprep.subr.mxu0 0.0
        %1593 = vmatpush1.msra.mxu0 0.0
        %1594 = vmatprep.subr.mxu0 0.0
        %1595 = vmatpush1.msra.mxu0 0.0
        %1596 = vmatprep.subr.mxu0 0.0
        %1597 = vmatpush1.msra.mxu0 0.0
        %1598 = vmatprep.subr.mxu0 0.0
        %1599 = vmatpush1.msra.mxu0 0.0
        %1600 = vmatprep.subr.mxu0 0.0
        %1601 = vmatpush1.msra.mxu0 0.0
        %1602 = vmatprep.subr.mxu0 0.0
        %1603 = vmatpush1.msra.mxu0 0.0
        %1604 = vmatprep.subr.mxu0 0.0
        %1605 = vmatpush1.msra.mxu0 0.0
        %1606 = vmatprep.mubr.f32.mxu0 0.0
        %1607 = vmatmul.mubr.f32.gmra.mrb[0].mxu0 %v1382
        %v1608 = vpop.f32.mrb[0].mxu0
        %v1609 = vadd.f32 %v1540, %v1608
        %v1610 = vpop.f32.mrb[0].mxu0
        %1611 = vdwg.mxu0
        %v1612 = vadd.f32 %v1609, %v1535
        %v1613 = vtanh.pop %v1612
        %v1614 = vmul.f32 %v1613, 1.442695
        %v1615 = vpow.pop %v1614
        %v1617 = vsel %vm1528, %v1615, 0
        %1619 = vmatprep.subr.mxu0 0.0
        %1620 = vmatpush1.msra.mxu0 %v1331
        %1621 = vmatprep.subr.mxu0 0.0
        %1622 = vmatpush1.msra.mxu0 %v1332
        %1623 = vmatprep.subr.mxu0 0.0
        %1624 = vmatpush1.msra.mxu0 %v1333
        %1625 = vmatprep.subr.mxu0 0.0
        %1626 = vmatpush1.msra.mxu0 %v1334
        %1627 = vmatprep.subr.mxu0 0.0
        %1628 = vmatpush1.msra.mxu0 %v1335
        %1629 = vmatprep.subr.mxu0 0.0
        %1630 = vmatpush1.msra.mxu0 %v1336
        %1631 = vmatprep.subr.mxu0 0.0
        %1632 = vmatpush1.msra.mxu0 %v1337
        %1633 = vmatprep.subr.mxu0 0.0
        %1634 = vmatpush1.msra.mxu0 %v1338
        %1635 = vmatprep.subr.mxu0 0.0
        %1636 = vmatpush1.msra.mxu0 0.0
        %1637 = vmatprep.subr.mxu0 0.0
        %1638 = vmatpush1.msra.mxu0 0.0
        %1639 = vmatprep.subr.mxu0 0.0
        %1640 = vmatpush1.msra.mxu0 0.0
        %1641 = vmatprep.subr.mxu0 0.0
        %1642 = vmatpush1.msra.mxu0 0.0
        %1643 = vmatprep.subr.mxu0 0.0
        %1644 = vmatpush1.msra.mxu0 0.0
        %1645 = vmatprep.subr.mxu0 0.0
        %1646 = vmatpush1.msra.mxu0 0.0
        %1647 = vmatprep.subr.mxu0 0.0
        %1648 = vmatpush1.msra.mxu0 0.0
        %1649 = vmatprep.subr.mxu0 0.0
        %1650 = vmatpush1.msra.mxu0 0.0
        %1651 = vmatprep.subr.mxu0 0.0
        %1652 = vmatpush1.msra.mxu0 0.0
        %1653 = vmatprep.subr.mxu0 0.0
        %1654 = vmatpush1.msra.mxu0 0.0
        %1655 = vmatprep.subr.mxu0 0.0
        %1656 = vmatpush1.msra.mxu0 0.0
        %1657 = vmatprep.subr.mxu0 0.0
        %1658 = vmatpush1.msra.mxu0 0.0
        %1659 = vmatprep.subr.mxu0 0.0
        %1660 = vmatpush1.msra.mxu0 0.0
        %1661 = vmatprep.subr.mxu0 0.0
        %1662 = vmatpush1.msra.mxu0 0.0
        %1663 = vmatprep.subr.mxu0 0.0
        %1664 = vmatpush1.msra.mxu0 0.0
        %1665 = vmatprep.subr.mxu0 0.0
        %1666 = vmatpush1.msra.mxu0 0.0
        %1667 = vmatprep.subr.mxu0 0.0
        %1668 = vmatpush1.msra.mxu0 0.0
        %1669 = vmatprep.subr.mxu0 0.0
        %1670 = vmatpush1.msra.mxu0 0.0
        %1671 = vmatprep.subr.mxu0 0.0
        %1672 = vmatpush1.msra.mxu0 0.0
        %1673 = vmatprep.subr.mxu0 0.0
        %1674 = vmatpush1.msra.mxu0 0.0
        %1675 = vmatprep.subr.mxu0 0.0
        %1676 = vmatpush1.msra.mxu0 0.0
        %1677 = vmatprep.subr.mxu0 0.0
        %1678 = vmatpush1.msra.mxu0 0.0
        %1679 = vmatprep.subr.mxu0 0.0
        %1680 = vmatpush1.msra.mxu0 0.0
        %1681 = vmatprep.subr.mxu0 0.0
        %1682 = vmatpush1.msra.mxu0 0.0
        %1683 = vmatprep.mubr.f32.mxu0 0.0
        %1684 = vmatmul.mubr.f32.gmra.mrb[0].mxu0 %v1617
        %v1685 = vpop.f32.mrb[0].mxu0
        %v1686 = vadd.f32 0.0, %v1685
        %v1687 = vpop.f32.mrb[0].mxu0
        %1688 = vdwg.mxu0
        %v1689 = vrcp.pop %v1686
        %v1690 = vmul.f32 1.0, %v1689
        %vm1691 = vcmask 64512
        %v1693 = vsel %vm1691, %v1690, 0
        %1695 = vmatprep.subr.mxu0 0.0
        %1696 = vmatpush1.msra.mxu0 %v1330
        %1697 = vmatprep.subr.mxu0 0.0
        %1698 = vmatpush1.msra.mxu0 0.0
        %1699 = vmatprep.subr.mxu0 0.0
        %1700 = vmatpush1.msra.mxu0 0.0
        %1701 = vmatprep.subr.mxu0 0.0
        %1702 = vmatpush1.msra.mxu0 0.0
        %1703 = vmatprep.subr.mxu0 0.0
        %1704 = vmatpush1.msra.mxu0 0.0
        %1705 = vmatprep.subr.mxu0 0.0
        %1706 = vmatpush1.msra.mxu0 0.0
        %1707 = vmatprep.subr.mxu0 0.0
        %1708 = vmatpush1.msra.mxu0 0.0
        %1709 = vmatprep.subr.mxu0 0.0
        %1710 = vmatpush1.msra.mxu0 0.0
        %1711 = vmatprep.subr.mxu0 0.0
        %1712 = vmatpush1.msra.mxu0 0.0
        %1713 = vmatprep.subr.mxu0 0.0
        %1714 = vmatpush1.msra.mxu0 0.0
        %1715 = vmatprep.subr.mxu0 0.0
        %1716 = vmatpush1.msra.mxu0 0.0
        %1717 = vmatprep.subr.mxu0 0.0
        %1718 = vmatpush1.msra.mxu0 0.0
        %1719 = vmatprep.subr.mxu0 0.0
        %1720 = vmatpush1.msra.mxu0 0.0
        %1721 = vmatprep.subr.mxu0 0.0
        %1722 = vmatpush1.msra.mxu0 0.0
        %1723 = vmatprep.subr.mxu0 0.0
        %1724 = vmatpush1.msra.mxu0 0.0
        %1725 = vmatprep.subr.mxu0 0.0
        %1726 = vmatpush1.msra.mxu0 0.0
        %1727 = vmatprep.subr.mxu0 0.0
        %1728 = vmatpush1.msra.mxu0 0.0
        %1729 = vmatprep.subr.mxu0 0.0
        %1730 = vmatpush1.msra.mxu0 0.0
        %1731 = vmatprep.subr.mxu0 0.0
        %1732 = vmatpush1.msra.mxu0 0.0
        %1733 = vmatprep.subr.mxu0 0.0
        %1734 = vmatpush1.msra.mxu0 0.0
        %1735 = vmatprep.subr.mxu0 0.0
        %1736 = vmatpush1.msra.mxu0 0.0
        %1737 = vmatprep.subr.mxu0 0.0
        %1738 = vmatpush1.msra.mxu0 0.0
        %1739 = vmatprep.subr.mxu0 0.0
        %1740 = vmatpush1.msra.mxu0 0.0
        %1741 = vmatprep.subr.mxu0 0.0
        %1742 = vmatpush1.msra.mxu0 0.0
        %1743 = vmatprep.subr.mxu0 0.0
        %1744 = vmatpush1.msra.mxu0 0.0
        %1745 = vmatprep.subr.mxu0 0.0
        %1746 = vmatpush1.msra.mxu0 0.0
        %1747 = vmatprep.subr.mxu0 0.0
        %1748 = vmatpush1.msra.mxu0 0.0
        %1749 = vmatprep.subr.mxu0 0.0
        %1750 = vmatpush1.msra.mxu0 0.0
        %1751 = vmatprep.subr.mxu0 0.0
        %1752 = vmatpush1.msra.mxu0 0.0
        %1753 = vmatprep.subr.mxu0 0.0
        %1754 = vmatpush1.msra.mxu0 0.0
        %1755 = vmatprep.subr.mxu0 0.0
        %1756 = vmatpush1.msra.mxu0 0.0
        %1757 = vmatprep.subr.mxu0 0.0
        %1758 = vmatpush1.msra.mxu0 0.0
        %1759 = vmatprep.mubr.f32.mxu0 0.0
        %1760 = vmatmul.mubr.f32.gmra.mrb[0].mxu0 %v1693
        %v1761 = vpop.f32.mrb[0].mxu0
        %v1762 = vadd.f32 0.0, %v1761
        %v1763 = vpop.f32.mrb[0].mxu0
        %1764 = vdwg.mxu0
        %v1765 = vmul.f32 %v1615, %v1762
        %v1767 = vsel %vm1691, %v1339, 0
        %v1770 = vsel %vm1691, %v1340, 0
        %v1773 = vsel %vm1691, %v1341, 0
        %v1776 = vsel %vm1691, %v1342, 0
        %v1779 = vsel %vm1691, %v1343, 0
        %v1782 = vsel %vm1691, %v1344, 0
        %v1785 = vsel %vm1691, %v1345, 0
        %v1788 = vsel %vm1691, %v1346, 0
        %1790 = vmatprep.subr.mxu0 0.0
        %1791 = vmatpush1.msra.mxu0 %v1451
        %1792 = vmatprep.subr.mxu0 0.0
        %1793 = vmatpush1.msra.mxu0 0.0
        %1794 = vmatprep.subr.mxu0 0.0
        %1795 = vmatpush1.msra.mxu0 0.0
        %1796 = vmatprep.subr.mxu0 0.0
        %1797 = vmatpush1.msra.mxu0 0.0
        %1798 = vmatprep.subr.mxu0 0.0
        %1799 = vmatpush1.msra.mxu0 0.0
        %1800 = vmatprep.subr.mxu0 0.0
        %1801 = vmatpush1.msra.mxu0 0.0
        %1802 = vmatprep.subr.mxu0 0.0
        %1803 = vmatpush1.msra.mxu0 0.0
        %1804 = vmatprep.subr.mxu0 0.0
        %1805 = vmatpush1.msra.mxu0 0.0
        %1806 = vmatprep.subr.mxu0 0.0
        %1807 = vmatpush1.msra.mxu0 0.0
        %1808 = vmatprep.subr.mxu0 0.0
        %1809 = vmatpush1.msra.mxu0 0.0
        %1810 = vmatprep.subr.mxu0 0.0
        %1811 = vmatpush1.msra.mxu0 0.0
        %1812 = vmatprep.subr.mxu0 0.0
        %1813 = vmatpush1.msra.mxu0 0.0
        %1814 = vmatprep.subr.mxu0 0.0
        %1815 = vmatpush1.msra.mxu0 0.0
        %1816 = vmatprep.subr.mxu0 0.0
        %1817 = vmatpush1.msra.mxu0 0.0
        %1818 = vmatprep.subr.mxu0 0.0
        %1819 = vmatpush1.msra.mxu0 0.0
        %1820 = vmatprep.subr.mxu0 0.0
        %1821 = vmatpush1.msra.mxu0 0.0
        %1822 = vmatprep.subr.mxu0 0.0
        %1823 = vmatpush1.msra.mxu0 0.0
        %1824 = vmatprep.subr.mxu0 0.0
        %1825 = vmatpush1.msra.mxu0 0.0
        %1826 = vmatprep.subr.mxu0 0.0
        %1827 = vmatpush1.msra.mxu0 0.0
        %1828 = vmatprep.subr.mxu0 0.0
        %1829 = vmatpush1.msra.mxu0 0.0
        %1830 = vmatprep.subr.mxu0 0.0
        %1831 = vmatpush1.msra.mxu0 0.0
        %1832 = vmatprep.subr.mxu0 0.0
        %1833 = vmatpush1.msra.mxu0 0.0
        %1834 = vmatprep.subr.mxu0 0.0
        %1835 = vmatpush1.msra.mxu0 0.0
        %1836 = vmatprep.subr.mxu0 0.0
        %1837 = vmatpush1.msra.mxu0 0.0
        %1838 = vmatprep.subr.mxu0 0.0
        %1839 = vmatpush1.msra.mxu0 0.0
        %1840 = vmatprep.subr.mxu0 0.0
        %1841 = vmatpush1.msra.mxu0 0.0
        %1842 = vmatprep.subr.mxu0 0.0
        %1843 = vmatpush1.msra.mxu0 0.0
        %1844 = vmatprep.subr.mxu0 0.0
        %1845 = vmatpush1.msra.mxu0 0.0
        %1846 = vmatprep.subr.mxu0 0.0
        %1847 = vmatpush1.msra.mxu0 0.0
        %1848 = vmatprep.subr.mxu0 0.0
        %1849 = vmatpush1.msra.mxu0 0.0
        %1850 = vmatprep.subr.mxu0 0.0
        %1851 = vmatpush1.msra.mxu0 0.0
        %1852 = vmatprep.subr.mxu0 0.0
        %1853 = vmatpush1.msra.mxu0 0.0
        %1854 = vmatprep.mubr.f32.mxu0 0.0
        %1855 = vmatmul.mubr.f32.gmra.mrb[0].mxu0 %v1767
        %v1856 = vpop.f32.mrb[0].mxu0
        %v1857 = vadd.f32 0.0, %v1856
        %v1858 = vpop.f32.mrb[0].mxu0
        %1859 = vmatprep.mubr.f32.mxu0 0.0
        %1860 = vmatmul.mubr.f32.gmra.mrb[0].mxu0 %v1770
        %v1861 = vpop.f32.mrb[0].mxu0
        %v1862 = vadd.f32 0.0, %v1861
        %v1863 = vpop.f32.mrb[0].mxu0
        %1864 = vmatprep.mubr.f32.mxu0 0.0
        %1865 = vmatmul.mubr.f32.gmra.mrb[0].mxu0 %v1773
        %v1866 = vpop.f32.mrb[0].mxu0
        %v1867 = vadd.f32 0.0, %v1866
        %v1868 = vpop.f32.mrb[0].mxu0
        %1869 = vmatprep.mubr.f32.mxu0 0.0
        %1870 = vmatmul.mubr.f32.gmra.mrb[0].mxu0 %v1776
        %v1871 = vpop.f32.mrb[0].mxu0
        %v1872 = vadd.f32 0.0, %v1871
        %v1873 = vpop.f32.mrb[0].mxu0
        %1874 = vmatprep.mubr.f32.mxu0 0.0
        %1875 = vmatmul.mubr.f32.gmra.mrb[0].mxu0 %v1779
        %v1876 = vpop.f32.mrb[0].mxu0
        %v1877 = vadd.f32 0.0, %v1876
        %v1878 = vpop.f32.mrb[0].mxu0
        %1879 = vmatprep.mubr.f32.mxu0 0.0
        %1880 = vmatmul.mubr.f32.gmra.mrb[0].mxu0 %v1782
        %v1881 = vpop.f32.mrb[0].mxu0
        %v1882 = vadd.f32 0.0, %v1881
        %v1883 = vpop.f32.mrb[0].mxu0
        %1884 = vmatprep.mubr.f32.mxu0 0.0
        %1885 = vmatmul.mubr.f32.gmra.mrb[0].mxu0 %v1785
        %v1886 = vpop.f32.mrb[0].mxu0
        %v1887 = vadd.f32 0.0, %v1886
        %v1888 = vpop.f32.mrb[0].mxu0
        %1889 = vmatprep.mubr.f32.mxu0 0.0
        %1890 = vmatmul.mubr.f32.gmra.mrb[0].mxu0 %v1788
        %v1891 = vpop.f32.mrb[0].mxu0
        %v1892 = vadd.f32 0.0, %v1891
        %v1893 = vpop.f32.mrb[0].mxu0
        %1894 = vdwg.mxu0
        %v1895 = vmul.f32 %v1857, %v1347
        %v1896 = vmul.f32 %v1862, %v1348
        %v1897 = vmul.f32 %v1867, %v1349
        %v1898 = vmul.f32 %v1872, %v1350
        %v1899 = vmul.f32 %v1877, %v1351
        %v1900 = vmul.f32 %v1882, %v1352
        %v1901 = vmul.f32 %v1887, %v1353
        %v1902 = vmul.f32 %v1892, %v1354
        %v1904 = vsel %vm1528, %v1765, 0
        %1906 = vmatprep.subr.mxu0 0.0
        %1907 = vmatpush1.msra.mxu0 %v1895
        %1908 = vmatprep.subr.mxu0 0.0
        %1909 = vmatpush1.msra.mxu0 %v1896
        %1910 = vmatprep.subr.mxu0 0.0
        %1911 = vmatpush1.msra.mxu0 %v1897
        %1912 = vmatprep.subr.mxu0 0.0
        %1913 = vmatpush1.msra.mxu0 %v1898
        %1914 = vmatprep.subr.mxu0 0.0
        %1915 = vmatpush1.msra.mxu0 %v1899
        %1916 = vmatprep.subr.mxu0 0.0
        %1917 = vmatpush1.msra.mxu0 %v1900
        %1918 = vmatprep.subr.mxu0 0.0
        %1919 = vmatpush1.msra.mxu0 %v1901
        %1920 = vmatprep.subr.mxu0 0.0
        %1921 = vmatpush1.msra.mxu0 %v1902
        %1922 = vmatprep.subr.mxu0 0.0
        %1923 = vmatpush1.msra.mxu0 0.0
        %1924 = vmatprep.subr.mxu0 0.0
        %1925 = vmatpush1.msra.mxu0 0.0
        %1926 = vmatprep.subr.mxu0 0.0
        %1927 = vmatpush1.msra.mxu0 0.0
        %1928 = vmatprep.subr.mxu0 0.0
        %1929 = vmatpush1.msra.mxu0 0.0
        %1930 = vmatprep.subr.mxu0 0.0
        %1931 = vmatpush1.msra.mxu0 0.0
        %1932 = vmatprep.subr.mxu0 0.0
        %1933 = vmatpush1.msra.mxu0 0.0
        %1934 = vmatprep.subr.mxu0 0.0
        %1935 = vmatpush1.msra.mxu0 0.0
        %1936 = vmatprep.subr.mxu0 0.0
        %1937 = vmatpush1.msra.mxu0 0.0
        %1938 = vmatprep.subr.mxu0 0.0
        %1939 = vmatpush1.msra.mxu0 0.0
        %1940 = vmatprep.subr.mxu0 0.0
        %1941 = vmatpush1.msra.mxu0 0.0
        %1942 = vmatprep.subr.mxu0 0.0
        %1943 = vmatpush1.msra.mxu0 0.0
        %1944 = vmatprep.subr.mxu0 0.0
        %1945 = vmatpush1.msra.mxu0 0.0
        %1946 = vmatprep.subr.mxu0 0.0
        %1947 = vmatpush1.msra.mxu0 0.0
        %1948 = vmatprep.subr.mxu0 0.0
        %1949 = vmatpush1.msra.mxu0 0.0
        %1950 = vmatprep.subr.mxu0 0.0
        %1951 = vmatpush1.msra.mxu0 0.0
        %1952 = vmatprep.subr.mxu0 0.0
        %1953 = vmatpush1.msra.mxu0 0.0
        %1954 = vmatprep.subr.mxu0 0.0
        %1955 = vmatpush1.msra.mxu0 0.0
        %1956 = vmatprep.subr.mxu0 0.0
        %1957 = vmatpush1.msra.mxu0 0.0
        %1958 = vmatprep.subr.mxu0 0.0
        %1959 = vmatpush1.msra.mxu0 0.0
        %1960 = vmatprep.subr.mxu0 0.0
        %1961 = vmatpush1.msra.mxu0 0.0
        %1962 = vmatprep.subr.mxu0 0.0
        %1963 = vmatpush1.msra.mxu0 0.0
        %1964 = vmatprep.subr.mxu0 0.0
        %1965 = vmatpush1.msra.mxu0 0.0
        %1966 = vmatprep.subr.mxu0 0.0
        %1967 = vmatpush1.msra.mxu0 0.0
        %1968 = vmatprep.subr.mxu0 0.0
        %1969 = vmatpush1.msra.mxu0 0.0
        %1970 = vmatprep.mubr.f32.mxu0 0.0
        %1971 = vmatmul.mubr.f32.gmra.mrb[0].mxu0 %v1904
        %v1972 = vpop.f32.mrb[0].mxu0
        %v1973 = vadd.f32 0.0, %v1972
        %v1974 = vpop.f32.mrb[0].mxu0
        %1975 = vdwg.mxu0
        %v1977 = vlaneseq
        %v1978 = vshrl.u32 %v1977, 7
        %v1979 = vsub.s32 0, %v1978
        %v1980 = vrot.slane %v1373, %v1979
        %v1983 = vsel %vm1380, %v1973, 0
        %1985 = vmatprep.subr.mxu0 0.0
        %1986 = vmatpush1.msra.mxu0 %v1369
        %1987 = vmatprep.subr.mxu0 0.0
        %1988 = vmatpush1.msra.mxu0 %v1370
        %1989 = vmatprep.subr.mxu0 0.0
        %1990 = vmatpush1.msra.mxu0 %v1371
        %1991 = vmatprep.subr.mxu0 0.0
        %1992 = vmatpush1.msra.mxu0 %v1372
        %1993 = vmatprep.subr.mxu0 0.0
        %1994 = vmatpush1.msra.mxu0 0.0
        %1995 = vmatprep.subr.mxu0 0.0
        %1996 = vmatpush1.msra.mxu0 0.0
        %1997 = vmatprep.subr.mxu0 0.0
        %1998 = vmatpush1.msra.mxu0 0.0
        %1999 = vmatprep.subr.mxu0 0.0
        %2000 = vmatpush1.msra.mxu0 0.0
        %2001 = vmatprep.subr.mxu0 0.0
        %2002 = vmatpush1.msra.mxu0 0.0
        %2003 = vmatprep.subr.mxu0 0.0
        %2004 = vmatpush1.msra.mxu0 0.0
        %2005 = vmatprep.subr.mxu0 0.0
        %2006 = vmatpush1.msra.mxu0 0.0
        %2007 = vmatprep.subr.mxu0 0.0
        %2008 = vmatpush1.msra.mxu0 0.0
        %2009 = vmatprep.subr.mxu0 0.0
        %2010 = vmatpush1.msra.mxu0 0.0
        %2011 = vmatprep.subr.mxu0 0.0
        %2012 = vmatpush1.msra.mxu0 0.0
        %2013 = vmatprep.subr.mxu0 0.0
        %2014 = vmatpush1.msra.mxu0 0.0
        %2015 = vmatprep.subr.mxu0 0.0
        %2016 = vmatpush1.msra.mxu0 0.0
        %2017 = vmatprep.subr.mxu0 0.0
        %2018 = vmatpush1.msra.mxu0 0.0
        %2019 = vmatprep.subr.mxu0 0.0
        %2020 = vmatpush1.msra.mxu0 0.0
        %2021 = vmatprep.subr.mxu0 0.0
        %2022 = vmatpush1.msra.mxu0 0.0
        %2023 = vmatprep.subr.mxu0 0.0
        %2024 = vmatpush1.msra.mxu0 0.0
        %2025 = vmatprep.subr.mxu0 0.0
        %2026 = vmatpush1.msra.mxu0 0.0
        %2027 = vmatprep.subr.mxu0 0.0
        %2028 = vmatpush1.msra.mxu0 0.0
        %2029 = vmatprep.subr.mxu0 0.0
        %2030 = vmatpush1.msra.mxu0 0.0
        %2031 = vmatprep.subr.mxu0 0.0
        %2032 = vmatpush1.msra.mxu0 0.0
        %2033 = vmatprep.subr.mxu0 0.0
        %2034 = vmatpush1.msra.mxu0 0.0
        %2035 = vmatprep.subr.mxu0 0.0
        %2036 = vmatpush1.msra.mxu0 0.0
        %2037 = vmatprep.subr.mxu0 0.0
        %2038 = vmatpush1.msra.mxu0 0.0
        %2039 = vmatprep.subr.mxu0 0.0
        %2040 = vmatpush1.msra.mxu0 0.0
        %2041 = vmatprep.subr.mxu0 0.0
        %2042 = vmatpush1.msra.mxu0 0.0
        %2043 = vmatprep.subr.mxu0 0.0
        %2044 = vmatpush1.msra.mxu0 0.0
        %2045 = vmatprep.subr.mxu0 0.0
        %2046 = vmatpush1.msra.mxu0 0.0
        %2047 = vmatprep.subr.mxu0 0.0
        %2048 = vmatpush1.msra.mxu0 0.0
        %2049 = vmatprep.mubr.f32.mxu0 0.0
        %2050 = vmatmul.mubr.f32.gmra.mrb[0].mxu0 %v1983
        %v2051 = vpop.f32.mrb[0].mxu0
        %v2052 = vadd.f32 %v1980, %v2051
        %v2053 = vpop.f32.mrb[0].mxu0
        %2054 = vdwg.mxu0
        %v2055 = vld [vmem:[%s59] sm:$0xff]
        %v2056 = vld [vmem:[%s59 + $0x8] sm:$0xff]
        %v2057 = vld [vmem:[%s59 + $0x10] sm:$0xff]
        %v2058 = vld [vmem:[%s59 + $0x18] sm:$0xff]
        %v2059 = vld [vmem:[%s61] sm:$0x1]
        %v2060 = vld [vmem:[%s63] sm:$0xff]
        %v2061 = vld [vmem:[%s63 + $0x8] sm:$0xff]
        %v2062 = vld [vmem:[%s63 + $0x10] sm:$0xff]
        %v2063 = vld [vmem:[%s63 + $0x18] sm:$0xff]
        %v2064 = vld [vmem:[%s65] sm:$0x1]
        %v2066 = vlaneseq
        %v2067 = vshrl.u32 %v2066, 7
        %v2068 = vsub.s32 0, %v2067
        %v2069 = vrot.slane %v2059, %v2068
        %v2072 = vsel %vm1380, %v2052, 0
        %2074 = vmatprep.subr.mxu0 0.0
        %2075 = vmatpush1.msra.mxu0 %v2055
        %2076 = vmatprep.subr.mxu0 0.0
        %2077 = vmatpush1.msra.mxu0 %v2056
        %2078 = vmatprep.subr.mxu0 0.0
        %2079 = vmatpush1.msra.mxu0 %v2057
        %2080 = vmatprep.subr.mxu0 0.0
        %2081 = vmatpush1.msra.mxu0 %v2058
        %2082 = vmatprep.subr.mxu0 0.0
        %2083 = vmatpush1.msra.mxu0 0.0
        %2084 = vmatprep.subr.mxu0 0.0
        %2085 = vmatpush1.msra.mxu0 0.0
        %2086 = vmatprep.subr.mxu0 0.0
        %2087 = vmatpush1.msra.mxu0 0.0
        %2088 = vmatprep.subr.mxu0 0.0
        %2089 = vmatpush1.msra.mxu0 0.0
        %2090 = vmatprep.subr.mxu0 0.0
        %2091 = vmatpush1.msra.mxu0 0.0
        %2092 = vmatprep.subr.mxu0 0.0
        %2093 = vmatpush1.msra.mxu0 0.0
        %2094 = vmatprep.subr.mxu0 0.0
        %2095 = vmatpush1.msra.mxu0 0.0
        %2096 = vmatprep.subr.mxu0 0.0
        %2097 = vmatpush1.msra.mxu0 0.0
        %2098 = vmatprep.subr.mxu0 0.0
        %2099 = vmatpush1.msra.mxu0 0.0
        %2100 = vmatprep.subr.mxu0 0.0
        %2101 = vmatpush1.msra.mxu0 0.0
        %2102 = vmatprep.subr.mxu0 0.0
        %2103 = vmatpush1.msra.mxu0 0.0
        %2104 = vmatprep.subr.mxu0 0.0
        %2105 = vmatpush1.msra.mxu0 0.0
        %2106 = vmatprep.subr.mxu0 0.0
        %2107 = vmatpush1.msra.mxu0 0.0
        %2108 = vmatprep.subr.mxu0 0.0
        %2109 = vmatpush1.msra.mxu0 0.0
        %2110 = vmatprep.subr.mxu0 0.0
        %2111 = vmatpush1.msra.mxu0 0.0
        %2112 = vmatprep.subr.mxu0 0.0
        %2113 = vmatpush1.msra.mxu0 0.0
        %2114 = vmatprep.subr.mxu0 0.0
        %2115 = vmatpush1.msra.mxu0 0.0
        %2116 = vmatprep.subr.mxu0 0.0
        %2117 = vmatpush1.msra.mxu0 0.0
        %2118 = vmatprep.subr.mxu0 0.0
        %2119 = vmatpush1.msra.mxu0 0.0
        %2120 = vmatprep.subr.mxu0 0.0
        %2121 = vmatpush1.msra.mxu0 0.0
        %2122 = vmatprep.subr.mxu0 0.0
        %2123 = vmatpush1.msra.mxu0 0.0
        %2124 = vmatprep.subr.mxu0 0.0
        %2125 = vmatpush1.msra.mxu0 0.0
        %2126 = vmatprep.subr.mxu0 0.0
        %2127 = vmatpush1.msra.mxu0 0.0
        %2128 = vmatprep.subr.mxu0 0.0
        %2129 = vmatpush1.msra.mxu0 0.0
        %2130 = vmatprep.subr.mxu0 0.0
        %2131 = vmatpush1.msra.mxu0 0.0
        %2132 = vmatprep.subr.mxu0 0.0
        %2133 = vmatpush1.msra.mxu0 0.0
        %2134 = vmatprep.subr.mxu0 0.0
        %2135 = vmatpush1.msra.mxu0 0.0
        %2136 = vmatprep.subr.mxu0 0.0
        %2137 = vmatpush1.msra.mxu0 0.0
        %2138 = vmatprep.mubr.f32.mxu0 0.0
        %2139 = vmatmul.mubr.f32.gmra.mrb[0].mxu0 %v2072
        %v2140 = vpop.f32.mrb[0].mxu0
        %v2141 = vadd.f32 %v2069, %v2140
        %v2142 = vpop.f32.mrb[0].mxu0
        %2143 = vdwg.mxu0
        %v2144 = vmax.f32 %v2141, 0.0
        %v2146 = vlaneseq
        %v2147 = vshrl.u32 %v2146, 7
        %v2148 = vsub.s32 0, %v2147
        %v2149 = vrot.slane %v2064, %v2148
        %v2152 = vsel %vm1380, %v2144, 0
        %2154 = vmatprep.subr.mxu0 0.0
        %2155 = vmatpush1.msra.mxu0 %v2060
        %2156 = vmatprep.subr.mxu0 0.0
        %2157 = vmatpush1.msra.mxu0 %v2061
        %2158 = vmatprep.subr.mxu0 0.0
        %2159 = vmatpush1.msra.mxu0 %v2062
        %2160 = vmatprep.subr.mxu0 0.0
        %2161 = vmatpush1.msra.mxu0 %v2063
        %2162 = vmatprep.subr.mxu0 0.0
        %2163 = vmatpush1.msra.mxu0 0.0
        %2164 = vmatprep.subr.mxu0 0.0
        %2165 = vmatpush1.msra.mxu0 0.0
        %2166 = vmatprep.subr.mxu0 0.0
        %2167 = vmatpush1.msra.mxu0 0.0
        %2168 = vmatprep.subr.mxu0 0.0
        %2169 = vmatpush1.msra.mxu0 0.0
        %2170 = vmatprep.subr.mxu0 0.0
        %2171 = vmatpush1.msra.mxu0 0.0
        %2172 = vmatprep.subr.mxu0 0.0
        %2173 = vmatpush1.msra.mxu0 0.0
        %2174 = vmatprep.subr.mxu0 0.0
        %2175 = vmatpush1.msra.mxu0 0.0
        %2176 = vmatprep.subr.mxu0 0.0
        %2177 = vmatpush1.msra.mxu0 0.0
        %2178 = vmatprep.subr.mxu0 0.0
        %2179 = vmatpush1.msra.mxu0 0.0
        %2180 = vmatprep.subr.mxu0 0.0
        %2181 = vmatpush1.msra.mxu0 0.0
        %2182 = vmatprep.subr.mxu0 0.0
        %2183 = vmatpush1.msra.mxu0 0.0
        %2184 = vmatprep.subr.mxu0 0.0
        %2185 = vmatpush1.msra.mxu0 0.0
        %2186 = vmatprep.subr.mxu0 0.0
        %2187 = vmatpush1.msra.mxu0 0.0
        %2188 = vmatprep.subr.mxu0 0.0
        %2189 = vmatpush1.msra.mxu0 0.0
        %2190 = vmatprep.subr.mxu0 0.0
        %2191 = vmatpush1.msra.mxu0 0.0
        %2192 = vmatprep.subr.mxu0 0.0
        %2193 = vmatpush1.msra.mxu0 0.0
        %2194 = vmatprep.subr.mxu0 0.0
        %2195 = vmatpush1.msra.mxu0 0.0
        %2196 = vmatprep.subr.mxu0 0.0
        %2197 = vmatpush1.msra.mxu0 0.0
        %2198 = vmatprep.subr.mxu0 0.0
        %2199 = vmatpush1.msra.mxu0 0.0
        %2200 = vmatprep.subr.mxu0 0.0
        %2201 = vmatpush1.msra.mxu0 0.0
        %2202 = vmatprep.subr.mxu0 0.0
        %2203 = vmatpush1.msra.mxu0 0.0
        %2204 = vmatprep.subr.mxu0 0.0
        %2205 = vmatpush1.msra.mxu0 0.0
        %2206 = vmatprep.subr.mxu0 0.0
        %2207 = vmatpush1.msra.mxu0 0.0
        %2208 = vmatprep.subr.mxu0 0.0
        %2209 = vmatpush1.msra.mxu0 0.0
        %2210 = vmatprep.subr.mxu0 0.0
        %2211 = vmatpush1.msra.mxu0 0.0
        %2212 = vmatprep.subr.mxu0 0.0
        %2213 = vmatpush1.msra.mxu0 0.0
        %2214 = vmatprep.subr.mxu0 0.0
        %2215 = vmatpush1.msra.mxu0 0.0
        %2216 = vmatprep.subr.mxu0 0.0
        %2217 = vmatpush1.msra.mxu0 0.0
        %2218 = vmatprep.mubr.f32.mxu0 0.0
        %2219 = vmatmul.mubr.f32.gmra.mrb[0].mxu0 %v2152
        %v2220 = vpop.f32.mrb[0].mxu0
        %v2221 = vadd.f32 %v2149, %v2220
        %v2222 = vpop.f32.mrb[0].mxu0
        %2223 = vdwg.mxu0
        %v2224 = vld [vmem:[%s21] sm:$0xff]
        %v2225 = vld [vmem:[%s21 + $0x8] sm:$0xff]
        %v2226 = vld [vmem:[%s21 + $0x10] sm:$0xff]
        %v2227 = vld [vmem:[%s21 + $0x18] sm:$0xff]
        %v2228 = vld [vmem:[#allocation8] sm:$0x1]
        %v2229 = vld [vmem:[%s25] sm:$0xff]
        %v2230 = vld [vmem:[%s25 + $0x8] sm:$0xff]
        %v2231 = vld [vmem:[%s25 + $0x10] sm:$0xff]
        %v2232 = vld [vmem:[%s25 + $0x18] sm:$0xff]
        %v2233 = vld [vmem:[%s27] sm:$0x1]
        %v2234 = vld [vmem:[%s29] sm:$0xff]
        %v2235 = vld [vmem:[%s29 + $0x8] sm:$0xff]
        %v2236 = vld [vmem:[%s29 + $0x10] sm:$0xff]
        %v2237 = vld [vmem:[%s29 + $0x18] sm:$0xff]
        %v2238 = vld [vmem:[%s31] sm:$0xff]
        %v2239 = vld [vmem:[%s31 + $0x8] sm:$0xff]
        %v2240 = vld [vmem:[%s31 + $0x10] sm:$0xff]
        %v2241 = vld [vmem:[%s31 + $0x18] sm:$0xff]
        %v2242 = vld [vmem:[#allocation10] sm:$0x1]
        %v2244 = vlaneseq
        %v2245 = vshrl.u32 %v2244, 7
        %v2246 = vsub.s32 0, %v2245
        %v2247 = vrot.slane %v2228, %v2246
        %2249 = vmatprep.subr.mxu0 0.0
        %2250 = vmatpush1.msra.mxu0 %v2224
        %2251 = vmatprep.subr.mxu0 0.0
        %2252 = vmatpush1.msra.mxu0 %v2225
        %2253 = vmatprep.subr.mxu0 0.0
        %2254 = vmatpush1.msra.mxu0 %v2226
        %2255 = vmatprep.subr.mxu0 0.0
        %2256 = vmatpush1.msra.mxu0 %v2227
        %2257 = vmatprep.subr.mxu0 0.0
        %2258 = vmatpush1.msra.mxu0 0.0
        %2259 = vmatprep.subr.mxu0 0.0
        %2260 = vmatpush1.msra.mxu0 0.0
        %2261 = vmatprep.subr.mxu0 0.0
        %2262 = vmatpush1.msra.mxu0 0.0
        %2263 = vmatprep.subr.mxu0 0.0
        %2264 = vmatpush1.msra.mxu0 0.0
        %2265 = vmatprep.subr.mxu0 0.0
        %2266 = vmatpush1.msra.mxu0 0.0
        %2267 = vmatprep.subr.mxu0 0.0
        %2268 = vmatpush1.msra.mxu0 0.0
        %2269 = vmatprep.subr.mxu0 0.0
        %2270 = vmatpush1.msra.mxu0 0.0
        %2271 = vmatprep.subr.mxu0 0.0
        %2272 = vmatpush1.msra.mxu0 0.0
        %2273 = vmatprep.subr.mxu0 0.0
        %2274 = vmatpush1.msra.mxu0 0.0
        %2275 = vmatprep.subr.mxu0 0.0
        %2276 = vmatpush1.msra.mxu0 0.0
        %2277 = vmatprep.subr.mxu0 0.0
        %2278 = vmatpush1.msra.mxu0 0.0
        %2279 = vmatprep.subr.mxu0 0.0
        %2280 = vmatpush1.msra.mxu0 0.0
        %2281 = vmatprep.subr.mxu0 0.0
        %2282 = vmatpush1.msra.mxu0 0.0
        %2283 = vmatprep.subr.mxu0 0.0
        %2284 = vmatpush1.msra.mxu0 0.0
        %2285 = vmatprep.subr.mxu0 0.0
        %2286 = vmatpush1.msra.mxu0 0.0
        %2287 = vmatprep.subr.mxu0 0.0
        %2288 = vmatpush1.msra.mxu0 0.0
        %2289 = vmatprep.subr.mxu0 0.0
        %2290 = vmatpush1.msra.mxu0 0.0
        %2291 = vmatprep.subr.mxu0 0.0
        %2292 = vmatpush1.msra.mxu0 0.0
        %2293 = vmatprep.subr.mxu0 0.0
        %2294 = vmatpush1.msra.mxu0 0.0
        %2295 = vmatprep.subr.mxu0 0.0
        %2296 = vmatpush1.msra.mxu0 0.0
        %2297 = vmatprep.subr.mxu0 0.0
        %2298 = vmatpush1.msra.mxu0 0.0
        %2299 = vmatprep.subr.mxu0 0.0
        %2300 = vmatpush1.msra.mxu0 0.0
        %2301 = vmatprep.subr.mxu0 0.0
        %2302 = vmatpush1.msra.mxu0 0.0
        %2303 = vmatprep.subr.mxu0 0.0
        %2304 = vmatpush1.msra.mxu0 0.0
        %2305 = vmatprep.subr.mxu0 0.0
        %2306 = vmatpush1.msra.mxu0 0.0
        %2307 = vmatprep.subr.mxu0 0.0
        %2308 = vmatpush1.msra.mxu0 0.0
        %2309 = vmatprep.subr.mxu0 0.0
        %2310 = vmatpush1.msra.mxu0 0.0
        %2311 = vmatprep.subr.mxu0 0.0
        %2312 = vmatpush1.msra.mxu0 0.0
        %2313 = vmatprep.mubr.f32.mxu0 0.0
        %2314 = vmatmul.mubr.f32.gmra.mrb[0].mxu0 %v1382
        %v2315 = vpop.f32.mrb[0].mxu0
        %v2316 = vadd.f32 %v2247, %v2315
        %v2317 = vpop.f32.mrb[0].mxu0
        %2318 = vdwg.mxu0
        %v2320 = vsel %vm1380, %v2316, 0
        %2322 = vmatprep.subr.mxu0 0.0
        %2323 = vmatpush1.msra.mxu0 %v2234
        %2324 = vmatprep.subr.mxu0 0.0
        %2325 = vmatpush1.msra.mxu0 %v2235
        %2326 = vmatprep.subr.mxu0 0.0
        %2327 = vmatpush1.msra.mxu0 %v2236
        %2328 = vmatprep.subr.mxu0 0.0
        %2329 = vmatpush1.msra.mxu0 %v2237
        %2330 = vmatprep.subr.mxu0 0.0
        %2331 = vmatpush1.msra.mxu0 0.0
        %2332 = vmatprep.subr.mxu0 0.0
        %2333 = vmatpush1.msra.mxu0 0.0
        %2334 = vmatprep.subr.mxu0 0.0
        %2335 = vmatpush1.msra.mxu0 0.0
        %2336 = vmatprep.subr.mxu0 0.0
        %2337 = vmatpush1.msra.mxu0 0.0
        %2338 = vmatprep.subr.mxu0 0.0
        %2339 = vmatpush1.msra.mxu0 0.0
        %2340 = vmatprep.subr.mxu0 0.0
        %2341 = vmatpush1.msra.mxu0 0.0
        %2342 = vmatprep.subr.mxu0 0.0
        %2343 = vmatpush1.msra.mxu0 0.0
        %2344 = vmatprep.subr.mxu0 0.0
        %2345 = vmatpush1.msra.mxu0 0.0
        %2346 = vmatprep.subr.mxu0 0.0
        %2347 = vmatpush1.msra.mxu0 0.0
        %2348 = vmatprep.subr.mxu0 0.0
        %2349 = vmatpush1.msra.mxu0 0.0
        %2350 = vmatprep.subr.mxu0 0.0
        %2351 = vmatpush1.msra.mxu0 0.0
        %2352 = vmatprep.subr.mxu0 0.0
        %2353 = vmatpush1.msra.mxu0 0.0
        %2354 = vmatprep.subr.mxu0 0.0
        %2355 = vmatpush1.msra.mxu0 0.0
        %2356 = vmatprep.subr.mxu0 0.0
        %2357 = vmatpush1.msra.mxu0 0.0
        %2358 = vmatprep.subr.mxu0 0.0
        %2359 = vmatpush1.msra.mxu0 0.0
        %2360 = vmatprep.subr.mxu0 0.0
        %2361 = vmatpush1.msra.mxu0 0.0
        %2362 = vmatprep.subr.mxu0 0.0
        %2363 = vmatpush1.msra.mxu0 0.0
        %2364 = vmatprep.subr.mxu0 0.0
        %2365 = vmatpush1.msra.mxu0 0.0
        %2366 = vmatprep.subr.mxu0 0.0
        %2367 = vmatpush1.msra.mxu0 0.0
        %2368 = vmatprep.subr.mxu0 0.0
        %2369 = vmatpush1.msra.mxu0 0.0
        %2370 = vmatprep.subr.mxu0 0.0
        %2371 = vmatpush1.msra.mxu0 0.0
        %2372 = vmatprep.subr.mxu0 0.0
        %2373 = vmatpush1.msra.mxu0 0.0
        %2374 = vmatprep.subr.mxu0 0.0
        %2375 = vmatpush1.msra.mxu0 0.0
        %2376 = vmatprep.subr.mxu0 0.0
        %2377 = vmatpush1.msra.mxu0 0.0
        %2378 = vmatprep.subr.mxu0 0.0
        %2379 = vmatpush1.msra.mxu0 0.0
        %2380 = vmatprep.subr.mxu0 0.0
        %2381 = vmatpush1.msra.mxu0 0.0
        %2382 = vmatprep.subr.mxu0 0.0
        %2383 = vmatpush1.msra.mxu0 0.0
        %2384 = vmatprep.subr.mxu0 0.0
        %2385 = vmatpush1.msra.mxu0 0.0
        %2386 = vmatprep.mubr.f32.mxu0 0.0
        %2387 = vmatmul.mubr.f32.gmra.mrb[0].mxu0 %v2320
        %v2388 = vpop.f32.mrb[0].mxu0
        %v2389 = vadd.f32 0.0, %v2388
        %v2390 = vpop.f32.mrb[0].mxu0
        %2391 = vdwg.mxu0
        %v2392 = vmul.f32 %v2389, %v1329
        %v2393 = vsel %vm1528, %v2392, 0.0
        %v2394 = vrot.slane %v2393, 4
        %v2395 = vadd.f32 %v2393, %v2394
        %v2396 = vrot.slane %v2395, 2
        %v2397 = vadd.f32 %v2395, %v2396
        %v2398 = vrot.slane %v2397, 1
        %v2399 = vadd.f32 %v2397, %v2398
        %v2401 = vlaneseq
        %v2402 = vshrl.u32 %v2401, 7
        %v2403 = vsub.s32 0, %v2402
        %v2404 = vrot.slane %v2233, %v2403
        %v2407 = vsel %vm1380, %v1328, 0
        %2409 = vmatprep.subr.mxu0 0.0
        %2410 = vmatpush1.msra.mxu0 %v2229
        %2411 = vmatprep.subr.mxu0 0.0
        %2412 = vmatpush1.msra.mxu0 %v2230
        %2413 = vmatprep.subr.mxu0 0.0
        %2414 = vmatpush1.msra.mxu0 %v2231
        %2415 = vmatprep.subr.mxu0 0.0
        %2416 = vmatpush1.msra.mxu0 %v2232
        %2417 = vmatprep.subr.mxu0 0.0
        %2418 = vmatpush1.msra.mxu0 0.0
        %2419 = vmatprep.subr.mxu0 0.0
        %2420 = vmatpush1.msra.mxu0 0.0
        %2421 = vmatprep.subr.mxu0 0.0
        %2422 = vmatpush1.msra.mxu0 0.0
        %2423 = vmatprep.subr.mxu0 0.0
        %2424 = vmatpush1.msra.mxu0 0.0
        %2425 = vmatprep.subr.mxu0 0.0
        %2426 = vmatpush1.msra.mxu0 0.0
        %2427 = vmatprep.subr.mxu0 0.0
        %2428 = vmatpush1.msra.mxu0 0.0
        %2429 = vmatprep.subr.mxu0 0.0
        %2430 = vmatpush1.msra.mxu0 0.0
        %2431 = vmatprep.subr.mxu0 0.0
        %2432 = vmatpush1.msra.mxu0 0.0
        %2433 = vmatprep.subr.mxu0 0.0
        %2434 = vmatpush1.msra.mxu0 0.0
        %2435 = vmatprep.subr.mxu0 0.0
        %2436 = vmatpush1.msra.mxu0 0.0
        %2437 = vmatprep.subr.mxu0 0.0
        %2438 = vmatpush1.msra.mxu0 0.0
        %2439 = vmatprep.subr.mxu0 0.0
        %2440 = vmatpush1.msra.mxu0 0.0
        %2441 = vmatprep.subr.mxu0 0.0
        %2442 = vmatpush1.msra.mxu0 0.0
        %2443 = vmatprep.subr.mxu0 0.0
        %2444 = vmatpush1.msra.mxu0 0.0
        %2445 = vmatprep.subr.mxu0 0.0
        %2446 = vmatpush1.msra.mxu0 0.0
        %2447 = vmatprep.subr.mxu0 0.0
        %2448 = vmatpush1.msra.mxu0 0.0
        %2449 = vmatprep.subr.mxu0 0.0
        %2450 = vmatpush1.msra.mxu0 0.0
        %2451 = vmatprep.subr.mxu0 0.0
        %2452 = vmatpush1.msra.mxu0 0.0
        %2453 = vmatprep.subr.mxu0 0.0
        %2454 = vmatpush1.msra.mxu0 0.0
        %2455 = vmatprep.subr.mxu0 0.0
        %2456 = vmatpush1.msra.mxu0 0.0
        %2457 = vmatprep.subr.mxu0 0.0
        %2458 = vmatpush1.msra.mxu0 0.0
        %2459 = vmatprep.subr.mxu0 0.0
        %2460 = vmatpush1.msra.mxu0 0.0
        %2461 = vmatprep.subr.mxu0 0.0
        %2462 = vmatpush1.msra.mxu0 0.0
        %2463 = vmatprep.subr.mxu0 0.0
        %2464 = vmatpush1.msra.mxu0 0.0
        %2465 = vmatprep.subr.mxu0 0.0
        %2466 = vmatpush1.msra.mxu0 0.0
        %2467 = vmatprep.subr.mxu0 0.0
        %2468 = vmatpush1.msra.mxu0 0.0
        %2469 = vmatprep.subr.mxu0 0.0
        %2470 = vmatpush1.msra.mxu0 0.0
        %2471 = vmatprep.subr.mxu0 0.0
        %2472 = vmatpush1.msra.mxu0 0.0
        %2473 = vmatprep.mubr.f32.mxu0 0.0
        %2474 = vmatmul.mubr.f32.gmra.mrb[0].mxu0 %v2407
        %v2475 = vpop.f32.mrb[0].mxu0
        %v2476 = vadd.f32 %v2404, %v2475
        %v2477 = vpop.f32.mrb[0].mxu0
        %2478 = vdwg.mxu0
        %v2479 = vadd.f32 %v2476, %v2399
        %v2480 = vtanh.pop %v2479
        %v2481 = vmul.f32 %v2480, 1.442695
        %v2482 = vpow.pop %v2481
        %v2484 = vsel %vm1528, %v2482, 0
        %2486 = vmatprep.subr.mxu0 0.0
        %2487 = vmatpush1.msra.mxu0 %v1331
        %2488 = vmatprep.subr.mxu0 0.0
        %2489 = vmatpush1.msra.mxu0 %v1332
        %2490 = vmatprep.subr.mxu0 0.0
        %2491 = vmatpush1.msra.mxu0 %v1333
        %2492 = vmatprep.subr.mxu0 0.0
        %2493 = vmatpush1.msra.mxu0 %v1334
        %2494 = vmatprep.subr.mxu0 0.0
        %2495 = vmatpush1.msra.mxu0 %v1335
        %2496 = vmatprep.subr.mxu0 0.0
        %2497 = vmatpush1.msra.mxu0 %v1336
        %2498 = vmatprep.subr.mxu0 0.0
        %2499 = vmatpush1.msra.mxu0 %v1337
        %2500 = vmatprep.subr.mxu0 0.0
        %2501 = vmatpush1.msra.mxu0 %v1338
        %2502 = vmatprep.subr.mxu0 0.0
        %2503 = vmatpush1.msra.mxu0 0.0
        %2504 = vmatprep.subr.mxu0 0.0
        %2505 = vmatpush1.msra.mxu0 0.0
        %2506 = vmatprep.subr.mxu0 0.0
        %2507 = vmatpush1.msra.mxu0 0.0
        %2508 = vmatprep.subr.mxu0 0.0
        %2509 = vmatpush1.msra.mxu0 0.0
        %2510 = vmatprep.subr.mxu0 0.0
        %2511 = vmatpush1.msra.mxu0 0.0
        %2512 = vmatprep.subr.mxu0 0.0
        %2513 = vmatpush1.msra.mxu0 0.0
        %2514 = vmatprep.subr.mxu0 0.0
        %2515 = vmatpush1.msra.mxu0 0.0
        %2516 = vmatprep.subr.mxu0 0.0
        %2517 = vmatpush1.msra.mxu0 0.0
        %2518 = vmatprep.subr.mxu0 0.0
        %2519 = vmatpush1.msra.mxu0 0.0
        %2520 = vmatprep.subr.mxu0 0.0
        %2521 = vmatpush1.msra.mxu0 0.0
        %2522 = vmatprep.subr.mxu0 0.0
        %2523 = vmatpush1.msra.mxu0 0.0
        %2524 = vmatprep.subr.mxu0 0.0
        %2525 = vmatpush1.msra.mxu0 0.0
        %2526 = vmatprep.subr.mxu0 0.0
        %2527 = vmatpush1.msra.mxu0 0.0
        %2528 = vmatprep.subr.mxu0 0.0
        %2529 = vmatpush1.msra.mxu0 0.0
        %2530 = vmatprep.subr.mxu0 0.0
        %2531 = vmatpush1.msra.mxu0 0.0
        %2532 = vmatprep.subr.mxu0 0.0
        %2533 = vmatpush1.msra.mxu0 0.0
        %2534 = vmatprep.subr.mxu0 0.0
        %2535 = vmatpush1.msra.mxu0 0.0
        %2536 = vmatprep.subr.mxu0 0.0
        %2537 = vmatpush1.msra.mxu0 0.0
        %2538 = vmatprep.subr.mxu0 0.0
        %2539 = vmatpush1.msra.mxu0 0.0
        %2540 = vmatprep.subr.mxu0 0.0
        %2541 = vmatpush1.msra.mxu0 0.0
        %2542 = vmatprep.subr.mxu0 0.0
        %2543 = vmatpush1.msra.mxu0 0.0
        %2544 = vmatprep.subr.mxu0 0.0
        %2545 = vmatpush1.msra.mxu0 0.0
        %2546 = vmatprep.subr.mxu0 0.0
        %2547 = vmatpush1.msra.mxu0 0.0
        %2548 = vmatprep.subr.mxu0 0.0
        %2549 = vmatpush1.msra.mxu0 0.0
        %2550 = vmatprep.mubr.f32.mxu0 0.0
        %2551 = vmatmul.mubr.f32.gmra.mrb[0].mxu0 %v2484
        %v2552 = vpop.f32.mrb[0].mxu0
        %v2553 = vadd.f32 0.0, %v2552
        %v2554 = vpop.f32.mrb[0].mxu0
        %2555 = vdwg.mxu0
        %v2556 = vrcp.pop %v2553
        %v2557 = vmul.f32 1.0, %v2556
        %v2559 = vsel %vm1691, %v2557, 0
        %2561 = vmatprep.subr.mxu0 0.0
        %2562 = vmatpush1.msra.mxu0 %v1330
        %2563 = vmatprep.subr.mxu0 0.0
        %2564 = vmatpush1.msra.mxu0 0.0
        %2565 = vmatprep.subr.mxu0 0.0
        %2566 = vmatpush1.msra.mxu0 0.0
        %2567 = vmatprep.subr.mxu0 0.0
        %2568 = vmatpush1.msra.mxu0 0.0
        %2569 = vmatprep.subr.mxu0 0.0
        %2570 = vmatpush1.msra.mxu0 0.0
        %2571 = vmatprep.subr.mxu0 0.0
        %2572 = vmatpush1.msra.mxu0 0.0
        %2573 = vmatprep.subr.mxu0 0.0
        %2574 = vmatpush1.msra.mxu0 0.0
        %2575 = vmatprep.subr.mxu0 0.0
        %2576 = vmatpush1.msra.mxu0 0.0
        %2577 = vmatprep.subr.mxu0 0.0
        %2578 = vmatpush1.msra.mxu0 0.0
        %2579 = vmatprep.subr.mxu0 0.0
        %2580 = vmatpush1.msra.mxu0 0.0
        %2581 = vmatprep.subr.mxu0 0.0
        %2582 = vmatpush1.msra.mxu0 0.0
        %2583 = vmatprep.subr.mxu0 0.0
        %2584 = vmatpush1.msra.mxu0 0.0
        %2585 = vmatprep.subr.mxu0 0.0
        %2586 = vmatpush1.msra.mxu0 0.0
        %2587 = vmatprep.subr.mxu0 0.0
        %2588 = vmatpush1.msra.mxu0 0.0
        %2589 = vmatprep.subr.mxu0 0.0
        %2590 = vmatpush1.msra.mxu0 0.0
        %2591 = vmatprep.subr.mxu0 0.0
        %2592 = vmatpush1.msra.mxu0 0.0
        %2593 = vmatprep.subr.mxu0 0.0
        %2594 = vmatpush1.msra.mxu0 0.0
        %2595 = vmatprep.subr.mxu0 0.0
        %2596 = vmatpush1.msra.mxu0 0.0
        %2597 = vmatprep.subr.mxu0 0.0
        %2598 = vmatpush1.msra.mxu0 0.0
        %2599 = vmatprep.subr.mxu0 0.0
        %2600 = vmatpush1.msra.mxu0 0.0
        %2601 = vmatprep.subr.mxu0 0.0
        %2602 = vmatpush1.msra.mxu0 0.0
        %2603 = vmatprep.subr.mxu0 0.0
        %2604 = vmatpush1.msra.mxu0 0.0
        %2605 = vmatprep.subr.mxu0 0.0
        %2606 = vmatpush1.msra.mxu0 0.0
        %2607 = vmatprep.subr.mxu0 0.0
        %2608 = vmatpush1.msra.mxu0 0.0
        %2609 = vmatprep.subr.mxu0 0.0
        %2610 = vmatpush1.msra.mxu0 0.0
        %2611 = vmatprep.subr.mxu0 0.0
        %2612 = vmatpush1.msra.mxu0 0.0
        %2613 = vmatprep.subr.mxu0 0.0
        %2614 = vmatpush1.msra.mxu0 0.0
        %2615 = vmatprep.subr.mxu0 0.0
        %2616 = vmatpush1.msra.mxu0 0.0
        %2617 = vmatprep.subr.mxu0 0.0
        %2618 = vmatpush1.msra.mxu0 0.0
        %2619 = vmatprep.subr.mxu0 0.0
        %2620 = vmatpush1.msra.mxu0 0.0
        %2621 = vmatprep.subr.mxu0 0.0
        %2622 = vmatpush1.msra.mxu0 0.0
        %2623 = vmatprep.subr.mxu0 0.0
        %2624 = vmatpush1.msra.mxu0 0.0
        %2625 = vmatprep.mubr.f32.mxu0 0.0
        %2626 = vmatmul.mubr.f32.gmra.mrb[0].mxu0 %v2559
        %v2627 = vpop.f32.mrb[0].mxu0
        %v2628 = vadd.f32 0.0, %v2627
        %v2629 = vpop.f32.mrb[0].mxu0
        %2630 = vdwg.mxu0
        %v2631 = vmul.f32 %v2482, %v2628
        %2632 = vmatprep.subr.mxu0 0.0
        %2633 = vmatpush1.msra.mxu0 %v2316
        %2634 = vmatprep.subr.mxu0 0.0
        %2635 = vmatpush1.msra.mxu0 0.0
        %2636 = vmatprep.subr.mxu0 0.0
        %2637 = vmatpush1.msra.mxu0 0.0
        %2638 = vmatprep.subr.mxu0 0.0
        %2639 = vmatpush1.msra.mxu0 0.0
        %2640 = vmatprep.subr.mxu0 0.0
        %2641 = vmatpush1.msra.mxu0 0.0
        %2642 = vmatprep.subr.mxu0 0.0
        %2643 = vmatpush1.msra.mxu0 0.0
        %2644 = vmatprep.subr.mxu0 0.0
        %2645 = vmatpush1.msra.mxu0 0.0
        %2646 = vmatprep.subr.mxu0 0.0
        %2647 = vmatpush1.msra.mxu0 0.0
        %2648 = vmatprep.subr.mxu0 0.0
        %2649 = vmatpush1.msra.mxu0 0.0
        %2650 = vmatprep.subr.mxu0 0.0
        %2651 = vmatpush1.msra.mxu0 0.0
        %2652 = vmatprep.subr.mxu0 0.0
        %2653 = vmatpush1.msra.mxu0 0.0
        %2654 = vmatprep.subr.mxu0 0.0
        %2655 = vmatpush1.msra.mxu0 0.0
        %2656 = vmatprep.subr.mxu0 0.0
        %2657 = vmatpush1.msra.mxu0 0.0
        %2658 = vmatprep.subr.mxu0 0.0
        %2659 = vmatpush1.msra.mxu0 0.0
        %2660 = vmatprep.subr.mxu0 0.0
        %2661 = vmatpush1.msra.mxu0 0.0
        %2662 = vmatprep.subr.mxu0 0.0
        %2663 = vmatpush1.msra.mxu0 0.0
        %2664 = vmatprep.subr.mxu0 0.0
        %2665 = vmatpush1.msra.mxu0 0.0
        %2666 = vmatprep.subr.mxu0 0.0
        %2667 = vmatpush1.msra.mxu0 0.0
        %2668 = vmatprep.subr.mxu0 0.0
        %2669 = vmatpush1.msra.mxu0 0.0
        %2670 = vmatprep.subr.mxu0 0.0
        %2671 = vmatpush1.msra.mxu0 0.0
        %2672 = vmatprep.subr.mxu0 0.0
        %2673 = vmatpush1.msra.mxu0 0.0
        %2674 = vmatprep.subr.mxu0 0.0
        %2675 = vmatpush1.msra.mxu0 0.0
        %2676 = vmatprep.subr.mxu0 0.0
        %2677 = vmatpush1.msra.mxu0 0.0
        %2678 = vmatprep.subr.mxu0 0.0
        %2679 = vmatpush1.msra.mxu0 0.0
        %2680 = vmatprep.subr.mxu0 0.0
        %2681 = vmatpush1.msra.mxu0 0.0
        %2682 = vmatprep.subr.mxu0 0.0
        %2683 = vmatpush1.msra.mxu0 0.0
        %2684 = vmatprep.subr.mxu0 0.0
        %2685 = vmatpush1.msra.mxu0 0.0
        %2686 = vmatprep.subr.mxu0 0.0
        %2687 = vmatpush1.msra.mxu0 0.0
        %2688 = vmatprep.subr.mxu0 0.0
        %2689 = vmatpush1.msra.mxu0 0.0
        %2690 = vmatprep.subr.mxu0 0.0
        %2691 = vmatpush1.msra.mxu0 0.0
        %2692 = vmatprep.subr.mxu0 0.0
        %2693 = vmatpush1.msra.mxu0 0.0
        %2694 = vmatprep.subr.mxu0 0.0
        %2695 = vmatpush1.msra.mxu0 0.0
        %2696 = vmatprep.mubr.f32.mxu0 0.0
        %2697 = vmatmul.mubr.f32.gmra.mrb[0].mxu0 %v1767
        %v2698 = vpop.f32.mrb[0].mxu0
        %v2699 = vadd.f32 0.0, %v2698
        %v2700 = vpop.f32.mrb[0].mxu0
        %2701 = vmatprep.mubr.f32.mxu0 0.0
        %2702 = vmatmul.mubr.f32.gmra.mrb[0].mxu0 %v1770
        %v2703 = vpop.f32.mrb[0].mxu0
        %v2704 = vadd.f32 0.0, %v2703
        %v2705 = vpop.f32.mrb[0].mxu0
        %2706 = vmatprep.mubr.f32.mxu0 0.0
        %2707 = vmatmul.mubr.f32.gmra.mrb[0].mxu0 %v1773
        %v2708 = vpop.f32.mrb[0].mxu0
        %v2709 = vadd.f32 0.0, %v2708
        %v2710 = vpop.f32.mrb[0].mxu0
        %2711 = vmatprep.mubr.f32.mxu0 0.0
        %2712 = vmatmul.mubr.f32.gmra.mrb[0].mxu0 %v1776
        %v2713 = vpop.f32.mrb[0].mxu0
        %v2714 = vadd.f32 0.0, %v2713
        %v2715 = vpop.f32.mrb[0].mxu0
        %2716 = vmatprep.mubr.f32.mxu0 0.0
        %2717 = vmatmul.mubr.f32.gmra.mrb[0].mxu0 %v1779
        %v2718 = vpop.f32.mrb[0].mxu0
        %v2719 = vadd.f32 0.0, %v2718
        %v2720 = vpop.f32.mrb[0].mxu0
        %2721 = vmatprep.mubr.f32.mxu0 0.0
        %2722 = vmatmul.mubr.f32.gmra.mrb[0].mxu0 %v1782
        %v2723 = vpop.f32.mrb[0].mxu0
        %v2724 = vadd.f32 0.0, %v2723
        %v2725 = vpop.f32.mrb[0].mxu0
        %2726 = vmatprep.mubr.f32.mxu0 0.0
        %2727 = vmatmul.mubr.f32.gmra.mrb[0].mxu0 %v1785
        %v2728 = vpop.f32.mrb[0].mxu0
        %v2729 = vadd.f32 0.0, %v2728
        %v2730 = vpop.f32.mrb[0].mxu0
        %2731 = vmatprep.mubr.f32.mxu0 0.0
        %2732 = vmatmul.mubr.f32.gmra.mrb[0].mxu0 %v1788
        %v2733 = vpop.f32.mrb[0].mxu0
        %v2734 = vadd.f32 0.0, %v2733
        %v2735 = vpop.f32.mrb[0].mxu0
        %2736 = vdwg.mxu0
        %v2737 = vmul.f32 %v2699, %v1347
        %v2738 = vmul.f32 %v2704, %v1348
        %v2739 = vmul.f32 %v2709, %v1349
        %v2740 = vmul.f32 %v2714, %v1350
        %v2741 = vmul.f32 %v2719, %v1351
        %v2742 = vmul.f32 %v2724, %v1352
        %v2743 = vmul.f32 %v2729, %v1353
        %v2744 = vmul.f32 %v2734, %v1354
        %v2746 = vsel %vm1528, %v2631, 0
        %2748 = vmatprep.subr.mxu0 0.0
        %2749 = vmatpush1.msra.mxu0 %v2737
        %2750 = vmatprep.subr.mxu0 0.0
        %2751 = vmatpush1.msra.mxu0 %v2738
        %2752 = vmatprep.subr.mxu0 0.0
        %2753 = vmatpush1.msra.mxu0 %v2739
        %2754 = vmatprep.subr.mxu0 0.0
        %2755 = vmatpush1.msra.mxu0 %v2740
        %2756 = vmatprep.subr.mxu0 0.0
        %2757 = vmatpush1.msra.mxu0 %v2741
        %2758 = vmatprep.subr.mxu0 0.0
        %2759 = vmatpush1.msra.mxu0 %v2742
        %2760 = vmatprep.subr.mxu0 0.0
        %2761 = vmatpush1.msra.mxu0 %v2743
        %2762 = vmatprep.subr.mxu0 0.0
        %2763 = vmatpush1.msra.mxu0 %v2744
        %2764 = vmatprep.subr.mxu0 0.0
        %2765 = vmatpush1.msra.mxu0 0.0
        %2766 = vmatprep.subr.mxu0 0.0
        %2767 = vmatpush1.msra.mxu0 0.0
        %2768 = vmatprep.subr.mxu0 0.0
        %2769 = vmatpush1.msra.mxu0 0.0
        %2770 = vmatprep.subr.mxu0 0.0
        %2771 = vmatpush1.msra.mxu0 0.0
        %2772 = vmatprep.subr.mxu0 0.0
        %2773 = vmatpush1.msra.mxu0 0.0
        %2774 = vmatprep.subr.mxu0 0.0
        %2775 = vmatpush1.msra.mxu0 0.0
        %2776 = vmatprep.subr.mxu0 0.0
        %2777 = vmatpush1.msra.mxu0 0.0
        %2778 = vmatprep.subr.mxu0 0.0
        %2779 = vmatpush1.msra.mxu0 0.0
        %2780 = vmatprep.subr.mxu0 0.0
        %2781 = vmatpush1.msra.mxu0 0.0
        %2782 = vmatprep.subr.mxu0 0.0
        %2783 = vmatpush1.msra.mxu0 0.0
        %2784 = vmatprep.subr.mxu0 0.0
        %2785 = vmatpush1.msra.mxu0 0.0
        %2786 = vmatprep.subr.mxu0 0.0
        %2787 = vmatpush1.msra.mxu0 0.0
        %2788 = vmatprep.subr.mxu0 0.0
        %2789 = vmatpush1.msra.mxu0 0.0
        %2790 = vmatprep.subr.mxu0 0.0
        %2791 = vmatpush1.msra.mxu0 0.0
        %2792 = vmatprep.subr.mxu0 0.0
        %2793 = vmatpush1.msra.mxu0 0.0
        %2794 = vmatprep.subr.mxu0 0.0
        %2795 = vmatpush1.msra.mxu0 0.0
        %2796 = vmatprep.subr.mxu0 0.0
        %2797 = vmatpush1.msra.mxu0 0.0
        %2798 = vmatprep.subr.mxu0 0.0
        %2799 = vmatpush1.msra.mxu0 0.0
        %2800 = vmatprep.subr.mxu0 0.0
        %2801 = vmatpush1.msra.mxu0 0.0
        %2802 = vmatprep.subr.mxu0 0.0
        %2803 = vmatpush1.msra.mxu0 0.0
        %2804 = vmatprep.subr.mxu0 0.0
        %2805 = vmatpush1.msra.mxu0 0.0
        %2806 = vmatprep.subr.mxu0 0.0
        %2807 = vmatpush1.msra.mxu0 0.0
        %2808 = vmatprep.subr.mxu0 0.0
        %2809 = vmatpush1.msra.mxu0 0.0
        %2810 = vmatprep.subr.mxu0 0.0
        %2811 = vmatpush1.msra.mxu0 0.0
        %2812 = vmatprep.mubr.f32.mxu0 0.0
        %2813 = vmatmul.mubr.f32.gmra.mrb[0].mxu0 %v2746
        %v2814 = vpop.f32.mrb[0].mxu0
        %v2815 = vadd.f32 0.0, %v2814
        %v2816 = vpop.f32.mrb[0].mxu0
        %2817 = vdwg.mxu0
        %v2819 = vlaneseq
        %v2820 = vshrl.u32 %v2819, 7
        %v2821 = vsub.s32 0, %v2820
        %v2822 = vrot.slane %v2242, %v2821
        %v2825 = vsel %vm1380, %v2815, 0
        %2827 = vmatprep.subr.mxu0 0.0
        %2828 = vmatpush1.msra.mxu0 %v2238
        %2829 = vmatprep.subr.mxu0 0.0
        %2830 = vmatpush1.msra.mxu0 %v2239
        %2831 = vmatprep.subr.mxu0 0.0
        %2832 = vmatpush1.msra.mxu0 %v2240
        %2833 = vmatprep.subr.mxu0 0.0
        %2834 = vmatpush1.msra.mxu0 %v2241
        %2835 = vmatprep.subr.mxu0 0.0
        %2836 = vmatpush1.msra.mxu0 0.0
        %2837 = vmatprep.subr.mxu0 0.0
        %2838 = vmatpush1.msra.mxu0 0.0
        %2839 = vmatprep.subr.mxu0 0.0
        %2840 = vmatpush1.msra.mxu0 0.0
        %2841 = vmatprep.subr.mxu0 0.0
        %2842 = vmatpush1.msra.mxu0 0.0
        %2843 = vmatprep.subr.mxu0 0.0
        %2844 = vmatpush1.msra.mxu0 0.0
        %2845 = vmatprep.subr.mxu0 0.0
        %2846 = vmatpush1.msra.mxu0 0.0
        %2847 = vmatprep.subr.mxu0 0.0
        %2848 = vmatpush1.msra.mxu0 0.0
        %2849 = vmatprep.subr.mxu0 0.0
        %2850 = vmatpush1.msra.mxu0 0.0
        %2851 = vmatprep.subr.mxu0 0.0
        %2852 = vmatpush1.msra.mxu0 0.0
        %2853 = vmatprep.subr.mxu0 0.0
        %2854 = vmatpush1.msra.mxu0 0.0
        %2855 = vmatprep.subr.mxu0 0.0
        %2856 = vmatpush1.msra.mxu0 0.0
        %2857 = vmatprep.subr.mxu0 0.0
        %2858 = vmatpush1.msra.mxu0 0.0
        %2859 = vmatprep.subr.mxu0 0.0
        %2860 = vmatpush1.msra.mxu0 0.0
        %2861 = vmatprep.subr.mxu0 0.0
        %2862 = vmatpush1.msra.mxu0 0.0
        %2863 = vmatprep.subr.mxu0 0.0
        %2864 = vmatpush1.msra.mxu0 0.0
        %2865 = vmatprep.subr.mxu0 0.0
        %2866 = vmatpush1.msra.mxu0 0.0
        %2867 = vmatprep.subr.mxu0 0.0
        %2868 = vmatpush1.msra.mxu0 0.0
        %2869 = vmatprep.subr.mxu0 0.0
        %2870 = vmatpush1.msra.mxu0 0.0
        %2871 = vmatprep.subr.mxu0 0.0
        %2872 = vmatpush1.msra.mxu0 0.0
        %2873 = vmatprep.subr.mxu0 0.0
        %2874 = vmatpush1.msra.mxu0 0.0
        %2875 = vmatprep.subr.mxu0 0.0
        %2876 = vmatpush1.msra.mxu0 0.0
        %2877 = vmatprep.subr.mxu0 0.0
        %2878 = vmatpush1.msra.mxu0 0.0
        %2879 = vmatprep.subr.mxu0 0.0
        %2880 = vmatpush1.msra.mxu0 0.0
        %2881 = vmatprep.subr.mxu0 0.0
        %2882 = vmatpush1.msra.mxu0 0.0
        %2883 = vmatprep.subr.mxu0 0.0
        %2884 = vmatpush1.msra.mxu0 0.0
        %2885 = vmatprep.subr.mxu0 0.0
        %2886 = vmatpush1.msra.mxu0 0.0
        %2887 = vmatprep.subr.mxu0 0.0
        %2888 = vmatpush1.msra.mxu0 0.0
        %2889 = vmatprep.subr.mxu0 0.0
        %2890 = vmatpush1.msra.mxu0 0.0
        %2891 = vmatprep.mubr.f32.mxu0 0.0
        %2892 = vmatmul.mubr.f32.gmra.mrb[0].mxu0 %v2825
        %v2893 = vpop.f32.mrb[0].mxu0
        %v2894 = vadd.f32 %v2822, %v2893
        %v2895 = vpop.f32.mrb[0].mxu0
        %2896 = vdwg.mxu0
        %v2897 = vld [vmem:[%s67] sm:$0xff]
        %v2898 = vld [vmem:[%s67 + $0x8] sm:$0xff]
        %v2899 = vld [vmem:[%s67 + $0x10] sm:$0xff]
        %v2900 = vld [vmem:[%s67 + $0x18] sm:$0xff]
        %v2901 = vld [vmem:[%s69] sm:$0x1]
        %v2902 = vld [vmem:[%s71] sm:$0xff]
        %v2903 = vld [vmem:[%s71 + $0x8] sm:$0xff]
        %v2904 = vld [vmem:[%s71 + $0x10] sm:$0xff]
        %v2905 = vld [vmem:[%s71 + $0x18] sm:$0xff]
        %v2906 = vld [vmem:[%s73] sm:$0x1]
        %v2908 = vlaneseq
        %v2909 = vshrl.u32 %v2908, 7
        %v2910 = vsub.s32 0, %v2909
        %v2911 = vrot.slane %v2901, %v2910
        %v2914 = vsel %vm1380, %v2894, 0
        %2916 = vmatprep.subr.mxu0 0.0
        %2917 = vmatpush1.msra.mxu0 %v2897
        %2918 = vmatprep.subr.mxu0 0.0
        %2919 = vmatpush1.msra.mxu0 %v2898
        %2920 = vmatprep.subr.mxu0 0.0
        %2921 = vmatpush1.msra.mxu0 %v2899
        %2922 = vmatprep.subr.mxu0 0.0
        %2923 = vmatpush1.msra.mxu0 %v2900
        %2924 = vmatprep.subr.mxu0 0.0
        %2925 = vmatpush1.msra.mxu0 0.0
        %2926 = vmatprep.subr.mxu0 0.0
        %2927 = vmatpush1.msra.mxu0 0.0
        %2928 = vmatprep.subr.mxu0 0.0
        %2929 = vmatpush1.msra.mxu0 0.0
        %2930 = vmatprep.subr.mxu0 0.0
        %2931 = vmatpush1.msra.mxu0 0.0
        %2932 = vmatprep.subr.mxu0 0.0
        %2933 = vmatpush1.msra.mxu0 0.0
        %2934 = vmatprep.subr.mxu0 0.0
        %2935 = vmatpush1.msra.mxu0 0.0
        %2936 = vmatprep.subr.mxu0 0.0
        %2937 = vmatpush1.msra.mxu0 0.0
        %2938 = vmatprep.subr.mxu0 0.0
        %2939 = vmatpush1.msra.mxu0 0.0
        %2940 = vmatprep.subr.mxu0 0.0
        %2941 = vmatpush1.msra.mxu0 0.0
        %2942 = vmatprep.subr.mxu0 0.0
        %2943 = vmatpush1.msra.mxu0 0.0
        %2944 = vmatprep.subr.mxu0 0.0
        %2945 = vmatpush1.msra.mxu0 0.0
        %2946 = vmatprep.subr.mxu0 0.0
        %2947 = vmatpush1.msra.mxu0 0.0
        %2948 = vmatprep.subr.mxu0 0.0
        %2949 = vmatpush1.msra.mxu0 0.0
        %2950 = vmatprep.subr.mxu0 0.0
        %2951 = vmatpush1.msra.mxu0 0.0
        %2952 = vmatprep.subr.mxu0 0.0
        %2953 = vmatpush1.msra.mxu0 0.0
        %2954 = vmatprep.subr.mxu0 0.0
        %2955 = vmatpush1.msra.mxu0 0.0
        %2956 = vmatprep.subr.mxu0 0.0
        %2957 = vmatpush1.msra.mxu0 0.0
        %2958 = vmatprep.subr.mxu0 0.0
        %2959 = vmatpush1.msra.mxu0 0.0
        %2960 = vmatprep.subr.mxu0 0.0
        %2961 = vmatpush1.msra.mxu0 0.0
        %2962 = vmatprep.subr.mxu0 0.0
        %2963 = vmatpush1.msra.mxu0 0.0
        %2964 = vmatprep.subr.mxu0 0.0
        %2965 = vmatpush1.msra.mxu0 0.0
        %2966 = vmatprep.subr.mxu0 0.0
        %2967 = vmatpush1.msra.mxu0 0.0
        %2968 = vmatprep.subr.mxu0 0.0
        %2969 = vmatpush1.msra.mxu0 0.0
        %2970 = vmatprep.subr.mxu0 0.0
        %2971 = vmatpush1.msra.mxu0 0.0
        %2972 = vmatprep.subr.mxu0 0.0
        %2973 = vmatpush1.msra.mxu0 0.0
        %2974 = vmatprep.subr.mxu0 0.0
        %2975 = vmatpush1.msra.mxu0 0.0
        %2976 = vmatprep.subr.mxu0 0.0
        %2977 = vmatpush1.msra.mxu0 0.0
        %2978 = vmatprep.subr.mxu0 0.0
        %2979 = vmatpush1.msra.mxu0 0.0
        %2980 = vmatprep.mubr.f32.mxu0 0.0
        %2981 = vmatmul.mubr.f32.gmra.mrb[0].mxu0 %v2914
        %v2982 = vpop.f32.mrb[0].mxu0
        %v2983 = vadd.f32 %v2911, %v2982
        %v2984 = vpop.f32.mrb[0].mxu0
        %2985 = vdwg.mxu0
        %v2986 = vmax.f32 %v2983, 0.0
        %v2988 = vlaneseq
        %v2989 = vshrl.u32 %v2988, 7
        %v2990 = vsub.s32 0, %v2989
        %v2991 = vrot.slane %v2906, %v2990
        %v2994 = vsel %vm1380, %v2986, 0
        %2996 = vmatprep.subr.mxu0 0.0
        %2997 = vmatpush1.msra.mxu0 %v2902
        %2998 = vmatprep.subr.mxu0 0.0
        %2999 = vmatpush1.msra.mxu0 %v2903
        %3000 = vmatprep.subr.mxu0 0.0
        %3001 = vmatpush1.msra.mxu0 %v2904
        %3002 = vmatprep.subr.mxu0 0.0
        %3003 = vmatpush1.msra.mxu0 %v2905
        %3004 = vmatprep.subr.mxu0 0.0
        %3005 = vmatpush1.msra.mxu0 0.0
        %3006 = vmatprep.subr.mxu0 0.0
        %3007 = vmatpush1.msra.mxu0 0.0
        %3008 = vmatprep.subr.mxu0 0.0
        %3009 = vmatpush1.msra.mxu0 0.0
        %3010 = vmatprep.subr.mxu0 0.0
        %3011 = vmatpush1.msra.mxu0 0.0
        %3012 = vmatprep.subr.mxu0 0.0
        %3013 = vmatpush1.msra.mxu0 0.0
        %3014 = vmatprep.subr.mxu0 0.0
        %3015 = vmatpush1.msra.mxu0 0.0
        %3016 = vmatprep.subr.mxu0 0.0
        %3017 = vmatpush1.msra.mxu0 0.0
        %3018 = vmatprep.subr.mxu0 0.0
        %3019 = vmatpush1.msra.mxu0 0.0
        %3020 = vmatprep.subr.mxu0 0.0
        %3021 = vmatpush1.msra.mxu0 0.0
        %3022 = vmatprep.subr.mxu0 0.0
        %3023 = vmatpush1.msra.mxu0 0.0
        %3024 = vmatprep.subr.mxu0 0.0
        %3025 = vmatpush1.msra.mxu0 0.0
        %3026 = vmatprep.subr.mxu0 0.0
        %3027 = vmatpush1.msra.mxu0 0.0
        %3028 = vmatprep.subr.mxu0 0.0
        %3029 = vmatpush1.msra.mxu0 0.0
        %3030 = vmatprep.subr.mxu0 0.0
        %3031 = vmatpush1.msra.mxu0 0.0
        %3032 = vmatprep.subr.mxu0 0.0
        %3033 = vmatpush1.msra.mxu0 0.0
        %3034 = vmatprep.subr.mxu0 0.0
        %3035 = vmatpush1.msra.mxu0 0.0
        %3036 = vmatprep.subr.mxu0 0.0
        %3037 = vmatpush1.msra.mxu0 0.0
        %3038 = vmatprep.subr.mxu0 0.0
        %3039 = vmatpush1.msra.mxu0 0.0
        %3040 = vmatprep.subr.mxu0 0.0
        %3041 = vmatpush1.msra.mxu0 0.0
        %3042 = vmatprep.subr.mxu0 0.0
        %3043 = vmatpush1.msra.mxu0 0.0
        %3044 = vmatprep.subr.mxu0 0.0
        %3045 = vmatpush1.msra.mxu0 0.0
        %3046 = vmatprep.subr.mxu0 0.0
        %3047 = vmatpush1.msra.mxu0 0.0
        %3048 = vmatprep.subr.mxu0 0.0
        %3049 = vmatpush1.msra.mxu0 0.0
        %3050 = vmatprep.subr.mxu0 0.0
        %3051 = vmatpush1.msra.mxu0 0.0
        %3052 = vmatprep.subr.mxu0 0.0
        %3053 = vmatpush1.msra.mxu0 0.0
        %3054 = vmatprep.subr.mxu0 0.0
        %3055 = vmatpush1.msra.mxu0 0.0
        %3056 = vmatprep.subr.mxu0 0.0
        %3057 = vmatpush1.msra.mxu0 0.0
        %3058 = vmatprep.subr.mxu0 0.0
        %3059 = vmatpush1.msra.mxu0 0.0
        %3060 = vmatprep.mubr.f32.mxu0 0.0
        %3061 = vmatmul.mubr.f32.gmra.mrb[0].mxu0 %v2994
        %v3062 = vpop.f32.mrb[0].mxu0
        %v3063 = vadd.f32 %v2991, %v3062
        %v3064 = vpop.f32.mrb[0].mxu0
        %3065 = vdwg.mxu0
        %v3066 = vld [vmem:[%s35] sm:$0xff]
        %v3067 = vld [vmem:[%s35 + $0x8] sm:$0xff]
        %v3068 = vld [vmem:[%s35 + $0x10] sm:$0xff]
        %v3069 = vld [vmem:[%s35 + $0x18] sm:$0xff]
        %v3070 = vld [vmem:[%s37] sm:$0x1]
        %v3071 = vld [vmem:[%s39] sm:$0xff]
        %v3072 = vld [vmem:[%s39 + $0x8] sm:$0xff]
        %v3073 = vld [vmem:[%s39 + $0x10] sm:$0xff]
        %v3074 = vld [vmem:[%s39 + $0x18] sm:$0xff]
        %v3075 = vld [vmem:[%s41] sm:$0x1]
        %v3076 = vld [vmem:[%s43] sm:$0xff]
        %v3077 = vld [vmem:[%s43 + $0x8] sm:$0xff]
        %v3078 = vld [vmem:[%s43 + $0x10] sm:$0xff]
        %v3079 = vld [vmem:[%s43 + $0x18] sm:$0xff]
        %v3080 = vld [vmem:[%s45] sm:$0xff]
        %v3081 = vld [vmem:[%s45 + $0x8] sm:$0xff]
        %v3082 = vld [vmem:[%s45 + $0x10] sm:$0xff]
        %v3083 = vld [vmem:[%s45 + $0x18] sm:$0xff]
        %v3084 = vld [vmem:[%s47] sm:$0x1]
        %v3086 = vlaneseq
        %v3087 = vshrl.u32 %v3086, 7
        %v3088 = vsub.s32 0, %v3087
        %v3089 = vrot.slane %v3070, %v3088
        %v3092 = vsel %vm1380, %v2221, 0
        %3094 = vmatprep.subr.mxu0 0.0
        %3095 = vmatpush1.msra.mxu0 %v3066
        %3096 = vmatprep.subr.mxu0 0.0
        %3097 = vmatpush1.msra.mxu0 %v3067
        %3098 = vmatprep.subr.mxu0 0.0
        %3099 = vmatpush1.msra.mxu0 %v3068
        %3100 = vmatprep.subr.mxu0 0.0
        %3101 = vmatpush1.msra.mxu0 %v3069
        %3102 = vmatprep.subr.mxu0 0.0
        %3103 = vmatpush1.msra.mxu0 0.0
        %3104 = vmatprep.subr.mxu0 0.0
        %3105 = vmatpush1.msra.mxu0 0.0
        %3106 = vmatprep.subr.mxu0 0.0
        %3107 = vmatpush1.msra.mxu0 0.0
        %3108 = vmatprep.subr.mxu0 0.0
        %3109 = vmatpush1.msra.mxu0 0.0
        %3110 = vmatprep.subr.mxu0 0.0
        %3111 = vmatpush1.msra.mxu0 0.0
        %3112 = vmatprep.subr.mxu0 0.0
        %3113 = vmatpush1.msra.mxu0 0.0
        %3114 = vmatprep.subr.mxu0 0.0
        %3115 = vmatpush1.msra.mxu0 0.0
        %3116 = vmatprep.subr.mxu0 0.0
        %3117 = vmatpush1.msra.mxu0 0.0
        %3118 = vmatprep.subr.mxu0 0.0
        %3119 = vmatpush1.msra.mxu0 0.0
        %3120 = vmatprep.subr.mxu0 0.0
        %3121 = vmatpush1.msra.mxu0 0.0
        %3122 = vmatprep.subr.mxu0 0.0
        %3123 = vmatpush1.msra.mxu0 0.0
        %3124 = vmatprep.subr.mxu0 0.0
        %3125 = vmatpush1.msra.mxu0 0.0
        %3126 = vmatprep.subr.mxu0 0.0
        %3127 = vmatpush1.msra.mxu0 0.0
        %3128 = vmatprep.subr.mxu0 0.0
        %3129 = vmatpush1.msra.mxu0 0.0
        %3130 = vmatprep.subr.mxu0 0.0
        %3131 = vmatpush1.msra.mxu0 0.0
        %3132 = vmatprep.subr.mxu0 0.0
        %3133 = vmatpush1.msra.mxu0 0.0
        %3134 = vmatprep.subr.mxu0 0.0
        %3135 = vmatpush1.msra.mxu0 0.0
        %3136 = vmatprep.subr.mxu0 0.0
        %3137 = vmatpush1.msra.mxu0 0.0
        %3138 = vmatprep.subr.mxu0 0.0
        %3139 = vmatpush1.msra.mxu0 0.0
        %3140 = vmatprep.subr.mxu0 0.0
        %3141 = vmatpush1.msra.mxu0 0.0
        %3142 = vmatprep.subr.mxu0 0.0
        %3143 = vmatpush1.msra.mxu0 0.0
        %3144 = vmatprep.subr.mxu0 0.0
        %3145 = vmatpush1.msra.mxu0 0.0
        %3146 = vmatprep.subr.mxu0 0.0
        %3147 = vmatpush1.msra.mxu0 0.0
        %3148 = vmatprep.subr.mxu0 0.0
        %3149 = vmatpush1.msra.mxu0 0.0
        %3150 = vmatprep.subr.mxu0 0.0
        %3151 = vmatpush1.msra.mxu0 0.0
        %3152 = vmatprep.subr.mxu0 0.0
        %3153 = vmatpush1.msra.mxu0 0.0
        %3154 = vmatprep.subr.mxu0 0.0
        %3155 = vmatpush1.msra.mxu0 0.0
        %3156 = vmatprep.subr.mxu0 0.0
        %3157 = vmatpush1.msra.mxu0 0.0
        %3158 = vmatprep.mubr.f32.mxu0 0.0
        %3159 = vmatmul.mubr.f32.gmra.mrb[0].mxu0 %v3092
        %v3160 = vpop.f32.mrb[0].mxu0
        %v3161 = vadd.f32 %v3089, %v3160
        %v3162 = vpop.f32.mrb[0].mxu0
        %3163 = vdwg.mxu0
        %v3165 = vsel %vm1380, %v3161, 0
        %3167 = vmatprep.subr.mxu0 0.0
        %3168 = vmatpush1.msra.mxu0 %v3076
        %3169 = vmatprep.subr.mxu0 0.0
        %3170 = vmatpush1.msra.mxu0 %v3077
        %3171 = vmatprep.subr.mxu0 0.0
        %3172 = vmatpush1.msra.mxu0 %v3078
        %3173 = vmatprep.subr.mxu0 0.0
        %3174 = vmatpush1.msra.mxu0 %v3079
        %3175 = vmatprep.subr.mxu0 0.0
        %3176 = vmatpush1.msra.mxu0 0.0
        %3177 = vmatprep.subr.mxu0 0.0
        %3178 = vmatpush1.msra.mxu0 0.0
        %3179 = vmatprep.subr.mxu0 0.0
        %3180 = vmatpush1.msra.mxu0 0.0
        %3181 = vmatprep.subr.mxu0 0.0
        %3182 = vmatpush1.msra.mxu0 0.0
        %3183 = vmatprep.subr.mxu0 0.0
        %3184 = vmatpush1.msra.mxu0 0.0
        %3185 = vmatprep.subr.mxu0 0.0
        %3186 = vmatpush1.msra.mxu0 0.0
        %3187 = vmatprep.subr.mxu0 0.0
        %3188 = vmatpush1.msra.mxu0 0.0
        %3189 = vmatprep.subr.mxu0 0.0
        %3190 = vmatpush1.msra.mxu0 0.0
        %3191 = vmatprep.subr.mxu0 0.0
        %3192 = vmatpush1.msra.mxu0 0.0
        %3193 = vmatprep.subr.mxu0 0.0
        %3194 = vmatpush1.msra.mxu0 0.0
        %3195 = vmatprep.subr.mxu0 0.0
        %3196 = vmatpush1.msra.mxu0 0.0
        %3197 = vmatprep.subr.mxu0 0.0
        %3198 = vmatpush1.msra.mxu0 0.0
        %3199 = vmatprep.subr.mxu0 0.0
        %3200 = vmatpush1.msra.mxu0 0.0
        %3201 = vmatprep.subr.mxu0 0.0
        %3202 = vmatpush1.msra.mxu0 0.0
        %3203 = vmatprep.subr.mxu0 0.0
        %3204 = vmatpush1.msra.mxu0 0.0
        %3205 = vmatprep.subr.mxu0 0.0
        %3206 = vmatpush1.msra.mxu0 0.0
        %3207 = vmatprep.subr.mxu0 0.0
        %3208 = vmatpush1.msra.mxu0 0.0
        %3209 = vmatprep.subr.mxu0 0.0
        %3210 = vmatpush1.msra.mxu0 0.0
        %3211 = vmatprep.subr.mxu0 0.0
        %3212 = vmatpush1.msra.mxu0 0.0
        %3213 = vmatprep.subr.mxu0 0.0
        %3214 = vmatpush1.msra.mxu0 0.0
        %3215 = vmatprep.subr.mxu0 0.0
        %3216 = vmatpush1.msra.mxu0 0.0
        %3217 = vmatprep.subr.mxu0 0.0
        %3218 = vmatpush1.msra.mxu0 0.0
        %3219 = vmatprep.subr.mxu0 0.0
        %3220 = vmatpush1.msra.mxu0 0.0
        %3221 = vmatprep.subr.mxu0 0.0
        %3222 = vmatpush1.msra.mxu0 0.0
        %3223 = vmatprep.subr.mxu0 0.0
        %3224 = vmatpush1.msra.mxu0 0.0
        %3225 = vmatprep.subr.mxu0 0.0
        %3226 = vmatpush1.msra.mxu0 0.0
        %3227 = vmatprep.subr.mxu0 0.0
        %3228 = vmatpush1.msra.mxu0 0.0
        %3229 = vmatprep.subr.mxu0 0.0
        %3230 = vmatpush1.msra.mxu0 0.0
        %3231 = vmatprep.mubr.f32.mxu0 0.0
        %3232 = vmatmul.mubr.f32.gmra.mrb[0].mxu0 %v3165
        %v3233 = vpop.f32.mrb[0].mxu0
        %v3234 = vadd.f32 0.0, %v3233
        %v3235 = vpop.f32.mrb[0].mxu0
        %3236 = vdwg.mxu0
        %v3237 = vmul.f32 %v3234, %v1329
        %v3238 = vsel %vm1528, %v3237, 0.0
        %v3239 = vrot.slane %v3238, 4
        %v3240 = vadd.f32 %v3238, %v3239
        %v3241 = vrot.slane %v3240, 2
        %v3242 = vadd.f32 %v3240, %v3241
        %v3243 = vrot.slane %v3242, 1
        %v3244 = vadd.f32 %v3242, %v3243
        %v3246 = vlaneseq
        %v3247 = vshrl.u32 %v3246, 7
        %v3248 = vsub.s32 0, %v3247
        %v3249 = vrot.slane %v3075, %v3248
        %v3252 = vsel %vm1380, %v3063, 0
        %3254 = vmatprep.subr.mxu0 0.0
        %3255 = vmatpush1.msra.mxu0 %v3071
        %3256 = vmatprep.subr.mxu0 0.0
        %3257 = vmatpush1.msra.mxu0 %v3072
        %3258 = vmatprep.subr.mxu0 0.0
        %3259 = vmatpush1.msra.mxu0 %v3073
        %3260 = vmatprep.subr.mxu0 0.0
        %3261 = vmatpush1.msra.mxu0 %v3074
        %3262 = vmatprep.subr.mxu0 0.0
        %3263 = vmatpush1.msra.mxu0 0.0
        %3264 = vmatprep.subr.mxu0 0.0
        %3265 = vmatpush1.msra.mxu0 0.0
        %3266 = vmatprep.subr.mxu0 0.0
        %3267 = vmatpush1.msra.mxu0 0.0
        %3268 = vmatprep.subr.mxu0 0.0
        %3269 = vmatpush1.msra.mxu0 0.0
        %3270 = vmatprep.subr.mxu0 0.0
        %3271 = vmatpush1.msra.mxu0 0.0
        %3272 = vmatprep.subr.mxu0 0.0
        %3273 = vmatpush1.msra.mxu0 0.0
        %3274 = vmatprep.subr.mxu0 0.0
        %3275 = vmatpush1.msra.mxu0 0.0
        %3276 = vmatprep.subr.mxu0 0.0
        %3277 = vmatpush1.msra.mxu0 0.0
        %3278 = vmatprep.subr.mxu0 0.0
        %3279 = vmatpush1.msra.mxu0 0.0
        %3280 = vmatprep.subr.mxu0 0.0
        %3281 = vmatpush1.msra.mxu0 0.0
        %3282 = vmatprep.subr.mxu0 0.0
        %3283 = vmatpush1.msra.mxu0 0.0
        %3284 = vmatprep.subr.mxu0 0.0
        %3285 = vmatpush1.msra.mxu0 0.0
        %3286 = vmatprep.subr.mxu0 0.0
        %3287 = vmatpush1.msra.mxu0 0.0
        %3288 = vmatprep.subr.mxu0 0.0
        %3289 = vmatpush1.msra.mxu0 0.0
        %3290 = vmatprep.subr.mxu0 0.0
        %3291 = vmatpush1.msra.mxu0 0.0
        %3292 = vmatprep.subr.mxu0 0.0
        %3293 = vmatpush1.msra.mxu0 0.0
        %3294 = vmatprep.subr.mxu0 0.0
        %3295 = vmatpush1.msra.mxu0 0.0
        %3296 = vmatprep.subr.mxu0 0.0
        %3297 = vmatpush1.msra.mxu0 0.0
        %3298 = vmatprep.subr.mxu0 0.0
        %3299 = vmatpush1.msra.mxu0 0.0
        %3300 = vmatprep.subr.mxu0 0.0
        %3301 = vmatpush1.msra.mxu0 0.0
        %3302 = vmatprep.subr.mxu0 0.0
        %3303 = vmatpush1.msra.mxu0 0.0
        %3304 = vmatprep.subr.mxu0 0.0
        %3305 = vmatpush1.msra.mxu0 0.0
        %3306 = vmatprep.subr.mxu0 0.0
        %3307 = vmatpush1.msra.mxu0 0.0
        %3308 = vmatprep.subr.mxu0 0.0
        %3309 = vmatpush1.msra.mxu0 0.0
        %3310 = vmatprep.subr.mxu0 0.0
        %3311 = vmatpush1.msra.mxu0 0.0
        %3312 = vmatprep.subr.mxu0 0.0
        %3313 = vmatpush1.msra.mxu0 0.0
        %3314 = vmatprep.subr.mxu0 0.0
        %3315 = vmatpush1.msra.mxu0 0.0
        %3316 = vmatprep.subr.mxu0 0.0
        %3317 = vmatpush1.msra.mxu0 0.0
        %3318 = vmatprep.mubr.f32.mxu0 0.0
        %3319 = vmatmul.mubr.f32.gmra.mrb[0].mxu0 %v3252
        %v3320 = vpop.f32.mrb[0].mxu0
        %v3321 = vadd.f32 %v3249, %v3320
        %v3322 = vpop.f32.mrb[0].mxu0
        %3323 = vdwg.mxu0
        %v3324 = vadd.f32 %v3321, %v3244
        %v3325 = vtanh.pop %v3324
        %v3326 = vmul.f32 %v3325, 1.442695
        %v3327 = vpow.pop %v3326
        %v3329 = vsel %vm1528, %v3327, 0
        %3331 = vmatprep.subr.mxu0 0.0
        %3332 = vmatpush1.msra.mxu0 %v1331
        %3333 = vmatprep.subr.mxu0 0.0
        %3334 = vmatpush1.msra.mxu0 %v1332
        %3335 = vmatprep.subr.mxu0 0.0
        %3336 = vmatpush1.msra.mxu0 %v1333
        %3337 = vmatprep.subr.mxu0 0.0
        %3338 = vmatpush1.msra.mxu0 %v1334
        %3339 = vmatprep.subr.mxu0 0.0
        %3340 = vmatpush1.msra.mxu0 %v1335
        %3341 = vmatprep.subr.mxu0 0.0
        %3342 = vmatpush1.msra.mxu0 %v1336
        %3343 = vmatprep.subr.mxu0 0.0
        %3344 = vmatpush1.msra.mxu0 %v1337
        %3345 = vmatprep.subr.mxu0 0.0
        %3346 = vmatpush1.msra.mxu0 %v1338
        %3347 = vmatprep.subr.mxu0 0.0
        %3348 = vmatpush1.msra.mxu0 0.0
        %3349 = vmatprep.subr.mxu0 0.0
        %3350 = vmatpush1.msra.mxu0 0.0
        %3351 = vmatprep.subr.mxu0 0.0
        %3352 = vmatpush1.msra.mxu0 0.0
        %3353 = vmatprep.subr.mxu0 0.0
        %3354 = vmatpush1.msra.mxu0 0.0
        %3355 = vmatprep.subr.mxu0 0.0
        %3356 = vmatpush1.msra.mxu0 0.0
        %3357 = vmatprep.subr.mxu0 0.0
        %3358 = vmatpush1.msra.mxu0 0.0
        %3359 = vmatprep.subr.mxu0 0.0
        %3360 = vmatpush1.msra.mxu0 0.0
        %3361 = vmatprep.subr.mxu0 0.0
        %3362 = vmatpush1.msra.mxu0 0.0
        %3363 = vmatprep.subr.mxu0 0.0
        %3364 = vmatpush1.msra.mxu0 0.0
        %3365 = vmatprep.subr.mxu0 0.0
        %3366 = vmatpush1.msra.mxu0 0.0
        %3367 = vmatprep.subr.mxu0 0.0
        %3368 = vmatpush1.msra.mxu0 0.0
        %3369 = vmatprep.subr.mxu0 0.0
        %3370 = vmatpush1.msra.mxu0 0.0
        %3371 = vmatprep.subr.mxu0 0.0
        %3372 = vmatpush1.msra.mxu0 0.0
        %3373 = vmatprep.subr.mxu0 0.0
        %3374 = vmatpush1.msra.mxu0 0.0
        %3375 = vmatprep.subr.mxu0 0.0
        %3376 = vmatpush1.msra.mxu0 0.0
        %3377 = vmatprep.subr.mxu0 0.0
        %3378 = vmatpush1.msra.mxu0 0.0
        %3379 = vmatprep.subr.mxu0 0.0
        %3380 = vmatpush1.msra.mxu0 0.0
        %3381 = vmatprep.subr.mxu0 0.0
        %3382 = vmatpush1.msra.mxu0 0.0
        %3383 = vmatprep.subr.mxu0 0.0
        %3384 = vmatpush1.msra.mxu0 0.0
        %3385 = vmatprep.subr.mxu0 0.0
        %3386 = vmatpush1.msra.mxu0 0.0
        %3387 = vmatprep.subr.mxu0 0.0
        %3388 = vmatpush1.msra.mxu0 0.0
        %3389 = vmatprep.subr.mxu0 0.0
        %3390 = vmatpush1.msra.mxu0 0.0
        %3391 = vmatprep.subr.mxu0 0.0
        %3392 = vmatpush1.msra.mxu0 0.0
        %3393 = vmatprep.subr.mxu0 0.0
        %3394 = vmatpush1.msra.mxu0 0.0
        %3395 = vmatprep.mubr.f32.mxu0 0.0
        %3396 = vmatmul.mubr.f32.gmra.mrb[0].mxu0 %v3329
        %v3397 = vpop.f32.mrb[0].mxu0
        %v3398 = vadd.f32 0.0, %v3397
        %v3399 = vpop.f32.mrb[0].mxu0
        %3400 = vdwg.mxu0
        %v3401 = vrcp.pop %v3398
        %v3402 = vmul.f32 1.0, %v3401
        %v3404 = vsel %vm1691, %v3402, 0
        %3406 = vmatprep.subr.mxu0 0.0
        %3407 = vmatpush1.msra.mxu0 %v1330
        %3408 = vmatprep.subr.mxu0 0.0
        %3409 = vmatpush1.msra.mxu0 0.0
        %3410 = vmatprep.subr.mxu0 0.0
        %3411 = vmatpush1.msra.mxu0 0.0
        %3412 = vmatprep.subr.mxu0 0.0
        %3413 = vmatpush1.msra.mxu0 0.0
        %3414 = vmatprep.subr.mxu0 0.0
        %3415 = vmatpush1.msra.mxu0 0.0
        %3416 = vmatprep.subr.mxu0 0.0
        %3417 = vmatpush1.msra.mxu0 0.0
        %3418 = vmatprep.subr.mxu0 0.0
        %3419 = vmatpush1.msra.mxu0 0.0
        %3420 = vmatprep.subr.mxu0 0.0
        %3421 = vmatpush1.msra.mxu0 0.0
        %3422 = vmatprep.subr.mxu0 0.0
        %3423 = vmatpush1.msra.mxu0 0.0
        %3424 = vmatprep.subr.mxu0 0.0
        %3425 = vmatpush1.msra.mxu0 0.0
        %3426 = vmatprep.subr.mxu0 0.0
        %3427 = vmatpush1.msra.mxu0 0.0
        %3428 = vmatprep.subr.mxu0 0.0
        %3429 = vmatpush1.msra.mxu0 0.0
        %3430 = vmatprep.subr.mxu0 0.0
        %3431 = vmatpush1.msra.mxu0 0.0
        %3432 = vmatprep.subr.mxu0 0.0
        %3433 = vmatpush1.msra.mxu0 0.0
        %3434 = vmatprep.subr.mxu0 0.0
        %3435 = vmatpush1.msra.mxu0 0.0
        %3436 = vmatprep.subr.mxu0 0.0
        %3437 = vmatpush1.msra.mxu0 0.0
        %3438 = vmatprep.subr.mxu0 0.0
        %3439 = vmatpush1.msra.mxu0 0.0
        %3440 = vmatprep.subr.mxu0 0.0
        %3441 = vmatpush1.msra.mxu0 0.0
        %3442 = vmatprep.subr.mxu0 0.0
        %3443 = vmatpush1.msra.mxu0 0.0
        %3444 = vmatprep.subr.mxu0 0.0
        %3445 = vmatpush1.msra.mxu0 0.0
        %3446 = vmatprep.subr.mxu0 0.0
        %3447 = vmatpush1.msra.mxu0 0.0
        %3448 = vmatprep.subr.mxu0 0.0
        %3449 = vmatpush1.msra.mxu0 0.0
        %3450 = vmatprep.subr.mxu0 0.0
        %3451 = vmatpush1.msra.mxu0 0.0
        %3452 = vmatprep.subr.mxu0 0.0
        %3453 = vmatpush1.msra.mxu0 0.0
        %3454 = vmatprep.subr.mxu0 0.0
        %3455 = vmatpush1.msra.mxu0 0.0
        %3456 = vmatprep.subr.mxu0 0.0
        %3457 = vmatpush1.msra.mxu0 0.0
        %3458 = vmatprep.subr.mxu0 0.0
        %3459 = vmatpush1.msra.mxu0 0.0
        %3460 = vmatprep.subr.mxu0 0.0
        %3461 = vmatpush1.msra.mxu0 0.0
        %3462 = vmatprep.subr.mxu0 0.0
        %3463 = vmatpush1.msra.mxu0 0.0
        %3464 = vmatprep.subr.mxu0 0.0
        %3465 = vmatpush1.msra.mxu0 0.0
        %3466 = vmatprep.subr.mxu0 0.0
        %3467 = vmatpush1.msra.mxu0 0.0
        %3468 = vmatprep.subr.mxu0 0.0
        %3469 = vmatpush1.msra.mxu0 0.0
        %3470 = vmatprep.mubr.f32.mxu0 0.0
        %3471 = vmatmul.mubr.f32.gmra.mrb[0].mxu0 %v3404
        %v3472 = vpop.f32.mrb[0].mxu0
        %v3473 = vadd.f32 0.0, %v3472
        %v3474 = vpop.f32.mrb[0].mxu0
        %3475 = vdwg.mxu0
        %v3476 = vmul.f32 %v3327, %v3473
        %3477 = vmatprep.subr.mxu0 0.0
        %3478 = vmatpush1.msra.mxu0 %v3161
        %3479 = vmatprep.subr.mxu0 0.0
        %3480 = vmatpush1.msra.mxu0 0.0
        %3481 = vmatprep.subr.mxu0 0.0
        %3482 = vmatpush1.msra.mxu0 0.0
        %3483 = vmatprep.subr.mxu0 0.0
        %3484 = vmatpush1.msra.mxu0 0.0
        %3485 = vmatprep.subr.mxu0 0.0
        %3486 = vmatpush1.msra.mxu0 0.0
        %3487 = vmatprep.subr.mxu0 0.0
        %3488 = vmatpush1.msra.mxu0 0.0
        %3489 = vmatprep.subr.mxu0 0.0
        %3490 = vmatpush1.msra.mxu0 0.0
        %3491 = vmatprep.subr.mxu0 0.0
        %3492 = vmatpush1.msra.mxu0 0.0
        %3493 = vmatprep.subr.mxu0 0.0
        %3494 = vmatpush1.msra.mxu0 0.0
        %3495 = vmatprep.subr.mxu0 0.0
        %3496 = vmatpush1.msra.mxu0 0.0
        %3497 = vmatprep.subr.mxu0 0.0
        %3498 = vmatpush1.msra.mxu0 0.0
        %3499 = vmatprep.subr.mxu0 0.0
        %3500 = vmatpush1.msra.mxu0 0.0
        %3501 = vmatprep.subr.mxu0 0.0
        %3502 = vmatpush1.msra.mxu0 0.0
        %3503 = vmatprep.subr.mxu0 0.0
        %3504 = vmatpush1.msra.mxu0 0.0
        %3505 = vmatprep.subr.mxu0 0.0
        %3506 = vmatpush1.msra.mxu0 0.0
        %3507 = vmatprep.subr.mxu0 0.0
        %3508 = vmatpush1.msra.mxu0 0.0
        %3509 = vmatprep.subr.mxu0 0.0
        %3510 = vmatpush1.msra.mxu0 0.0
        %3511 = vmatprep.subr.mxu0 0.0
        %3512 = vmatpush1.msra.mxu0 0.0
        %3513 = vmatprep.subr.mxu0 0.0
        %3514 = vmatpush1.msra.mxu0 0.0
        %3515 = vmatprep.subr.mxu0 0.0
        %3516 = vmatpush1.msra.mxu0 0.0
        %3517 = vmatprep.subr.mxu0 0.0
        %3518 = vmatpush1.msra.mxu0 0.0
        %3519 = vmatprep.subr.mxu0 0.0
        %3520 = vmatpush1.msra.mxu0 0.0
        %3521 = vmatprep.subr.mxu0 0.0
        %3522 = vmatpush1.msra.mxu0 0.0
        %3523 = vmatprep.subr.mxu0 0.0
        %3524 = vmatpush1.msra.mxu0 0.0
        %3525 = vmatprep.subr.mxu0 0.0
        %3526 = vmatpush1.msra.mxu0 0.0
        %3527 = vmatprep.subr.mxu0 0.0
        %3528 = vmatpush1.msra.mxu0 0.0
        %3529 = vmatprep.subr.mxu0 0.0
        %3530 = vmatpush1.msra.mxu0 0.0
        %3531 = vmatprep.subr.mxu0 0.0
        %3532 = vmatpush1.msra.mxu0 0.0
        %3533 = vmatprep.subr.mxu0 0.0
        %3534 = vmatpush1.msra.mxu0 0.0
        %3535 = vmatprep.subr.mxu0 0.0
        %3536 = vmatpush1.msra.mxu0 0.0
        %3537 = vmatprep.subr.mxu0 0.0
        %3538 = vmatpush1.msra.mxu0 0.0
        %3539 = vmatprep.subr.mxu0 0.0
        %3540 = vmatpush1.msra.mxu0 0.0
        %3541 = vmatprep.mubr.f32.mxu0 0.0
        %3542 = vmatmul.mubr.f32.gmra.mrb[0].mxu0 %v1767
        %v3543 = vpop.f32.mrb[0].mxu0
        %v3544 = vadd.f32 0.0, %v3543
        %v3545 = vpop.f32.mrb[0].mxu0
        %3546 = vmatprep.mubr.f32.mxu0 0.0
        %3547 = vmatmul.mubr.f32.gmra.mrb[0].mxu0 %v1770
        %v3548 = vpop.f32.mrb[0].mxu0
        %v3549 = vadd.f32 0.0, %v3548
        %v3550 = vpop.f32.mrb[0].mxu0
        %3551 = vmatprep.mubr.f32.mxu0 0.0
        %3552 = vmatmul.mubr.f32.gmra.mrb[0].mxu0 %v1773
        %v3553 = vpop.f32.mrb[0].mxu0
        %v3554 = vadd.f32 0.0, %v3553
        %v3555 = vpop.f32.mrb[0].mxu0
        %3556 = vmatprep.mubr.f32.mxu0 0.0
        %3557 = vmatmul.mubr.f32.gmra.mrb[0].mxu0 %v1776
        %v3558 = vpop.f32.mrb[0].mxu0
        %v3559 = vadd.f32 0.0, %v3558
        %v3560 = vpop.f32.mrb[0].mxu0
        %3561 = vmatprep.mubr.f32.mxu0 0.0
        %3562 = vmatmul.mubr.f32.gmra.mrb[0].mxu0 %v1779
        %v3563 = vpop.f32.mrb[0].mxu0
        %v3564 = vadd.f32 0.0, %v3563
        %v3565 = vpop.f32.mrb[0].mxu0
        %3566 = vmatprep.mubr.f32.mxu0 0.0
        %3567 = vmatmul.mubr.f32.gmra.mrb[0].mxu0 %v1782
        %v3568 = vpop.f32.mrb[0].mxu0
        %v3569 = vadd.f32 0.0, %v3568
        %v3570 = vpop.f32.mrb[0].mxu0
        %3571 = vmatprep.mubr.f32.mxu0 0.0
        %3572 = vmatmul.mubr.f32.gmra.mrb[0].mxu0 %v1785
        %v3573 = vpop.f32.mrb[0].mxu0
        %v3574 = vadd.f32 0.0, %v3573
        %v3575 = vpop.f32.mrb[0].mxu0
        %3576 = vmatprep.mubr.f32.mxu0 0.0
        %3577 = vmatmul.mubr.f32.gmra.mrb[0].mxu0 %v1788
        %v3578 = vpop.f32.mrb[0].mxu0
        %v3579 = vadd.f32 0.0, %v3578
        %v3580 = vpop.f32.mrb[0].mxu0
        %3581 = vdwg.mxu0
        %v3582 = vmul.f32 %v3544, %v1347
        %v3583 = vmul.f32 %v3549, %v1348
        %v3584 = vmul.f32 %v3554, %v1349
        %v3585 = vmul.f32 %v3559, %v1350
        %v3586 = vmul.f32 %v3564, %v1351
        %v3587 = vmul.f32 %v3569, %v1352
        %v3588 = vmul.f32 %v3574, %v1353
        %v3589 = vmul.f32 %v3579, %v1354
        %v3591 = vsel %vm1528, %v3476, 0
        %3593 = vmatprep.subr.mxu0 0.0
        %3594 = vmatpush1.msra.mxu0 %v3582
        %3595 = vmatprep.subr.mxu0 0.0
        %3596 = vmatpush1.msra.mxu0 %v3583
        %3597 = vmatprep.subr.mxu0 0.0
        %3598 = vmatpush1.msra.mxu0 %v3584
        %3599 = vmatprep.subr.mxu0 0.0
        %3600 = vmatpush1.msra.mxu0 %v3585
        %3601 = vmatprep.subr.mxu0 0.0
        %3602 = vmatpush1.msra.mxu0 %v3586
        %3603 = vmatprep.subr.mxu0 0.0
        %3604 = vmatpush1.msra.mxu0 %v3587
        %3605 = vmatprep.subr.mxu0 0.0
        %3606 = vmatpush1.msra.mxu0 %v3588
        %3607 = vmatprep.subr.mxu0 0.0
        %3608 = vmatpush1.msra.mxu0 %v3589
        %3609 = vmatprep.subr.mxu0 0.0
        %3610 = vmatpush1.msra.mxu0 0.0
        %3611 = vmatprep.subr.mxu0 0.0
        %3612 = vmatpush1.msra.mxu0 0.0
        %3613 = vmatprep.subr.mxu0 0.0
        %3614 = vmatpush1.msra.mxu0 0.0
        %3615 = vmatprep.subr.mxu0 0.0
        %3616 = vmatpush1.msra.mxu0 0.0
        %3617 = vmatprep.subr.mxu0 0.0
        %3618 = vmatpush1.msra.mxu0 0.0
        %3619 = vmatprep.subr.mxu0 0.0
        %3620 = vmatpush1.msra.mxu0 0.0
        %3621 = vmatprep.subr.mxu0 0.0
        %3622 = vmatpush1.msra.mxu0 0.0
        %3623 = vmatprep.subr.mxu0 0.0
        %3624 = vmatpush1.msra.mxu0 0.0
        %3625 = vmatprep.subr.mxu0 0.0
        %3626 = vmatpush1.msra.mxu0 0.0
        %3627 = vmatprep.subr.mxu0 0.0
        %3628 = vmatpush1.msra.mxu0 0.0
        %3629 = vmatprep.subr.mxu0 0.0
        %3630 = vmatpush1.msra.mxu0 0.0
        %3631 = vmatprep.subr.mxu0 0.0
        %3632 = vmatpush1.msra.mxu0 0.0
        %3633 = vmatprep.subr.mxu0 0.0
        %3634 = vmatpush1.msra.mxu0 0.0
        %3635 = vmatprep.subr.mxu0 0.0
        %3636 = vmatpush1.msra.mxu0 0.0
        %3637 = vmatprep.subr.mxu0 0.0
        %3638 = vmatpush1.msra.mxu0 0.0
        %3639 = vmatprep.subr.mxu0 0.0
        %3640 = vmatpush1.msra.mxu0 0.0
        %3641 = vmatprep.subr.mxu0 0.0
        %3642 = vmatpush1.msra.mxu0 0.0
        %3643 = vmatprep.subr.mxu0 0.0
        %3644 = vmatpush1.msra.mxu0 0.0
        %3645 = vmatprep.subr.mxu0 0.0
        %3646 = vmatpush1.msra.mxu0 0.0
        %3647 = vmatprep.subr.mxu0 0.0
        %3648 = vmatpush1.msra.mxu0 0.0
        %3649 = vmatprep.subr.mxu0 0.0
        %3650 = vmatpush1.msra.mxu0 0.0
        %3651 = vmatprep.subr.mxu0 0.0
        %3652 = vmatpush1.msra.mxu0 0.0
        %3653 = vmatprep.subr.mxu0 0.0
        %3654 = vmatpush1.msra.mxu0 0.0
        %3655 = vmatprep.subr.mxu0 0.0
        %3656 = vmatpush1.msra.mxu0 0.0
        %3657 = vmatprep.mubr.f32.mxu0 0.0
        %3658 = vmatmul.mubr.f32.gmra.mrb[0].mxu0 %v3591
        %v3659 = vpop.f32.mrb[0].mxu0
        %v3660 = vadd.f32 0.0, %v3659
        %v3661 = vpop.f32.mrb[0].mxu0
        %3662 = vdwg.mxu0
        %v3664 = vlaneseq
        %v3665 = vshrl.u32 %v3664, 7
        %v3666 = vsub.s32 0, %v3665
        %v3667 = vrot.slane %v3084, %v3666
        %v3670 = vsel %vm1380, %v3660, 0
        %3672 = vmatprep.subr.mxu0 0.0
        %3673 = vmatpush1.msra.mxu0 %v3080
        %3674 = vmatprep.subr.mxu0 0.0
        %3675 = vmatpush1.msra.mxu0 %v3081
        %3676 = vmatprep.subr.mxu0 0.0
        %3677 = vmatpush1.msra.mxu0 %v3082
        %3678 = vmatprep.subr.mxu0 0.0
        %3679 = vmatpush1.msra.mxu0 %v3083
        %3680 = vmatprep.subr.mxu0 0.0
        %3681 = vmatpush1.msra.mxu0 0.0
        %3682 = vmatprep.subr.mxu0 0.0
        %3683 = vmatpush1.msra.mxu0 0.0
        %3684 = vmatprep.subr.mxu0 0.0
        %3685 = vmatpush1.msra.mxu0 0.0
        %3686 = vmatprep.subr.mxu0 0.0
        %3687 = vmatpush1.msra.mxu0 0.0
        %3688 = vmatprep.subr.mxu0 0.0
        %3689 = vmatpush1.msra.mxu0 0.0
        %3690 = vmatprep.subr.mxu0 0.0
        %3691 = vmatpush1.msra.mxu0 0.0
        %3692 = vmatprep.subr.mxu0 0.0
        %3693 = vmatpush1.msra.mxu0 0.0
        %3694 = vmatprep.subr.mxu0 0.0
        %3695 = vmatpush1.msra.mxu0 0.0
        %3696 = vmatprep.subr.mxu0 0.0
        %3697 = vmatpush1.msra.mxu0 0.0
        %3698 = vmatprep.subr.mxu0 0.0
        %3699 = vmatpush1.msra.mxu0 0.0
        %3700 = vmatprep.subr.mxu0 0.0
        %3701 = vmatpush1.msra.mxu0 0.0
        %3702 = vmatprep.subr.mxu0 0.0
        %3703 = vmatpush1.msra.mxu0 0.0
        %3704 = vmatprep.subr.mxu0 0.0
        %3705 = vmatpush1.msra.mxu0 0.0
        %3706 = vmatprep.subr.mxu0 0.0
        %3707 = vmatpush1.msra.mxu0 0.0
        %3708 = vmatprep.subr.mxu0 0.0
        %3709 = vmatpush1.msra.mxu0 0.0
        %3710 = vmatprep.subr.mxu0 0.0
        %3711 = vmatpush1.msra.mxu0 0.0
        %3712 = vmatprep.subr.mxu0 0.0
        %3713 = vmatpush1.msra.mxu0 0.0
        %3714 = vmatprep.subr.mxu0 0.0
        %3715 = vmatpush1.msra.mxu0 0.0
        %3716 = vmatprep.subr.mxu0 0.0
        %3717 = vmatpush1.msra.mxu0 0.0
        %3718 = vmatprep.subr.mxu0 0.0
        %3719 = vmatpush1.msra.mxu0 0.0
        %3720 = vmatprep.subr.mxu0 0.0
        %3721 = vmatpush1.msra.mxu0 0.0
        %3722 = vmatprep.subr.mxu0 0.0
        %3723 = vmatpush1.msra.mxu0 0.0
        %3724 = vmatprep.subr.mxu0 0.0
        %3725 = vmatpush1.msra.mxu0 0.0
        %3726 = vmatprep.subr.mxu0 0.0
        %3727 = vmatpush1.msra.mxu0 0.0
        %3728 = vmatprep.subr.mxu0 0.0
        %3729 = vmatpush1.msra.mxu0 0.0
        %3730 = vmatprep.subr.mxu0 0.0
        %3731 = vmatpush1.msra.mxu0 0.0
        %3732 = vmatprep.subr.mxu0 0.0
        %3733 = vmatpush1.msra.mxu0 0.0
        %3734 = vmatprep.subr.mxu0 0.0
        %3735 = vmatpush1.msra.mxu0 0.0
        %3736 = vmatprep.mubr.f32.mxu0 0.0
        %3737 = vmatmul.mubr.f32.gmra.mrb[0].mxu0 %v3670
        %v3738 = vpop.f32.mrb[0].mxu0
        %v3739 = vadd.f32 %v3667, %v3738
        %v3740 = vpop.f32.mrb[0].mxu0
        %3741 = vdwg.mxu0
        %v3742 = vld [vmem:[%s1326] sm:$0x1]
        %v3743 = vsel %vm1380, %v2221, 0.0
        %v3744 = vrot.slane %v3743, 4
        %v3745 = vadd.f32 %v3743, %v3744
        %v3746 = vrot.slane %v3745, 2
        %v3747 = vadd.f32 %v3745, %v3746
        %v3748 = vrot.slane %v3747, 1
        %v3749 = vadd.f32 %v3747, %v3748
        %3751 = vset.pattern.permute.xlu0 0
        %3752 = vperm.xlu0 %3751, %v3742
        %v3753 = vpop.permute.xlu0 %3752
        %v3755 = vlaneseq
        %v3756 = vshrl.u32 %v3755, 7
        %v3757 = vsub.s32 0, %v3756
        %v3758 = vrot.slane %v3753, %v3757
        %v3759 = vmul.f32 %v3749, %v3758
        %vm3760 = vcmask 257024
        %v3761 = vsel %vm3760, %v3063, 0.0
        %v3762 = vrot.slane %v3761, 4
        %v3763 = vadd.f32 %v3761, %v3762
        %v3764 = vrot.slane %v3763, 2
        %v3765 = vadd.f32 %v3763, %v3764
        %v3766 = vrot.slane %v3765, 1
        %v3767 = vadd.f32 %v3765, %v3766
        %3768 = vset.pattern.permute.xlu0 1
        %3769 = vperm.xlu0 %3768, %v3742
        %v3770 = vpop.permute.xlu0 %3769
        %v3772 = vlaneseq
        %v3773 = vshrl.u32 %v3772, 7
        %v3774 = vsub.s32 0, %v3773
        %v3775 = vrot.slane %v3770, %v3774
        %v3776 = vmul.f32 %v3767, %v3775
        %v3777 = vsel %vm3760, %v3739, 0.0
        %v3778 = vrot.slane %v3777, 4
        %v3779 = vadd.f32 %v3777, %v3778
        %v3780 = vrot.slane %v3779, 2
        %v3781 = vadd.f32 %v3779, %v3780
        %v3782 = vrot.slane %v3781, 1
        %v3783 = vadd.f32 %v3781, %v3782
        %v3784 = vmul.f32 %v3783, %v3758
        %v3785 = vld [vmem:[%s75] sm:$0xff]
        %v3786 = vld [vmem:[%s75 + $0x8] sm:$0xff]
        %v3787 = vld [vmem:[%s75 + $0x10] sm:$0xff]
        %v3788 = vld [vmem:[%s75 + $0x18] sm:$0xff]
        %v3789 = vld [vmem:[%s77] sm:$0xff]
        %v3790 = vld [vmem:[%s77 + $0x8] sm:$0xff]
        %v3791 = vld [vmem:[%s77 + $0x10] sm:$0xff]
        %v3792 = vld [vmem:[%s77 + $0x18] sm:$0xff]
        %v3794 = vsel %vm1380, %v3784, 0
        %3796 = vmatprep.subr.mxu0 0.0
        %3797 = vmatpush1.msra.mxu0 %v3789
        %3798 = vmatprep.subr.mxu0 0.0
        %3799 = vmatpush1.msra.mxu0 %v3790
        %3800 = vmatprep.subr.mxu0 0.0
        %3801 = vmatpush1.msra.mxu0 %v3791
        %3802 = vmatprep.subr.mxu0 0.0
        %3803 = vmatpush1.msra.mxu0 %v3792
        %3804 = vmatprep.subr.mxu0 0.0
        %3805 = vmatpush1.msra.mxu0 0.0
        %3806 = vmatprep.subr.mxu0 0.0
        %3807 = vmatpush1.msra.mxu0 0.0
        %3808 = vmatprep.subr.mxu0 0.0
        %3809 = vmatpush1.msra.mxu0 0.0
        %3810 = vmatprep.subr.mxu0 0.0
        %3811 = vmatpush1.msra.mxu0 0.0
        %3812 = vmatprep.subr.mxu0 0.0
        %3813 = vmatpush1.msra.mxu0 0.0
        %3814 = vmatprep.subr.mxu0 0.0
        %3815 = vmatpush1.msra.mxu0 0.0
        %3816 = vmatprep.subr.mxu0 0.0
        %3817 = vmatpush1.msra.mxu0 0.0
        %3818 = vmatprep.subr.mxu0 0.0
        %3819 = vmatpush1.msra.mxu0 0.0
        %3820 = vmatprep.subr.mxu0 0.0
        %3821 = vmatpush1.msra.mxu0 0.0
        %3822 = vmatprep.subr.mxu0 0.0
        %3823 = vmatpush1.msra.mxu0 0.0
        %3824 = vmatprep.subr.mxu0 0.0
        %3825 = vmatpush1.msra.mxu0 0.0
        %3826 = vmatprep.subr.mxu0 0.0
        %3827 = vmatpush1.msra.mxu0 0.0
        %3828 = vmatprep.subr.mxu0 0.0
        %3829 = vmatpush1.msra.mxu0 0.0
        %3830 = vmatprep.subr.mxu0 0.0
        %3831 = vmatpush1.msra.mxu0 0.0
        %3832 = vmatprep.subr.mxu0 0.0
        %3833 = vmatpush1.msra.mxu0 0.0
        %3834 = vmatprep.subr.mxu0 0.0
        %3835 = vmatpush1.msra.mxu0 0.0
        %3836 = vmatprep.subr.mxu0 0.0
        %3837 = vmatpush1.msra.mxu0 0.0
        %3838 = vmatprep.subr.mxu0 0.0
        %3839 = vmatpush1.msra.mxu0 0.0
        %3840 = vmatprep.subr.mxu0 0.0
        %3841 = vmatpush1.msra.mxu0 0.0
        %3842 = vmatprep.subr.mxu0 0.0
        %3843 = vmatpush1.msra.mxu0 0.0
        %3844 = vmatprep.subr.mxu0 0.0
        %3845 = vmatpush1.msra.mxu0 0.0
        %3846 = vmatprep.subr.mxu0 0.0
        %3847 = vmatpush1.msra.mxu0 0.0
        %3848 = vmatprep.subr.mxu0 0.0
        %3849 = vmatpush1.msra.mxu0 0.0
        %3850 = vmatprep.subr.mxu0 0.0
        %3851 = vmatpush1.msra.mxu0 0.0
        %3852 = vmatprep.subr.mxu0 0.0
        %3853 = vmatpush1.msra.mxu0 0.0
        %3854 = vmatprep.subr.mxu0 0.0
        %3855 = vmatpush1.msra.mxu0 0.0
        %3856 = vmatprep.subr.mxu0 0.0
        %3857 = vmatpush1.msra.mxu0 0.0
        %3858 = vmatprep.subr.mxu0 0.0
        %3859 = vmatpush1.msra.mxu0 0.0
        %3860 = vmatprep.mubr.f32.mxu0 0.0
        %3861 = vmatmul.mubr.f32.gmra.mrb[0].mxu0 %v3794
        %v3862 = vpop.f32.mrb[0].mxu0
        %v3863 = vadd.f32 0.0, %v3862
        %v3864 = vpop.f32.mrb[0].mxu0
        %3865 = vdwg.mxu0
        %v3867 = vsel %vm1380, %v3759, 0
        %3869 = vmatprep.subr.mxu0 0.0
        %3870 = vmatpush1.msra.mxu0 %v3785
        %3871 = vmatprep.subr.mxu0 0.0
        %3872 = vmatpush1.msra.mxu0 %v3786
        %3873 = vmatprep.subr.mxu0 0.0
        %3874 = vmatpush1.msra.mxu0 %v3787
        %3875 = vmatprep.subr.mxu0 0.0
        %3876 = vmatpush1.msra.mxu0 %v3788
        %3877 = vmatprep.subr.mxu0 0.0
        %3878 = vmatpush1.msra.mxu0 0.0
        %3879 = vmatprep.subr.mxu0 0.0
        %3880 = vmatpush1.msra.mxu0 0.0
        %3881 = vmatprep.subr.mxu0 0.0
        %3882 = vmatpush1.msra.mxu0 0.0
        %3883 = vmatprep.subr.mxu0 0.0
        %3884 = vmatpush1.msra.mxu0 0.0
        %3885 = vmatprep.subr.mxu0 0.0
        %3886 = vmatpush1.msra.mxu0 0.0
        %3887 = vmatprep.subr.mxu0 0.0
        %3888 = vmatpush1.msra.mxu0 0.0
        %3889 = vmatprep.subr.mxu0 0.0
        %3890 = vmatpush1.msra.mxu0 0.0
        %3891 = vmatprep.subr.mxu0 0.0
        %3892 = vmatpush1.msra.mxu0 0.0
        %3893 = vmatprep.subr.mxu0 0.0
        %3894 = vmatpush1.msra.mxu0 0.0
        %3895 = vmatprep.subr.mxu0 0.0
        %3896 = vmatpush1.msra.mxu0 0.0
        %3897 = vmatprep.subr.mxu0 0.0
        %3898 = vmatpush1.msra.mxu0 0.0
        %3899 = vmatprep.subr.mxu0 0.0
        %3900 = vmatpush1.msra.mxu0 0.0
        %3901 = vmatprep.subr.mxu0 0.0
        %3902 = vmatpush1.msra.mxu0 0.0
        %3903 = vmatprep.subr.mxu0 0.0
        %3904 = vmatpush1.msra.mxu0 0.0
        %3905 = vmatprep.subr.mxu0 0.0
        %3906 = vmatpush1.msra.mxu0 0.0
        %3907 = vmatprep.subr.mxu0 0.0
        %3908 = vmatpush1.msra.mxu0 0.0
        %3909 = vmatprep.subr.mxu0 0.0
        %3910 = vmatpush1.msra.mxu0 0.0
        %3911 = vmatprep.subr.mxu0 0.0
        %3912 = vmatpush1.msra.mxu0 0.0
        %3913 = vmatprep.subr.mxu0 0.0
        %3914 = vmatpush1.msra.mxu0 0.0
        %3915 = vmatprep.subr.mxu0 0.0
        %3916 = vmatpush1.msra.mxu0 0.0
        %3917 = vmatprep.subr.mxu0 0.0
        %3918 = vmatpush1.msra.mxu0 0.0
        %3919 = vmatprep.subr.mxu0 0.0
        %3920 = vmatpush1.msra.mxu0 0.0
        %3921 = vmatprep.subr.mxu0 0.0
        %3922 = vmatpush1.msra.mxu0 0.0
        %3923 = vmatprep.subr.mxu0 0.0
        %3924 = vmatpush1.msra.mxu0 0.0
        %3925 = vmatprep.subr.mxu0 0.0
        %3926 = vmatpush1.msra.mxu0 0.0
        %3927 = vmatprep.subr.mxu0 0.0
        %3928 = vmatpush1.msra.mxu0 0.0
        %3929 = vmatprep.subr.mxu0 0.0
        %3930 = vmatpush1.msra.mxu0 0.0
        %3931 = vmatprep.subr.mxu0 0.0
        %3932 = vmatpush1.msra.mxu0 0.0
        %3933 = vmatprep.mubr.f32.mxu0 0.0
        %3934 = vmatmul.mubr.f32.gmra.mrb[0].mxu0 %v3867
        %v3935 = vpop.f32.mrb[0].mxu0
        %v3936 = vadd.f32 %v3863, %v3935
        %v3937 = vpop.f32.mrb[0].mxu0
        %3938 = vdwg.mxu0
        %v3939 = vld [vmem:[%s79] sm:$0xff]
        %v3940 = vld [vmem:[%s79 + $0x8] sm:$0xff]
        %v3941 = vld [vmem:[%s79 + $0x10] sm:$0xff]
        %v3942 = vld [vmem:[%s79 + $0x18] sm:$0xff]
        %v3944 = vsel %vm1380, %v3776, 0
        %3946 = vmatprep.subr.mxu0 0.0
        %3947 = vmatpush1.msra.mxu0 %v3939
        %3948 = vmatprep.subr.mxu0 0.0
        %3949 = vmatpush1.msra.mxu0 %v3940
        %3950 = vmatprep.subr.mxu0 0.0
        %3951 = vmatpush1.msra.mxu0 %v3941
        %3952 = vmatprep.subr.mxu0 0.0
        %3953 = vmatpush1.msra.mxu0 %v3942
        %3954 = vmatprep.subr.mxu0 0.0
        %3955 = vmatpush1.msra.mxu0 0.0
        %3956 = vmatprep.subr.mxu0 0.0
        %3957 = vmatpush1.msra.mxu0 0.0
        %3958 = vmatprep.subr.mxu0 0.0
        %3959 = vmatpush1.msra.mxu0 0.0
        %3960 = vmatprep.subr.mxu0 0.0
        %3961 = vmatpush1.msra.mxu0 0.0
        %3962 = vmatprep.subr.mxu0 0.0
        %3963 = vmatpush1.msra.mxu0 0.0
        %3964 = vmatprep.subr.mxu0 0.0
        %3965 = vmatpush1.msra.mxu0 0.0
        %3966 = vmatprep.subr.mxu0 0.0
        %3967 = vmatpush1.msra.mxu0 0.0
        %3968 = vmatprep.subr.mxu0 0.0
        %3969 = vmatpush1.msra.mxu0 0.0
        %3970 = vmatprep.subr.mxu0 0.0
        %3971 = vmatpush1.msra.mxu0 0.0
        %3972 = vmatprep.subr.mxu0 0.0
        %3973 = vmatpush1.msra.mxu0 0.0
        %3974 = vmatprep.subr.mxu0 0.0
        %3975 = vmatpush1.msra.mxu0 0.0
        %3976 = vmatprep.subr.mxu0 0.0
        %3977 = vmatpush1.msra.mxu0 0.0
        %3978 = vmatprep.subr.mxu0 0.0
        %3979 = vmatpush1.msra.mxu0 0.0
        %3980 = vmatprep.subr.mxu0 0.0
        %3981 = vmatpush1.msra.mxu0 0.0
        %3982 = vmatprep.subr.mxu0 0.0
        %3983 = vmatpush1.msra.mxu0 0.0
        %3984 = vmatprep.subr.mxu0 0.0
        %3985 = vmatpush1.msra.mxu0 0.0
        %3986 = vmatprep.subr.mxu0 0.0
        %3987 = vmatpush1.msra.mxu0 0.0
        %3988 = vmatprep.subr.mxu0 0.0
        %3989 = vmatpush1.msra.mxu0 0.0
        %3990 = vmatprep.subr.mxu0 0.0
        %3991 = vmatpush1.msra.mxu0 0.0
        %3992 = vmatprep.subr.mxu0 0.0
        %3993 = vmatpush1.msra.mxu0 0.0
        %3994 = vmatprep.subr.mxu0 0.0
        %3995 = vmatpush1.msra.mxu0 0.0
        %3996 = vmatprep.subr.mxu0 0.0
        %3997 = vmatpush1.msra.mxu0 0.0
        %3998 = vmatprep.subr.mxu0 0.0
        %3999 = vmatpush1.msra.mxu0 0.0
        %4000 = vmatprep.subr.mxu0 0.0
        %4001 = vmatpush1.msra.mxu0 0.0
        %4002 = vmatprep.subr.mxu0 0.0
        %4003 = vmatpush1.msra.mxu0 0.0
        %4004 = vmatprep.subr.mxu0 0.0
        %4005 = vmatpush1.msra.mxu0 0.0
        %4006 = vmatprep.subr.mxu0 0.0
        %4007 = vmatpush1.msra.mxu0 0.0
        %4008 = vmatprep.subr.mxu0 0.0
        %4009 = vmatpush1.msra.mxu0 0.0
        %4010 = vmatprep.mubr.f32.mxu0 0.0
        %4011 = vmatmul.mubr.f32.gmra.mrb[0].mxu0 %v3944
        %v4012 = vpop.f32.mrb[0].mxu0
        %v4013 = vadd.f32 0.0, %v4012
        %v4014 = vpop.f32.mrb[0].mxu0
        %4015 = vdwg.mxu0
        %v4016 = vadd.f32 %v3936, %v4013
        %v4017 = vld [vmem:[%s81] sm:$0x1]
        %v4018 = vadd.f32 %v4016, %v4017
        %4019 = vst [vmem:[%s1315] sm:$0x1] %v4018
        %s4020 = sand.u32 %s984, 1
        %s4021 = scalar_lea.sflag [#allocation4], %s4020
        %s4022 = sand.u32 %s984, 1
        %s4023 = scalar_lea.vmem [#allocation11], %s4022
        // Predicated region
        $region205: #{aen_glove_forward.1} parent=183 // pred_check
          %p4024 = pneg %p994
        $region206: #{aen_glove_forward.1} parent=183 // pred_check_branch
          %4026 = sbr.rel (%p4024) target = $region208
        $region207: #{aen_glove_forward.1} parent=183 // pred_region
          %s4028 = ssub.s32 16, 16
          %4029 = vsyncadd %s4021, %s4028
          %s4030 = smul.addr %s100, 16
          %s4031 = scalar_lea.hbm %s83, %s4030
          %s4033 = sshll.u32 %s4023, 4
          %s4034 = int_to_ptr.vmem [resolvable:$true] %s4033
          %4036 = dma.vmem_to_hbm [thread:$0]  %s4034, 16, %s4031, %s4021
        $region208: #{aen_glove_forward.1} parent=183 // pred_fallthru
          _
      $region184: #{aen_glove_forward.1} parent=5 // pred_fallthru
        _
      %p4037 = scmp.le.s32.totalorder 2, %s95
      // Predicated region
      $region209: #{aen_glove_forward.1} parent=5 // pred_check
        %p4038 = pneg %p4037
      $region210: #{aen_glove_forward.1} parent=5 // pred_check_branch
        %4040 = sbr.rel (%p4038) target = $region212
      $region211: #{aen_glove_forward.1} parent=5 // pred_region
        %s4041 = ssub.s32 %s95, 2
        // Predicated region
        $region213: #{aen_glove_forward.1} parent=211 // pred_check
          %p4042 = pneg %p1000
        $region214: #{aen_glove_forward.1} parent=211 // pred_check_branch
          %4044 = sbr.rel (%p4042) target = $region216
        $region215: #{aen_glove_forward.1} parent=211 // pred_region
          %s4045 = sand.u32 %s985, 1
          %s4046 = scalar_lea.sflag [#allocation4], %s4045
          %s4047 = sand.u32 %s985, 1
          %s4048 = scalar_lea.vmem [#allocation11], %s4047
          %4049 = dma.done %s4046, 16
        $region216: #{aen_glove_forward.1} parent=211 // pred_fallthru
          _
      $region212: #{aen_glove_forward.1} parent=5 // pred_fallthru
        _
    $region6: #{aen_glove_forward.1} parent=1 // loop_footer
      %s99 = sadd.s32 1, %s95
    $region7: #{aen_glove_forward.1} parent=1 // loop_footer_branch
      %94 = sbr.rel target = $region3
    $region8: #{aen_glove_forward.1} parent=1 // loop_exit
      _
    %4050 = vsyncpa [#allocation3], 1
    %s4051 = scalar_lea.sflag [#allocation3], 1
    %4052 = vsyncpa %s4051, 1
    %4053 = vsyncpa [#allocation6], 1
    %4054 = vsyncpa [#allocation9], 1
    %4055 = vsyncpa [#allocation4], 1
    %s4056 = scalar_lea.sflag [#allocation4], 1
    %4057 = vsyncpa %s4056, 1

</llo_original>
